<compile_context>
chip_gen: v7x
topology: tpu7x:2x2x1
jax: 0.10.0
libtpu: 0.0.40
codegen_flags: <defaults>
</compile_context>

<pallas_src>
import jax
import jax.numpy as jnp
from jax.experimental import pallas as pl
from jax.experimental.pallas import tpu as pltpu

BN_EPS = 1e-5
NEG_BIG = -1e30           # bias value for padded softmax lanes (exp() underflows to 0)
PAD_CLASSES = 128         # lane-dense output width


def _round_up(x, m):
    return ((x + m - 1) // m) * m


def fusion_kernel(
    r_ref,                   # (1,) f32 SMEM : W21[0,1] / W21[0,0]
    img_ref, txt_ref,        # (TB, F) bf16 VMEM batch tiles
    w1_ref, b1_ref,          # (F, 512) bf16, (1, 512) f32   [Linear(2,1) + BN1 folded]
    w2_ref, b2_ref,          # (512, 256) bf16, (1, 256) f32 [BN2 folded]
    w3_ref, b3_ref,          # (256, 128) bf16, (1, 128) f32 [lane-padded final layer]
    out_ref,                 # (TB, 128) f32
):
    # ---- cat(dim=1) + transpose(1,2) + Linear(2,1) + squeeze -----------------
    # W[0,0] and the bias are folded into layer 1, so this reduces to one bf16 FMA.
    r = r_ref[0].astype(jnp.bfloat16)
    fused = img_ref[...] + r * txt_ref[...]                       # (TB, F) bf16

    # ---- Linear(F,512) (+folded 2->1 scale/bias +folded BN1) -> ReLU ---------
    # Dropout == identity in eval mode.
    h1 = jnp.dot(fused, w1_ref[...],
                 preferred_element_type=jnp.float32) + b1_ref[...]
    h1 = jnp.maximum(h1, 0.0)

    # ---- Linear(512,256) (+folded BN2) -> ReLU --------------------------------
    h2 = jnp.dot(h1.astype(jnp.bfloat16), w2_ref[...],
                 preferred_element_type=jnp.float32) + b2_ref[...]
    h2 = jnp.maximum(h2, 0.0)

    # ---- Linear(256, num_classes) padded to 128 lanes + Softmax ---------------
    logits = jnp.dot(h2.astype(jnp.bfloat16), w3_ref[...],
                     preferred_element_type=jnp.float32) + b3_ref[...]
    mx = jnp.max(logits, axis=-1, keepdims=True)
    ex = jnp.exp(logits - mx)                    # padded lanes: exp(-1e30 - mx) == 0
    # approx reciprocal runs on the otherwise-idle EUP slot; ~2^-12 rel error.
    inv = pl.reciprocal(jnp.sum(ex, axis=-1, keepdims=True), approx=True)
    out_ref[...] = ex * inv


def prepare_params(params, *, pad_classes=PAD_CLASSES):
    """One-time wrapper-side prep:
      * fold Linear(2,1) scale/bias into layer 1 (assumes W21[0,0] != 0),
      * fold eval-mode BN into the Linears,
      * pad the final layer to a lane-dense width,
      * cast matmul weights to bf16 (after all f32 folding)."""
    w21, b21 = params["w21"], params["b21"]
    a = w21[0, 0]
    c = w21[0, 1]
    b0 = b21[0]
    r = (c / a).reshape(1).astype(jnp.float32)

    # (a*img + c*txt + b0) @ W1 + b1  ==  (img + r*txt) @ (a*W1) + (b1 + b0*colsum(W1))
    w1 = params["w1"] * a
    b1 = params["b1"] + b0 * jnp.sum(params["w1"], axis=0, keepdims=True)

    def fold(w, b, g, beta, m, v):
        scale = g * jax.lax.rsqrt(v + BN_EPS)                  # (1, out)
        return (w * scale).astype(jnp.bfloat16), (b - m) * scale + beta

    w1, b1 = fold(w1, b1, params["g1"], params["be1"], params["m1"], params["v1"])
    w2, b2 = fold(params["w2"], params["b2"], params["g2"], params["be2"],
                  params["m2"], params["v2"])

    w3, b3 = params["w3"], params["b3"]
    in3, nc = w3.shape
    assert nc <= pad_classes
    w3p = jnp.zeros((in3, pad_classes), jnp.float32).at[:, :nc].set(w3)
    w3p = w3p.astype(jnp.bfloat16)
    b3p = jnp.full((1, pad_classes), NEG_BIG, jnp.float32).at[:, :nc].set(b3)

    return dict(
        r=r, w1=w1, b1=b1, w2=w2, b2=b2, w3=w3p, b3=b3p,
        num_classes=nc, pad_classes=pad_classes,
    )


def fusion_model_forward(image_features, text_features, prepared):
    """image_features, text_features: (B, 1, F) float. Returns (B, num_classes) f32."""
    B, one, F = image_features.shape
    assert one == 1 and text_features.shape == (B, 1, F)
    nc = prepared["num_classes"]
    pc = prepared["pad_classes"]

    # bf16 activation streams: halves the dominant HBM read inside the kernel.
    img = image_features.reshape(B, F).astype(jnp.bfloat16)
    txt = text_features.reshape(B, F).astype(jnp.bfloat16)

    # Batch tile: multiple of 8 sublanes, <=512 rows, and >=2 grid tiles once B is
    # large enough so the "parallel" axis can shard across both v7x TensorCores.
    # No jnp.pad: the grid is ragged via pl.cdiv; OOB tail rows are masked/discarded.
    if B >= 8:
        tb = min(512, _round_up(pl.cdiv(B, 2), 8))
    else:
        tb = B   # full-extent block (allowed when equal to the array dim)
    grid = (pl.cdiv(B, tb),)

    def resident(shape):   # whole-array block, constant index -> fetched once, VMEM-resident
        return pl.BlockSpec(shape, lambda i: (0, 0))

    smem = pl.BlockSpec(memory_space=pltpu.MemorySpace.SMEM)

    out = pl.pallas_call(
        fusion_kernel,
        out_shape=jax.ShapeDtypeStruct((B, pc), jnp.float32),
        grid=grid,
        in_specs=[
            smem,                                      # r scalar
            pl.BlockSpec((tb, F), lambda i: (i, 0)),   # img batch tile (bf16)
            pl.BlockSpec((tb, F), lambda i: (i, 0)),   # txt batch tile (bf16)
            resident(prepared["w1"].shape), resident(prepared["b1"].shape),
            resident(prepared["w2"].shape), resident(prepared["b2"].shape),
            resident(prepared["w3"].shape), resident(prepared["b3"].shape),
        ],
        out_specs=pl.BlockSpec((tb, pc), lambda i: (i, 0)),
        compiler_params=pltpu.CompilerParams(
            dimension_semantics=("parallel",),
            vmem_limit_bytes=40 * 1024 * 1024,   # room for tb=512 tiles on v5e's 16 MiB default
        ),
    )(
        prepared["r"], img, txt,
        prepared["w1"], prepared["b1"],
        prepared["w2"], prepared["b2"],
        prepared["w3"], prepared["b3"],
    )
    return out[:, :nc]


def init_params(key, fusion_dim, num_classes):
    """PyTorch-default init (Linear: U(-1/sqrt(in), 1/sqrt(in)); BN: weight=1,
    bias=0, running_mean=0, running_var=1). Weights stored (in, out) for x @ W."""
    ks = jax.random.split(key, 8)

    def linear(kw, kb, fan_in, fan_out):
        bound = 1.0 / jnp.sqrt(fan_in)
        w = jax.random.uniform(kw, (fan_in, fan_out), jnp.float32, -bound, bound)
        b = jax.random.uniform(kb, (1, fan_out), jnp.float32, -bound, bound)
        return w, b

    bound21 = 1.0 / jnp.sqrt(2.0)
    w21 = jax.random.uniform(ks[0], (1, 2), jnp.float32, -bound21, bound21)
    b21 = jax.random.uniform(ks[1], (1,), jnp.float32, -bound21, bound21)

    w1, b1 = linear(ks[2], ks[3], fusion_dim, 512)
    w2, b2 = linear(ks[4], ks[5], 512, 256)
    w3, b3 = linear(ks[6], ks[7], 256, num_classes)

    bn = lambda n: (jnp.ones((1, n), jnp.float32), jnp.zeros((1, n), jnp.float32),
                    jnp.zeros((1, n), jnp.float32), jnp.ones((1, n), jnp.float32))
    g1, be1, m1, v1 = bn(512)
    g2, be2, m2, v2 = bn(256)

    return dict(
        w21=w21, b21=b21,
        w1=w1, b1=b1, g1=g1, be1=be1, m1=m1, v1=v1,
        w2=w2, b2=b2, g2=g2, be2=be2, m2=m2, v2=v2,
        w3=w3, b3=b3,
    )


def reference_forward(image_features, text_features, params):
    """Pure-JAX f32 reference of the eval-mode PyTorch forward (unfolded BN)."""
    B, _, F = image_features.shape
    img = image_features.reshape(B, F)
    txt = text_features.reshape(B, F)
    fused = img * params["w21"][0, 0] + txt * params["w21"][0, 1] + params["b21"][0]

    def bn(x, g, be, m, v):
        return (x - m) * jax.lax.rsqrt(v + BN_EPS) * g + be

    h1 = jnp.maximum(bn(fused @ params["w1"] + params["b1"],
                        params["g1"], params["be1"], params["m1"], params["v1"]), 0.0)
    h2 = jnp.maximum(bn(h1 @ params["w2"] + params["b2"],
                        params["g2"], params["be2"], params["m2"], params["v2"]), 0.0)
    logits = h2 @ params["w3"] + params["b3"]
    return jax.nn.softmax(logits, axis=-1)


if __name__ == "__main__":
    FUSION_DIM = 768 * 2   # as in the PyTorch script
    NUM_CLASSES = 9
    B = 8

    key = jax.random.PRNGKey(0)
    k_img, k_txt, k_par = jax.random.split(key, 3)

    image_features = jax.random.normal(k_img, (B, 1, FUSION_DIM), jnp.float32)
    text_features = jax.random.normal(k_txt, (B, 1, FUSION_DIM), jnp.float32)
    params = init_params(k_par, FUSION_DIM, NUM_CLASSES)
    prepared = prepare_params(params)

    out = fusion_model_forward(image_features, text_features, prepared)
    out = jax.block_until_ready(out)

    # f32 reference fed the same bf16-quantized activation streams (isolates kernel
    # correctness from the deliberate bf16 input quantization).
    img_q = image_features.astype(jnp.bfloat16).astype(jnp.float32)
    txt_q = text_features.astype(jnp.bfloat16).astype(jnp.float32)
    ref = reference_forward(img_q, txt_q, params)

    row_sums = jnp.sum(out, axis=1)
    assert out.shape == (B, NUM_CLASSES)
    assert bool(jnp.all(jnp.isfinite(out)))
    assert bool(jnp.all(jnp.abs(row_sums - 1.0) < 5e-3))
    assert bool(jnp.max(jnp.abs(out - ref)) < 2e-2)

    print("KERNEL_OK")
</pallas_src>

<mosaic_0001>
module attributes {stable_mosaic.version = 11 : i64} {
  func.func @fusion_kernel(%arg0: i32, %arg1: memref<1xf32, #tpu.memory_space<smem>>, %arg2: memref<8x1536xbf16, #tpu.memory_space<vmem>>, %arg3: memref<8x1536xbf16, #tpu.memory_space<vmem>>, %arg4: memref<1536x512xbf16, #tpu.memory_space<vmem>>, %arg5: memref<1x512xf32, #tpu.memory_space<vmem>>, %arg6: memref<512x256xbf16, #tpu.memory_space<vmem>>, %arg7: memref<1x256xf32, #tpu.memory_space<vmem>>, %arg8: memref<256x128xbf16, #tpu.memory_space<vmem>>, %arg9: memref<1x128xf32, #tpu.memory_space<vmem>>, %arg10: memref<8x128xf32, #tpu.memory_space<vmem>>) attributes {dimension_semantics = [#tpu.dimension_semantics<parallel>], iteration_bounds = array<i64: 1>, scalar_prefetch = 0 : i64, scratch_operands = 0 : i64, tpu.core_type = #tpu.core_type<tc>, window_params = [{transform_indices = @transform_0, window_bounds = array<i64: 1>}, {transform_indices = @transform_1, window_bounds = array<i64: 8, 1536>}, {transform_indices = @transform_2, window_bounds = array<i64: 8, 1536>}, {pipeline_mode = #tpu.pipeline_mode<synchronous>, transform_indices = @transform_3, window_bounds = array<i64: 1536, 512>}, {pipeline_mode = #tpu.pipeline_mode<synchronous>, transform_indices = @transform_4, window_bounds = array<i64: 1, 512>}, {pipeline_mode = #tpu.pipeline_mode<synchronous>, transform_indices = @transform_5, window_bounds = array<i64: 512, 256>}, {pipeline_mode = #tpu.pipeline_mode<synchronous>, transform_indices = @transform_6, window_bounds = array<i64: 1, 256>}, {pipeline_mode = #tpu.pipeline_mode<synchronous>, transform_indices = @transform_7, window_bounds = array<i64: 256, 128>}, {pipeline_mode = #tpu.pipeline_mode<synchronous>, transform_indices = @transform_8, window_bounds = array<i64: 1, 128>}, {transform_indices = @transform_9, window_bounds = array<i64: 8, 128>}]} {
    %c0 = arith.constant 0 : index
    %0 = memref.load %arg1[%c0] : memref<1xf32, #tpu.memory_space<smem>>
    %1 = arith.truncf %0 : f32 to bf16
    %c0_0 = arith.constant 0 : index
    %c0_1 = arith.constant 0 : index
    %2 = vector.load %arg2[%c0_0, %c0_1] : memref<8x1536xbf16, #tpu.memory_space<vmem>>, vector<8x1536xbf16>
    %c0_2 = arith.constant 0 : index
    %c0_3 = arith.constant 0 : index
    %3 = vector.load %arg3[%c0_2, %c0_3] : memref<8x1536xbf16, #tpu.memory_space<vmem>>, vector<8x1536xbf16>
    %4 = vector.broadcast %1 : bf16 to vector<8x1536xbf16>
    %5 = arith.mulf %4, %3 : vector<8x1536xbf16>
    %6 = arith.addf %2, %5 : vector<8x1536xbf16>
    %c0_4 = arith.constant 0 : index
    %c0_5 = arith.constant 0 : index
    %7 = vector.load %arg4[%c0_4, %c0_5] : memref<1536x512xbf16, #tpu.memory_space<vmem>>, vector<1536x512xbf16>
    %cst = arith.constant dense<0.000000e+00> : vector<8x512xf32>
    %8 = tpu.matmul %6, %7, %cst {dimension_numbers = #tpu.dot_dimension_numbers<[1], [0], [0], [1], [0, 0, 1, 1], [], []>} : vector<8x1536xbf16>, vector<1536x512xbf16>, vector<8x512xf32> -> vector<8x512xf32>
    %c0_6 = arith.constant 0 : index
    %c0_7 = arith.constant 0 : index
    %9 = vector.load %arg5[%c0_6, %c0_7] : memref<1x512xf32, #tpu.memory_space<vmem>>, vector<1x512xf32>
    %10 = vector.broadcast %9 : vector<1x512xf32> to vector<8x512xf32>
    %11 = arith.addf %8, %10 : vector<8x512xf32>
    %cst_8 = arith.constant 0.000000e+00 : f32
    %12 = vector.broadcast %cst_8 : f32 to vector<8x512xf32>
    %13 = arith.maximumf %11, %12 : vector<8x512xf32>
    %14 = arith.truncf %13 : vector<8x512xf32> to vector<8x512xbf16>
    %c0_9 = arith.constant 0 : index
    %c0_10 = arith.constant 0 : index
    %15 = vector.load %arg6[%c0_9, %c0_10] : memref<512x256xbf16, #tpu.memory_space<vmem>>, vector<512x256xbf16>
    %cst_11 = arith.constant dense<0.000000e+00> : vector<8x256xf32>
    %16 = tpu.matmul %14, %15, %cst_11 {dimension_numbers = #tpu.dot_dimension_numbers<[1], [0], [0], [1], [0, 0, 1, 1], [], []>} : vector<8x512xbf16>, vector<512x256xbf16>, vector<8x256xf32> -> vector<8x256xf32>
    %c0_12 = arith.constant 0 : index
    %c0_13 = arith.constant 0 : index
    %17 = vector.load %arg7[%c0_12, %c0_13] : memref<1x256xf32, #tpu.memory_space<vmem>>, vector<1x256xf32>
    %18 = vector.broadcast %17 : vector<1x256xf32> to vector<8x256xf32>
    %19 = arith.addf %16, %18 : vector<8x256xf32>
    %cst_14 = arith.constant 0.000000e+00 : f32
    %20 = vector.broadcast %cst_14 : f32 to vector<8x256xf32>
    %21 = arith.maximumf %19, %20 : vector<8x256xf32>
    %22 = arith.truncf %21 : vector<8x256xf32> to vector<8x256xbf16>
    %c0_15 = arith.constant 0 : index
    %c0_16 = arith.constant 0 : index
    %23 = vector.load %arg8[%c0_15, %c0_16] : memref<256x128xbf16, #tpu.memory_space<vmem>>, vector<256x128xbf16>
    %cst_17 = arith.constant dense<0.000000e+00> : vector<8x128xf32>
    %24 = tpu.matmul %22, %23, %cst_17 {dimension_numbers = #tpu.dot_dimension_numbers<[1], [0], [0], [1], [0, 0, 1, 1], [], []>} : vector<8x256xbf16>, vector<256x128xbf16>, vector<8x128xf32> -> vector<8x128xf32>
    %c0_18 = arith.constant 0 : index
    %c0_19 = arith.constant 0 : index
    %25 = vector.load %arg9[%c0_18, %c0_19] : memref<1x128xf32, #tpu.memory_space<vmem>>, vector<1x128xf32>
    %26 = vector.broadcast %25 : vector<1x128xf32> to vector<8x128xf32>
    %27 = arith.addf %24, %26 : vector<8x128xf32>
    %cst_20 = arith.constant dense<0xFF800000> : vector<8xf32>
    %28 = vector.multi_reduction <maximumf>, %27, %cst_20 [1] : vector<8x128xf32> to vector<8xf32>
    %29 = vector.shape_cast %28 : vector<8xf32> to vector<8x1xf32>
    %30 = vector.broadcast %29 : vector<8x1xf32> to vector<8x128xf32>
    %31 = arith.subf %27, %30 : vector<8x128xf32>
    %32 = math.exp %31 : vector<8x128xf32>
    %cst_21 = arith.constant dense<0.000000e+00> : vector<8xf32>
    %33 = vector.multi_reduction <add>, %32, %cst_21 [1] : vector<8x128xf32> to vector<8xf32>
    %34 = vector.shape_cast %33 : vector<8xf32> to vector<8x1xf32>
    %35 = tpu.reciprocal %34 {approx = true} : vector<8x1xf32> -> vector<8x1xf32>
    %36 = vector.broadcast %35 : vector<8x1xf32> to vector<8x128xf32>
    %37 = arith.mulf %32, %36 : vector<8x128xf32>
    %c0_22 = arith.constant 0 : index
    %c0_23 = arith.constant 0 : index
    %38 = vector.load %arg10[%c0_22, %c0_23] : memref<8x128xf32, #tpu.memory_space<vmem>>, vector<8x128xf32>
    tpu.vector_store %arg10[%c0_22, %c0_23], %37 {strides = array<i32>} : memref<8x128xf32, #tpu.memory_space<vmem>>, vector<8x128xf32>,
    return
  }
  func.func @transform_0(%arg0: i32) -> i32 {
    %c0_i32 = arith.constant 0 : i32
    %c0_i32_0 = arith.constant 0 : i32
    return %c0_i32 : i32
  }
  func.func @transform_1(%arg0: i32) -> (i32, i32) {
    %c0_i32 = arith.constant 0 : i32
    %c0_i32_0 = arith.constant 0 : i32
    return %arg0, %c0_i32 : i32, i32
  }
  func.func @transform_2(%arg0: i32) -> (i32, i32) {
    %c0_i32 = arith.constant 0 : i32
    %c0_i32_0 = arith.constant 0 : i32
    return %arg0, %c0_i32 : i32, i32
  }
  func.func @transform_3(%arg0: i32) -> (i32, i32) {
    %c0_i32 = arith.constant 0 : i32
    %c0_i32_0 = arith.constant 0 : i32
    %c0_i32_1 = arith.constant 0 : i32
    return %c0_i32, %c0_i32_0 : i32, i32
  }
  func.func @transform_4(%arg0: i32) -> (i32, i32) {
    %c0_i32 = arith.constant 0 : i32
    %c0_i32_0 = arith.constant 0 : i32
    %c0_i32_1 = arith.constant 0 : i32
    return %c0_i32, %c0_i32_0 : i32, i32
  }
  func.func @transform_5(%arg0: i32) -> (i32, i32) {
    %c0_i32 = arith.constant 0 : i32
    %c0_i32_0 = arith.constant 0 : i32
    %c0_i32_1 = arith.constant 0 : i32
    return %c0_i32, %c0_i32_0 : i32, i32
  }
  func.func @transform_6(%arg0: i32) -> (i32, i32) {
    %c0_i32 = arith.constant 0 : i32
    %c0_i32_0 = arith.constant 0 : i32
    %c0_i32_1 = arith.constant 0 : i32
    return %c0_i32, %c0_i32_0 : i32, i32
  }
  func.func @transform_7(%arg0: i32) -> (i32, i32) {
    %c0_i32 = arith.constant 0 : i32
    %c0_i32_0 = arith.constant 0 : i32
    %c0_i32_1 = arith.constant 0 : i32
    return %c0_i32, %c0_i32_0 : i32, i32
  }
  func.func @transform_8(%arg0: i32) -> (i32, i32) {
    %c0_i32 = arith.constant 0 : i32
    %c0_i32_0 = arith.constant 0 : i32
    %c0_i32_1 = arith.constant 0 : i32
    return %c0_i32, %c0_i32_0 : i32, i32
  }
  func.func @transform_9(%arg0: i32) -> (i32, i32) {
    %c0_i32 = arith.constant 0 : i32
    %c0_i32_0 = arith.constant 0 : i32
    return %arg0, %c0_i32 : i32, i32
  }
}

</mosaic_0001>

<llo_original>
// kernel: tpu_custom_call.1
$region0: #{tpu_custom_call.1}
  #allocation0 [shape = 'u32[]', space=smem, size = 0x4, offset = 0x4, fixed_abs, tag = 'smem constant byte address 0x4 - core index']
  #allocation1 [shape = 'u32[144,128]{1,0:T(1,128)}', space=vmem, size = 0x12000, scoped, tag = 'internal scratch']
  #allocation2 [shape = 'f32[1]{0:T(128)S(6)}', space=smem, size = 0x200, scoped, tag = 'scoped memory for tpu_custom_call.1']
  %s0 = inlined_call_operand.<no memory space> [shape: f32[1], index: 0, kind: input, shape index: {}]
  %s1 = inlined_call_operand.hbm [shape: bf16[8,1536], index: 1, kind: input, shape index: {}]
  %s2 = inlined_call_operand.hbm [shape: bf16[8,1536], index: 2, kind: input, shape index: {}]
  %s3 = inlined_call_operand.hbm [shape: bf16[1536,512], index: 3, kind: input, shape index: {}]
  %s4 = inlined_call_operand.hbm [shape: f32[1,512], index: 4, kind: input, shape index: {}]
  %s5 = inlined_call_operand.hbm [shape: bf16[512,256], index: 5, kind: input, shape index: {}]
  %s6 = inlined_call_operand.hbm [shape: f32[1,256], index: 6, kind: input, shape index: {}]
  %s7 = inlined_call_operand.hbm [shape: bf16[256,128], index: 7, kind: input, shape index: {}]
  %s8 = inlined_call_operand.hbm [shape: f32[1,128], index: 8, kind: input, shape index: {}]
  %s9 = inlined_call_operand.hbm [shape: f32[8,128], index: 9, kind: output, shape index: {}]
  %s10 = sld [smem:[#allocation0]]
  $region78: #{tpu_custom_call.1} parent=0
    _
  %s12 = ssub.s32 1, %s10
  %s13 = scalar_select 0, %s12, %s10
  %14 = sst [smem:[#allocation2]] %s0
  $region1: #{tpu_custom_call.1} parent=0
    #allocation3 [shape = 'u8[24576]{0}', space=vmem, size = 0x6000, scoped, tag = 'input window, operand 1, single buffered']
    #allocation4 [shape = 's32[1]{0}', space=sflag, size = 0x4, scoped, tag = 'scoped memory for tpu_custom_call.1']
    #allocation5 [shape = 's32[1]{0}', space=sflag, size = 0x4, scoped, tag = 'scoped memory for tpu_custom_call.1']
    #allocation6 [shape = 'u8[24576]{0}', space=vmem, size = 0x6000, scoped, tag = 'input window, operand 2, single buffered']
    #allocation7 [shape = 's32[1]{0}', space=sflag, size = 0x4, scoped, tag = 'scoped memory for tpu_custom_call.1']
    #allocation8 [shape = 'u8[1572864]{0}', space=vmem, size = 0x180000, scoped, tag = 'input window, operand 3, single buffered']
    #allocation9 [shape = 'u8[2048]{0}', space=vmem, size = 0x800, scoped, tag = 'input window, operand 4, single buffered']
    #allocation10 [shape = 's32[1]{0}', space=sflag, size = 0x4, scoped, tag = 'scoped memory for tpu_custom_call.1']
    #allocation11 [shape = 'u8[262144]{0}', space=vmem, size = 0x40000, scoped, tag = 'input window, operand 5, single buffered']
    #allocation12 [shape = 'u8[1024]{0}', space=vmem, size = 0x400, scoped, tag = 'input window, operand 6, single buffered']
    #allocation13 [shape = 's32[1]{0}', space=sflag, size = 0x4, scoped, tag = 'scoped memory for tpu_custom_call.1']
    #allocation14 [shape = 'u8[65536]{0}', space=vmem, size = 0x10000, scoped, tag = 'input window, operand 7, single buffered']
    #allocation15 [shape = 'u8[512]{0}', space=vmem, size = 0x400, scoped, tag = 'input window, operand 8, single buffered']
    #allocation16 [shape = 's32[1]{0}', space=sflag, size = 0x4, scoped, tag = 'scoped memory for tpu_custom_call.1']
    #allocation17 [shape = 'u8[4096]{0}', space=vmem, size = 0x1000, scoped, tag = 'output window, operand 0, single buffered']
    %15 = vsyncpa [#allocation4], 0
    %16 = vsyncpa [#allocation7], 0
    %17 = vsyncpa [#allocation10], 0
    %18 = vsyncpa [#allocation13], 0
    %19 = vsyncpa [#allocation16], 0
    %20 = vsyncpa [#allocation5], 0
    // Predicated region
    $region2: #{tpu_custom_call.1} parent=1 // pred_check
      _
    $region3: #{tpu_custom_call.1} parent=1 // pred_check_branch
      %22 = sbr.rel (0) target = $region5
    $region4: #{tpu_custom_call.1} parent=1 // pred_region
      _
    $region5: #{tpu_custom_call.1} parent=1 // pred_fallthru
      _
    // Predicated region
    $region6: #{tpu_custom_call.1} parent=1 // pred_check
      _
    $region7: #{tpu_custom_call.1} parent=1 // pred_check_branch
      %24 = sbr.rel (0) target = $region9
    $region8: #{tpu_custom_call.1} parent=1 // pred_region
      %s26 = ssub.s32 768, 768
      %27 = vsyncadd [#allocation4], %s26
      %s29 = sshll.u32 [#allocation3], 4
      %s30 = int_to_ptr.vmem [resolvable:$true] %s29
      %32 = dma.hbm_to_vmem [thread:$0]  %s1, 768, %s30, [#allocation4]
    $region9: #{tpu_custom_call.1} parent=1 // pred_fallthru
      _
    // Predicated region
    $region10: #{tpu_custom_call.1} parent=1 // pred_check
      _
    $region11: #{tpu_custom_call.1} parent=1 // pred_check_branch
      %34 = sbr.rel (0) target = $region13
    $region12: #{tpu_custom_call.1} parent=1 // pred_region
      %s36 = ssub.s32 768, 768
      %37 = vsyncadd [#allocation7], %s36
      %s39 = sshll.u32 [#allocation6], 4
      %s40 = int_to_ptr.vmem [resolvable:$true] %s39
      %42 = dma.hbm_to_vmem [thread:$0]  %s2, 768, %s40, [#allocation7]
    $region13: #{tpu_custom_call.1} parent=1 // pred_fallthru
      _
    // Predicated region
    $region14: #{tpu_custom_call.1} parent=1 // pred_check
      _
    $region15: #{tpu_custom_call.1} parent=1 // pred_check_branch
      %44 = sbr.rel (0) target = $region17
    $region16: #{tpu_custom_call.1} parent=1 // pred_region
      %s46 = ssub.s32 49152, 49152
      %47 = vsyncadd [#allocation7], %s46
      %s48 = sshll.u32 [#allocation8], 4
      %s49 = int_to_ptr.vmem [resolvable:$true] %s48
      %54 = dma.hbm_to_vmem [thread:$0]  %s3, 49152, %s49, [#allocation7], 256, 256, 16
    $region17: #{tpu_custom_call.1} parent=1 // pred_fallthru
      _
    // Predicated region
    $region18: #{tpu_custom_call.1} parent=1 // pred_check
      _
    $region19: #{tpu_custom_call.1} parent=1 // pred_check_branch
      %56 = sbr.rel (0) target = $region21
    $region20: #{tpu_custom_call.1} parent=1 // pred_region
      %s58 = ssub.s32 64, 64
      %59 = vsyncadd [#allocation10], %s58
      %s61 = sshll.u32 [#allocation9], 4
      %s62 = int_to_ptr.vmem [resolvable:$true] %s61
      %64 = dma.hbm_to_vmem [thread:$0]  %s4, 64, %s62, [#allocation10]
    $region21: #{tpu_custom_call.1} parent=1 // pred_fallthru
      _
    // Predicated region
    $region22: #{tpu_custom_call.1} parent=1 // pred_check
      _
    $region23: #{tpu_custom_call.1} parent=1 // pred_check_branch
      %66 = sbr.rel (0) target = $region25
    $region24: #{tpu_custom_call.1} parent=1 // pred_region
      %s68 = ssub.s32 8192, 8192
      %69 = vsyncadd [#allocation10], %s68
      %s70 = sshll.u32 [#allocation11], 4
      %s71 = int_to_ptr.vmem [resolvable:$true] %s70
      %76 = dma.hbm_to_vmem [thread:$0]  %s5, 8192, %s71, [#allocation10], 128, 128, 8
    $region25: #{tpu_custom_call.1} parent=1 // pred_fallthru
      _
    // Predicated region
    $region26: #{tpu_custom_call.1} parent=1 // pred_check
      _
    $region27: #{tpu_custom_call.1} parent=1 // pred_check_branch
      %78 = sbr.rel (0) target = $region29
    $region28: #{tpu_custom_call.1} parent=1 // pred_region
      %s80 = ssub.s32 32, 32
      %81 = vsyncadd [#allocation13], %s80
      %s83 = sshll.u32 [#allocation12], 4
      %s84 = int_to_ptr.vmem [resolvable:$true] %s83
      %86 = dma.hbm_to_vmem [thread:$0]  %s6, 32, %s84, [#allocation13]
    $region29: #{tpu_custom_call.1} parent=1 // pred_fallthru
      _
    // Predicated region
    $region30: #{tpu_custom_call.1} parent=1 // pred_check
      _
    $region31: #{tpu_custom_call.1} parent=1 // pred_check_branch
      %88 = sbr.rel (0) target = $region33
    $region32: #{tpu_custom_call.1} parent=1 // pred_region
      %s90 = ssub.s32 2048, 2048
      %91 = vsyncadd [#allocation13], %s90
      %s92 = sshll.u32 [#allocation14], 4
      %s93 = int_to_ptr.vmem [resolvable:$true] %s92
      %98 = dma.hbm_to_vmem [thread:$0]  %s7, 2048, %s93, [#allocation13], 64, 64, 4
    $region33: #{tpu_custom_call.1} parent=1 // pred_fallthru
      _
    // Predicated region
    $region34: #{tpu_custom_call.1} parent=1 // pred_check
      _
    $region35: #{tpu_custom_call.1} parent=1 // pred_check_branch
      %100 = sbr.rel (0) target = $region37
    $region36: #{tpu_custom_call.1} parent=1 // pred_region
      %s102 = ssub.s32 16, 16
      %103 = vsyncadd [#allocation16], %s102
      %s105 = sshll.u32 [#allocation15], 4
      %s106 = int_to_ptr.vmem [resolvable:$true] %s105
      %108 = dma.hbm_to_vmem [thread:$0]  %s8, 16, %s106, [#allocation16]
    $region37: #{tpu_custom_call.1} parent=1 // pred_fallthru
      _
    // Predicated region
    $region38: #{tpu_custom_call.1} parent=1 // pred_check
      _
    $region39: #{tpu_custom_call.1} parent=1 // pred_check_branch
      %110 = sbr.rel (0) target = $region41
    $region40: #{tpu_custom_call.1} parent=1 // pred_region
      %111 = dma.done [#allocation4], 768
    $region41: #{tpu_custom_call.1} parent=1 // pred_fallthru
      _
    // Predicated region
    $region42: #{tpu_custom_call.1} parent=1 // pred_check
      _
    $region43: #{tpu_custom_call.1} parent=1 // pred_check_branch
      %113 = sbr.rel (0) target = $region45
    $region44: #{tpu_custom_call.1} parent=1 // pred_region
      %114 = dma.done [#allocation7], 768
    $region45: #{tpu_custom_call.1} parent=1 // pred_fallthru
      _
    // Predicated region
    $region46: #{tpu_custom_call.1} parent=1 // pred_check
      _
    $region47: #{tpu_custom_call.1} parent=1 // pred_check_branch
      %116 = sbr.rel (0) target = $region49
    $region48: #{tpu_custom_call.1} parent=1 // pred_region
      %117 = dma.done [#allocation7], 49152
    $region49: #{tpu_custom_call.1} parent=1 // pred_fallthru
      _
    // Predicated region
    $region50: #{tpu_custom_call.1} parent=1 // pred_check
      _
    $region51: #{tpu_custom_call.1} parent=1 // pred_check_branch
      %119 = sbr.rel (0) target = $region53
    $region52: #{tpu_custom_call.1} parent=1 // pred_region
      %120 = dma.done [#allocation10], 64
    $region53: #{tpu_custom_call.1} parent=1 // pred_fallthru
      _
    // Predicated region
    $region54: #{tpu_custom_call.1} parent=1 // pred_check
      _
    $region55: #{tpu_custom_call.1} parent=1 // pred_check_branch
      %122 = sbr.rel (0) target = $region57
    $region56: #{tpu_custom_call.1} parent=1 // pred_region
      %123 = dma.done [#allocation10], 8192
    $region57: #{tpu_custom_call.1} parent=1 // pred_fallthru
      _
    // Predicated region
    $region58: #{tpu_custom_call.1} parent=1 // pred_check
      _
    $region59: #{tpu_custom_call.1} parent=1 // pred_check_branch
      %125 = sbr.rel (0) target = $region61
    $region60: #{tpu_custom_call.1} parent=1 // pred_region
      %126 = dma.done [#allocation13], 32
    $region61: #{tpu_custom_call.1} parent=1 // pred_fallthru
      _
    // Predicated region
    $region62: #{tpu_custom_call.1} parent=1 // pred_check
      _
    $region63: #{tpu_custom_call.1} parent=1 // pred_check_branch
      %128 = sbr.rel (0) target = $region65
    $region64: #{tpu_custom_call.1} parent=1 // pred_region
      %129 = dma.done [#allocation13], 2048
    $region65: #{tpu_custom_call.1} parent=1 // pred_fallthru
      _
    // Predicated region
    $region66: #{tpu_custom_call.1} parent=1 // pred_check
      _
    $region67: #{tpu_custom_call.1} parent=1 // pred_check_branch
      %131 = sbr.rel (0) target = $region69
    $region68: #{tpu_custom_call.1} parent=1 // pred_region
      %132 = dma.done [#allocation16], 16
    $region69: #{tpu_custom_call.1} parent=1 // pred_fallthru
      _
    %s134 = sld [smem:[#allocation2]]
    %p136 = scmp.ne.f32.partialorder %s134, %s134
    %s137 = sshrl.u32 %s134, 16
    %s138 = sand.u32 %s137, 1
    %s139 = sadd.s32 32767, %s138
    %s140 = sadd.s32 %s134, %s139
    %s141 = sand.u32 %s140, 4294901760
    %s142 = scalar_select %p136, 2143289344, %s141
    %s144 = sshrl.u32 %s142, 16
    %v145 = vld [vmem:[#allocation3] sm:$0xff]
    %v146 = vld [vmem:[#allocation3 + $0x8] sm:$0xff]
    %v147 = vld [vmem:[#allocation3 + $0x10] sm:$0xff]
    %v148 = vld [vmem:[#allocation3 + $0x18] sm:$0xff]
    %v149 = vld [vmem:[#allocation3 + $0x20] sm:$0xff]
    %v150 = vld [vmem:[#allocation3 + $0x28] sm:$0xff]
    %v151 = vld [vmem:[#allocation6] sm:$0xff]
    %v152 = vld [vmem:[#allocation6 + $0x8] sm:$0xff]
    %v153 = vld [vmem:[#allocation6 + $0x10] sm:$0xff]
    %v154 = vld [vmem:[#allocation6 + $0x18] sm:$0xff]
    %v155 = vld [vmem:[#allocation6 + $0x20] sm:$0xff]
    %v156 = vld [vmem:[#allocation6 + $0x28] sm:$0xff]
    %s157 = sshll.u32 %s144, 16
    %s158 = sor.u32 %s144, %s157
    %v159 = vstv %s158
    %v161 = vmul.bf16 %v159, %v151
    %v162 = vmul.bf16 %v159, %v152
    %v163 = vmul.bf16 %v159, %v153
    %v164 = vmul.bf16 %v159, %v154
    %v165 = vmul.bf16 %v159, %v155
    %v166 = vmul.bf16 %v159, %v156
    %v167 = vadd.bf16 %v145, %v161
    %v168 = vadd.bf16 %v146, %v162
    %v169 = vadd.bf16 %v147, %v163
    %v170 = vadd.bf16 %v148, %v164
    %v171 = vadd.bf16 %v149, %v165
    %v172 = vadd.bf16 %v150, %v166
    %v173 = vld [vmem:[#allocation8] sm:$0xff]
    %v174 = vld [vmem:[#allocation8 + $0x8] sm:$0xff]
    %v175 = vld [vmem:[#allocation8 + $0x10] sm:$0xff]
    %v176 = vld [vmem:[#allocation8 + $0x18] sm:$0xff]
    %v177 = vld [vmem:[#allocation8 + $0x20] sm:$0xff]
    %v178 = vld [vmem:[#allocation8 + $0x28] sm:$0xff]
    %v179 = vld [vmem:[#allocation8 + $0x30] sm:$0xff]
    %v180 = vld [vmem:[#allocation8 + $0x38] sm:$0xff]
    %v181 = vld [vmem:[#allocation8 + $0x40] sm:$0xff]
    %v182 = vld [vmem:[#allocation8 + $0x48] sm:$0xff]
    %v183 = vld [vmem:[#allocation8 + $0x50] sm:$0xff]
    %v184 = vld [vmem:[#allocation8 + $0x58] sm:$0xff]
    %v185 = vld [vmem:[#allocation8 + $0x60] sm:$0xff]
    %v186 = vld [vmem:[#allocation8 + $0x68] sm:$0xff]
    %v187 = vld [vmem:[#allocation8 + $0x70] sm:$0xff]
    %v188 = vld [vmem:[#allocation8 + $0x78] sm:$0xff]
    %v189 = vld [vmem:[#allocation8 + $0x80] sm:$0xff]
    %v190 = vld [vmem:[#allocation8 + $0x88] sm:$0xff]
    %v191 = vld [vmem:[#allocation8 + $0x90] sm:$0xff]
    %v192 = vld [vmem:[#allocation8 + $0x98] sm:$0xff]
    %v193 = vld [vmem:[#allocation8 + $0xa0] sm:$0xff]
    %v194 = vld [vmem:[#allocation8 + $0xa8] sm:$0xff]
    %v195 = vld [vmem:[#allocation8 + $0xb0] sm:$0xff]
    %v196 = vld [vmem:[#allocation8 + $0xb8] sm:$0xff]
    %v197 = vld [vmem:[#allocation8 + $0xc0] sm:$0xff]
    %v198 = vld [vmem:[#allocation8 + $0xc8] sm:$0xff]
    %v199 = vld [vmem:[#allocation8 + $0xd0] sm:$0xff]
    %v200 = vld [vmem:[#allocation8 + $0xd8] sm:$0xff]
    %v201 = vld [vmem:[#allocation8 + $0xe0] sm:$0xff]
    %v202 = vld [vmem:[#allocation8 + $0xe8] sm:$0xff]
    %v203 = vld [vmem:[#allocation8 + $0xf0] sm:$0xff]
    %v204 = vld [vmem:[#allocation8 + $0xf8] sm:$0xff]
    %v205 = vld [vmem:[#allocation8 + $0x100] sm:$0xff]
    %v206 = vld [vmem:[#allocation8 + $0x108] sm:$0xff]
    %v207 = vld [vmem:[#allocation8 + $0x110] sm:$0xff]
    %v208 = vld [vmem:[#allocation8 + $0x118] sm:$0xff]
    %v209 = vld [vmem:[#allocation8 + $0x120] sm:$0xff]
    %v210 = vld [vmem:[#allocation8 + $0x128] sm:$0xff]
    %v211 = vld [vmem:[#allocation8 + $0x130] sm:$0xff]
    %v212 = vld [vmem:[#allocation8 + $0x138] sm:$0xff]
    %v213 = vld [vmem:[#allocation8 + $0x140] sm:$0xff]
    %v214 = vld [vmem:[#allocation8 + $0x148] sm:$0xff]
    %v215 = vld [vmem:[#allocation8 + $0x150] sm:$0xff]
    %v216 = vld [vmem:[#allocation8 + $0x158] sm:$0xff]
    %v217 = vld [vmem:[#allocation8 + $0x160] sm:$0xff]
    %v218 = vld [vmem:[#allocation8 + $0x168] sm:$0xff]
    %v219 = vld [vmem:[#allocation8 + $0x170] sm:$0xff]
    %v220 = vld [vmem:[#allocation8 + $0x178] sm:$0xff]
    %v221 = vld [vmem:[#allocation8 + $0x180] sm:$0xff]
    %v222 = vld [vmem:[#allocation8 + $0x188] sm:$0xff]
    %v223 = vld [vmem:[#allocation8 + $0x190] sm:$0xff]
    %v224 = vld [vmem:[#allocation8 + $0x198] sm:$0xff]
    %v225 = vld [vmem:[#allocation8 + $0x1a0] sm:$0xff]
    %v226 = vld [vmem:[#allocation8 + $0x1a8] sm:$0xff]
    %v227 = vld [vmem:[#allocation8 + $0x1b0] sm:$0xff]
    %v228 = vld [vmem:[#allocation8 + $0x1b8] sm:$0xff]
    %v229 = vld [vmem:[#allocation8 + $0x1c0] sm:$0xff]
    %v230 = vld [vmem:[#allocation8 + $0x1c8] sm:$0xff]
    %v231 = vld [vmem:[#allocation8 + $0x1d0] sm:$0xff]
    %v232 = vld [vmem:[#allocation8 + $0x1d8] sm:$0xff]
    %v233 = vld [vmem:[#allocation8 + $0x1e0] sm:$0xff]
    %v234 = vld [vmem:[#allocation8 + $0x1e8] sm:$0xff]
    %v235 = vld [vmem:[#allocation8 + $0x1f0] sm:$0xff]
    %v236 = vld [vmem:[#allocation8 + $0x1f8] sm:$0xff]
    %v237 = vld [vmem:[#allocation8 + $0x200] sm:$0xff]
    %v238 = vld [vmem:[#allocation8 + $0x208] sm:$0xff]
    %v239 = vld [vmem:[#allocation8 + $0x210] sm:$0xff]
    %v240 = vld [vmem:[#allocation8 + $0x218] sm:$0xff]
    %v241 = vld [vmem:[#allocation8 + $0x220] sm:$0xff]
    %v242 = vld [vmem:[#allocation8 + $0x228] sm:$0xff]
    %v243 = vld [vmem:[#allocation8 + $0x230] sm:$0xff]
    %v244 = vld [vmem:[#allocation8 + $0x238] sm:$0xff]
    %v245 = vld [vmem:[#allocation8 + $0x240] sm:$0xff]
    %v246 = vld [vmem:[#allocation8 + $0x248] sm:$0xff]
    %v247 = vld [vmem:[#allocation8 + $0x250] sm:$0xff]
    %v248 = vld [vmem:[#allocation8 + $0x258] sm:$0xff]
    %v249 = vld [vmem:[#allocation8 + $0x260] sm:$0xff]
    %v250 = vld [vmem:[#allocation8 + $0x268] sm:$0xff]
    %v251 = vld [vmem:[#allocation8 + $0x270] sm:$0xff]
    %v252 = vld [vmem:[#allocation8 + $0x278] sm:$0xff]
    %v253 = vld [vmem:[#allocation8 + $0x280] sm:$0xff]
    %v254 = vld [vmem:[#allocation8 + $0x288] sm:$0xff]
    %v255 = vld [vmem:[#allocation8 + $0x290] sm:$0xff]
    %v256 = vld [vmem:[#allocation8 + $0x298] sm:$0xff]
    %v257 = vld [vmem:[#allocation8 + $0x2a0] sm:$0xff]
    %v258 = vld [vmem:[#allocation8 + $0x2a8] sm:$0xff]
    %v259 = vld [vmem:[#allocation8 + $0x2b0] sm:$0xff]
    %v260 = vld [vmem:[#allocation8 + $0x2b8] sm:$0xff]
    %v261 = vld [vmem:[#allocation8 + $0x2c0] sm:$0xff]
    %v262 = vld [vmem:[#allocation8 + $0x2c8] sm:$0xff]
    %v263 = vld [vmem:[#allocation8 + $0x2d0] sm:$0xff]
    %v264 = vld [vmem:[#allocation8 + $0x2d8] sm:$0xff]
    %v265 = vld [vmem:[#allocation8 + $0x2e0] sm:$0xff]
    %v266 = vld [vmem:[#allocation8 + $0x2e8] sm:$0xff]
    %v267 = vld [vmem:[#allocation8 + $0x2f0] sm:$0xff]
    %v268 = vld [vmem:[#allocation8 + $0x2f8] sm:$0xff]
    %v269 = vld [vmem:[#allocation8 + $0x300] sm:$0xff]
    %v270 = vld [vmem:[#allocation8 + $0x308] sm:$0xff]
    %v271 = vld [vmem:[#allocation8 + $0x310] sm:$0xff]
    %v272 = vld [vmem:[#allocation8 + $0x318] sm:$0xff]
    %v273 = vld [vmem:[#allocation8 + $0x320] sm:$0xff]
    %v274 = vld [vmem:[#allocation8 + $0x328] sm:$0xff]
    %v275 = vld [vmem:[#allocation8 + $0x330] sm:$0xff]
    %v276 = vld [vmem:[#allocation8 + $0x338] sm:$0xff]
    %v277 = vld [vmem:[#allocation8 + $0x340] sm:$0xff]
    %v278 = vld [vmem:[#allocation8 + $0x348] sm:$0xff]
    %v279 = vld [vmem:[#allocation8 + $0x350] sm:$0xff]
    %v280 = vld [vmem:[#allocation8 + $0x358] sm:$0xff]
    %v281 = vld [vmem:[#allocation8 + $0x360] sm:$0xff]
    %v282 = vld [vmem:[#allocation8 + $0x368] sm:$0xff]
    %v283 = vld [vmem:[#allocation8 + $0x370] sm:$0xff]
    %v284 = vld [vmem:[#allocation8 + $0x378] sm:$0xff]
    %v285 = vld [vmem:[#allocation8 + $0x380] sm:$0xff]
    %v286 = vld [vmem:[#allocation8 + $0x388] sm:$0xff]
    %v287 = vld [vmem:[#allocation8 + $0x390] sm:$0xff]
    %v288 = vld [vmem:[#allocation8 + $0x398] sm:$0xff]
    %v289 = vld [vmem:[#allocation8 + $0x3a0] sm:$0xff]
    %v290 = vld [vmem:[#allocation8 + $0x3a8] sm:$0xff]
    %v291 = vld [vmem:[#allocation8 + $0x3b0] sm:$0xff]
    %v292 = vld [vmem:[#allocation8 + $0x3b8] sm:$0xff]
    %v293 = vld [vmem:[#allocation8 + $0x3c0] sm:$0xff]
    %v294 = vld [vmem:[#allocation8 + $0x3c8] sm:$0xff]
    %v295 = vld [vmem:[#allocation8 + $0x3d0] sm:$0xff]
    %v296 = vld [vmem:[#allocation8 + $0x3d8] sm:$0xff]
    %v297 = vld [vmem:[#allocation8 + $0x3e0] sm:$0xff]
    %v298 = vld [vmem:[#allocation8 + $0x3e8] sm:$0xff]
    %v299 = vld [vmem:[#allocation8 + $0x3f0] sm:$0xff]
    %v300 = vld [vmem:[#allocation8 + $0x3f8] sm:$0xff]
    %v301 = vld [vmem:[#allocation8 + $0x400] sm:$0xff]
    %v302 = vld [vmem:[#allocation8 + $0x408] sm:$0xff]
    %v303 = vld [vmem:[#allocation8 + $0x410] sm:$0xff]
    %v304 = vld [vmem:[#allocation8 + $0x418] sm:$0xff]
    %v305 = vld [vmem:[#allocation8 + $0x420] sm:$0xff]
    %v306 = vld [vmem:[#allocation8 + $0x428] sm:$0xff]
    %v307 = vld [vmem:[#allocation8 + $0x430] sm:$0xff]
    %v308 = vld [vmem:[#allocation8 + $0x438] sm:$0xff]
    %v309 = vld [vmem:[#allocation8 + $0x440] sm:$0xff]
    %v310 = vld [vmem:[#allocation8 + $0x448] sm:$0xff]
    %v311 = vld [vmem:[#allocation8 + $0x450] sm:$0xff]
    %v312 = vld [vmem:[#allocation8 + $0x458] sm:$0xff]
    %v313 = vld [vmem:[#allocation8 + $0x460] sm:$0xff]
    %v314 = vld [vmem:[#allocation8 + $0x468] sm:$0xff]
    %v315 = vld [vmem:[#allocation8 + $0x470] sm:$0xff]
    %v316 = vld [vmem:[#allocation8 + $0x478] sm:$0xff]
    %v317 = vld [vmem:[#allocation8 + $0x480] sm:$0xff]
    %v318 = vld [vmem:[#allocation8 + $0x488] sm:$0xff]
    %v319 = vld [vmem:[#allocation8 + $0x490] sm:$0xff]
    %v320 = vld [vmem:[#allocation8 + $0x498] sm:$0xff]
    %v321 = vld [vmem:[#allocation8 + $0x4a0] sm:$0xff]
    %v322 = vld [vmem:[#allocation8 + $0x4a8] sm:$0xff]
    %v323 = vld [vmem:[#allocation8 + $0x4b0] sm:$0xff]
    %v324 = vld [vmem:[#allocation8 + $0x4b8] sm:$0xff]
    %v325 = vld [vmem:[#allocation8 + $0x4c0] sm:$0xff]
    %v326 = vld [vmem:[#allocation8 + $0x4c8] sm:$0xff]
    %v327 = vld [vmem:[#allocation8 + $0x4d0] sm:$0xff]
    %v328 = vld [vmem:[#allocation8 + $0x4d8] sm:$0xff]
    %v329 = vld [vmem:[#allocation8 + $0x4e0] sm:$0xff]
    %v330 = vld [vmem:[#allocation8 + $0x4e8] sm:$0xff]
    %v331 = vld [vmem:[#allocation8 + $0x4f0] sm:$0xff]
    %v332 = vld [vmem:[#allocation8 + $0x4f8] sm:$0xff]
    %v333 = vld [vmem:[#allocation8 + $0x500] sm:$0xff]
    %v334 = vld [vmem:[#allocation8 + $0x508] sm:$0xff]
    %v335 = vld [vmem:[#allocation8 + $0x510] sm:$0xff]
    %v336 = vld [vmem:[#allocation8 + $0x518] sm:$0xff]
    %v337 = vld [vmem:[#allocation8 + $0x520] sm:$0xff]
    %v338 = vld [vmem:[#allocation8 + $0x528] sm:$0xff]
    %v339 = vld [vmem:[#allocation8 + $0x530] sm:$0xff]
    %v340 = vld [vmem:[#allocation8 + $0x538] sm:$0xff]
    %v341 = vld [vmem:[#allocation8 + $0x540] sm:$0xff]
    %v342 = vld [vmem:[#allocation8 + $0x548] sm:$0xff]
    %v343 = vld [vmem:[#allocation8 + $0x550] sm:$0xff]
    %v344 = vld [vmem:[#allocation8 + $0x558] sm:$0xff]
    %v345 = vld [vmem:[#allocation8 + $0x560] sm:$0xff]
    %v346 = vld [vmem:[#allocation8 + $0x568] sm:$0xff]
    %v347 = vld [vmem:[#allocation8 + $0x570] sm:$0xff]
    %v348 = vld [vmem:[#allocation8 + $0x578] sm:$0xff]
    %v349 = vld [vmem:[#allocation8 + $0x580] sm:$0xff]
    %v350 = vld [vmem:[#allocation8 + $0x588] sm:$0xff]
    %v351 = vld [vmem:[#allocation8 + $0x590] sm:$0xff]
    %v352 = vld [vmem:[#allocation8 + $0x598] sm:$0xff]
    %v353 = vld [vmem:[#allocation8 + $0x5a0] sm:$0xff]
    %v354 = vld [vmem:[#allocation8 + $0x5a8] sm:$0xff]
    %v355 = vld [vmem:[#allocation8 + $0x5b0] sm:$0xff]
    %v356 = vld [vmem:[#allocation8 + $0x5b8] sm:$0xff]
    %v357 = vld [vmem:[#allocation8 + $0x5c0] sm:$0xff]
    %v358 = vld [vmem:[#allocation8 + $0x5c8] sm:$0xff]
    %v359 = vld [vmem:[#allocation8 + $0x5d0] sm:$0xff]
    %v360 = vld [vmem:[#allocation8 + $0x5d8] sm:$0xff]
    %v361 = vld [vmem:[#allocation8 + $0x5e0] sm:$0xff]
    %v362 = vld [vmem:[#allocation8 + $0x5e8] sm:$0xff]
    %v363 = vld [vmem:[#allocation8 + $0x5f0] sm:$0xff]
    %v364 = vld [vmem:[#allocation8 + $0x5f8] sm:$0xff]
    %v365 = vld [vmem:[#allocation8 + $0x600] sm:$0xff]
    %v366 = vld [vmem:[#allocation8 + $0x608] sm:$0xff]
    %v367 = vld [vmem:[#allocation8 + $0x610] sm:$0xff]
    %v368 = vld [vmem:[#allocation8 + $0x618] sm:$0xff]
    %v369 = vld [vmem:[#allocation8 + $0x620] sm:$0xff]
    %v370 = vld [vmem:[#allocation8 + $0x628] sm:$0xff]
    %v371 = vld [vmem:[#allocation8 + $0x630] sm:$0xff]
    %v372 = vld [vmem:[#allocation8 + $0x638] sm:$0xff]
    %v373 = vld [vmem:[#allocation8 + $0x640] sm:$0xff]
    %v374 = vld [vmem:[#allocation8 + $0x648] sm:$0xff]
    %v375 = vld [vmem:[#allocation8 + $0x650] sm:$0xff]
    %v376 = vld [vmem:[#allocation8 + $0x658] sm:$0xff]
    %v377 = vld [vmem:[#allocation8 + $0x660] sm:$0xff]
    %v378 = vld [vmem:[#allocation8 + $0x668] sm:$0xff]
    %v379 = vld [vmem:[#allocation8 + $0x670] sm:$0xff]
    %v380 = vld [vmem:[#allocation8 + $0x678] sm:$0xff]
    %v381 = vld [vmem:[#allocation8 + $0x680] sm:$0xff]
    %v382 = vld [vmem:[#allocation8 + $0x688] sm:$0xff]
    %v383 = vld [vmem:[#allocation8 + $0x690] sm:$0xff]
    %v384 = vld [vmem:[#allocation8 + $0x698] sm:$0xff]
    %v385 = vld [vmem:[#allocation8 + $0x6a0] sm:$0xff]
    %v386 = vld [vmem:[#allocation8 + $0x6a8] sm:$0xff]
    %v387 = vld [vmem:[#allocation8 + $0x6b0] sm:$0xff]
    %v388 = vld [vmem:[#allocation8 + $0x6b8] sm:$0xff]
    %v389 = vld [vmem:[#allocation8 + $0x6c0] sm:$0xff]
    %v390 = vld [vmem:[#allocation8 + $0x6c8] sm:$0xff]
    %v391 = vld [vmem:[#allocation8 + $0x6d0] sm:$0xff]
    %v392 = vld [vmem:[#allocation8 + $0x6d8] sm:$0xff]
    %v393 = vld [vmem:[#allocation8 + $0x6e0] sm:$0xff]
    %v394 = vld [vmem:[#allocation8 + $0x6e8] sm:$0xff]
    %v395 = vld [vmem:[#allocation8 + $0x6f0] sm:$0xff]
    %v396 = vld [vmem:[#allocation8 + $0x6f8] sm:$0xff]
    %v397 = vld [vmem:[#allocation8 + $0x700] sm:$0xff]
    %v398 = vld [vmem:[#allocation8 + $0x708] sm:$0xff]
    %v399 = vld [vmem:[#allocation8 + $0x710] sm:$0xff]
    %v400 = vld [vmem:[#allocation8 + $0x718] sm:$0xff]
    %v401 = vld [vmem:[#allocation8 + $0x720] sm:$0xff]
    %v402 = vld [vmem:[#allocation8 + $0x728] sm:$0xff]
    %v403 = vld [vmem:[#allocation8 + $0x730] sm:$0xff]
    %v404 = vld [vmem:[#allocation8 + $0x738] sm:$0xff]
    %v405 = vld [vmem:[#allocation8 + $0x740] sm:$0xff]
    %v406 = vld [vmem:[#allocation8 + $0x748] sm:$0xff]
    %v407 = vld [vmem:[#allocation8 + $0x750] sm:$0xff]
    %v408 = vld [vmem:[#allocation8 + $0x758] sm:$0xff]
    %v409 = vld [vmem:[#allocation8 + $0x760] sm:$0xff]
    %v410 = vld [vmem:[#allocation8 + $0x768] sm:$0xff]
    %v411 = vld [vmem:[#allocation8 + $0x770] sm:$0xff]
    %v412 = vld [vmem:[#allocation8 + $0x778] sm:$0xff]
    %v413 = vld [vmem:[#allocation8 + $0x780] sm:$0xff]
    %v414 = vld [vmem:[#allocation8 + $0x788] sm:$0xff]
    %v415 = vld [vmem:[#allocation8 + $0x790] sm:$0xff]
    %v416 = vld [vmem:[#allocation8 + $0x798] sm:$0xff]
    %v417 = vld [vmem:[#allocation8 + $0x7a0] sm:$0xff]
    %v418 = vld [vmem:[#allocation8 + $0x7a8] sm:$0xff]
    %v419 = vld [vmem:[#allocation8 + $0x7b0] sm:$0xff]
    %v420 = vld [vmem:[#allocation8 + $0x7b8] sm:$0xff]
    %v421 = vld [vmem:[#allocation8 + $0x7c0] sm:$0xff]
    %v422 = vld [vmem:[#allocation8 + $0x7c8] sm:$0xff]
    %v423 = vld [vmem:[#allocation8 + $0x7d0] sm:$0xff]
    %v424 = vld [vmem:[#allocation8 + $0x7d8] sm:$0xff]
    %v425 = vld [vmem:[#allocation8 + $0x7e0] sm:$0xff]
    %v426 = vld [vmem:[#allocation8 + $0x7e8] sm:$0xff]
    %v427 = vld [vmem:[#allocation8 + $0x7f0] sm:$0xff]
    %v428 = vld [vmem:[#allocation8 + $0x7f8] sm:$0xff]
    %v429 = vld [vmem:[#allocation8 + $0x800] sm:$0xff]
    %v430 = vld [vmem:[#allocation8 + $0x808] sm:$0xff]
    %v431 = vld [vmem:[#allocation8 + $0x810] sm:$0xff]
    %v432 = vld [vmem:[#allocation8 + $0x818] sm:$0xff]
    %v433 = vld [vmem:[#allocation8 + $0x820] sm:$0xff]
    %v434 = vld [vmem:[#allocation8 + $0x828] sm:$0xff]
    %v435 = vld [vmem:[#allocation8 + $0x830] sm:$0xff]
    %v436 = vld [vmem:[#allocation8 + $0x838] sm:$0xff]
    %v437 = vld [vmem:[#allocation8 + $0x840] sm:$0xff]
    %v438 = vld [vmem:[#allocation8 + $0x848] sm:$0xff]
    %v439 = vld [vmem:[#allocation8 + $0x850] sm:$0xff]
    %v440 = vld [vmem:[#allocation8 + $0x858] sm:$0xff]
    %v441 = vld [vmem:[#allocation8 + $0x860] sm:$0xff]
    %v442 = vld [vmem:[#allocation8 + $0x868] sm:$0xff]
    %v443 = vld [vmem:[#allocation8 + $0x870] sm:$0xff]
    %v444 = vld [vmem:[#allocation8 + $0x878] sm:$0xff]
    %v445 = vld [vmem:[#allocation8 + $0x880] sm:$0xff]
    %v446 = vld [vmem:[#allocation8 + $0x888] sm:$0xff]
    %v447 = vld [vmem:[#allocation8 + $0x890] sm:$0xff]
    %v448 = vld [vmem:[#allocation8 + $0x898] sm:$0xff]
    %v449 = vld [vmem:[#allocation8 + $0x8a0] sm:$0xff]
    %v450 = vld [vmem:[#allocation8 + $0x8a8] sm:$0xff]
    %v451 = vld [vmem:[#allocation8 + $0x8b0] sm:$0xff]
    %v452 = vld [vmem:[#allocation8 + $0x8b8] sm:$0xff]
    %v453 = vld [vmem:[#allocation8 + $0x8c0] sm:$0xff]
    %v454 = vld [vmem:[#allocation8 + $0x8c8] sm:$0xff]
    %v455 = vld [vmem:[#allocation8 + $0x8d0] sm:$0xff]
    %v456 = vld [vmem:[#allocation8 + $0x8d8] sm:$0xff]
    %v457 = vld [vmem:[#allocation8 + $0x8e0] sm:$0xff]
    %v458 = vld [vmem:[#allocation8 + $0x8e8] sm:$0xff]
    %v459 = vld [vmem:[#allocation8 + $0x8f0] sm:$0xff]
    %v460 = vld [vmem:[#allocation8 + $0x8f8] sm:$0xff]
    %v461 = vld [vmem:[#allocation8 + $0x900] sm:$0xff]
    %v462 = vld [vmem:[#allocation8 + $0x908] sm:$0xff]
    %v463 = vld [vmem:[#allocation8 + $0x910] sm:$0xff]
    %v464 = vld [vmem:[#allocation8 + $0x918] sm:$0xff]
    %v465 = vld [vmem:[#allocation8 + $0x920] sm:$0xff]
    %v466 = vld [vmem:[#allocation8 + $0x928] sm:$0xff]
    %v467 = vld [vmem:[#allocation8 + $0x930] sm:$0xff]
    %v468 = vld [vmem:[#allocation8 + $0x938] sm:$0xff]
    %v469 = vld [vmem:[#allocation8 + $0x940] sm:$0xff]
    %v470 = vld [vmem:[#allocation8 + $0x948] sm:$0xff]
    %v471 = vld [vmem:[#allocation8 + $0x950] sm:$0xff]
    %v472 = vld [vmem:[#allocation8 + $0x958] sm:$0xff]
    %v473 = vld [vmem:[#allocation8 + $0x960] sm:$0xff]
    %v474 = vld [vmem:[#allocation8 + $0x968] sm:$0xff]
    %v475 = vld [vmem:[#allocation8 + $0x970] sm:$0xff]
    %v476 = vld [vmem:[#allocation8 + $0x978] sm:$0xff]
    %v477 = vld [vmem:[#allocation8 + $0x980] sm:$0xff]
    %v478 = vld [vmem:[#allocation8 + $0x988] sm:$0xff]
    %v479 = vld [vmem:[#allocation8 + $0x990] sm:$0xff]
    %v480 = vld [vmem:[#allocation8 + $0x998] sm:$0xff]
    %v481 = vld [vmem:[#allocation8 + $0x9a0] sm:$0xff]
    %v482 = vld [vmem:[#allocation8 + $0x9a8] sm:$0xff]
    %v483 = vld [vmem:[#allocation8 + $0x9b0] sm:$0xff]
    %v484 = vld [vmem:[#allocation8 + $0x9b8] sm:$0xff]
    %v485 = vld [vmem:[#allocation8 + $0x9c0] sm:$0xff]
    %v486 = vld [vmem:[#allocation8 + $0x9c8] sm:$0xff]
    %v487 = vld [vmem:[#allocation8 + $0x9d0] sm:$0xff]
    %v488 = vld [vmem:[#allocation8 + $0x9d8] sm:$0xff]
    %v489 = vld [vmem:[#allocation8 + $0x9e0] sm:$0xff]
    %v490 = vld [vmem:[#allocation8 + $0x9e8] sm:$0xff]
    %v491 = vld [vmem:[#allocation8 + $0x9f0] sm:$0xff]
    %v492 = vld [vmem:[#allocation8 + $0x9f8] sm:$0xff]
    %v493 = vld [vmem:[#allocation8 + $0xa00] sm:$0xff]
    %v494 = vld [vmem:[#allocation8 + $0xa08] sm:$0xff]
    %v495 = vld [vmem:[#allocation8 + $0xa10] sm:$0xff]
    %v496 = vld [vmem:[#allocation8 + $0xa18] sm:$0xff]
    %v497 = vld [vmem:[#allocation8 + $0xa20] sm:$0xff]
    %v498 = vld [vmem:[#allocation8 + $0xa28] sm:$0xff]
    %v499 = vld [vmem:[#allocation8 + $0xa30] sm:$0xff]
    %v500 = vld [vmem:[#allocation8 + $0xa38] sm:$0xff]
    %v501 = vld [vmem:[#allocation8 + $0xa40] sm:$0xff]
    %v502 = vld [vmem:[#allocation8 + $0xa48] sm:$0xff]
    %v503 = vld [vmem:[#allocation8 + $0xa50] sm:$0xff]
    %v504 = vld [vmem:[#allocation8 + $0xa58] sm:$0xff]
    %v505 = vld [vmem:[#allocation8 + $0xa60] sm:$0xff]
    %v506 = vld [vmem:[#allocation8 + $0xa68] sm:$0xff]
    %v507 = vld [vmem:[#allocation8 + $0xa70] sm:$0xff]
    %v508 = vld [vmem:[#allocation8 + $0xa78] sm:$0xff]
    %v509 = vld [vmem:[#allocation8 + $0xa80] sm:$0xff]
    %v510 = vld [vmem:[#allocation8 + $0xa88] sm:$0xff]
    %v511 = vld [vmem:[#allocation8 + $0xa90] sm:$0xff]
    %v512 = vld [vmem:[#allocation8 + $0xa98] sm:$0xff]
    %v513 = vld [vmem:[#allocation8 + $0xaa0] sm:$0xff]
    %v514 = vld [vmem:[#allocation8 + $0xaa8] sm:$0xff]
    %v515 = vld [vmem:[#allocation8 + $0xab0] sm:$0xff]
    %v516 = vld [vmem:[#allocation8 + $0xab8] sm:$0xff]
    %v517 = vld [vmem:[#allocation8 + $0xac0] sm:$0xff]
    %v518 = vld [vmem:[#allocation8 + $0xac8] sm:$0xff]
    %v519 = vld [vmem:[#allocation8 + $0xad0] sm:$0xff]
    %v520 = vld [vmem:[#allocation8 + $0xad8] sm:$0xff]
    %v521 = vld [vmem:[#allocation8 + $0xae0] sm:$0xff]
    %v522 = vld [vmem:[#allocation8 + $0xae8] sm:$0xff]
    %v523 = vld [vmem:[#allocation8 + $0xaf0] sm:$0xff]
    %v524 = vld [vmem:[#allocation8 + $0xaf8] sm:$0xff]
    %v525 = vld [vmem:[#allocation8 + $0xb00] sm:$0xff]
    %v526 = vld [vmem:[#allocation8 + $0xb08] sm:$0xff]
    %v527 = vld [vmem:[#allocation8 + $0xb10] sm:$0xff]
    %v528 = vld [vmem:[#allocation8 + $0xb18] sm:$0xff]
    %v529 = vld [vmem:[#allocation8 + $0xb20] sm:$0xff]
    %v530 = vld [vmem:[#allocation8 + $0xb28] sm:$0xff]
    %v531 = vld [vmem:[#allocation8 + $0xb30] sm:$0xff]
    %v532 = vld [vmem:[#allocation8 + $0xb38] sm:$0xff]
    %v533 = vld [vmem:[#allocation8 + $0xb40] sm:$0xff]
    %v534 = vld [vmem:[#allocation8 + $0xb48] sm:$0xff]
    %v535 = vld [vmem:[#allocation8 + $0xb50] sm:$0xff]
    %v536 = vld [vmem:[#allocation8 + $0xb58] sm:$0xff]
    %v537 = vld [vmem:[#allocation8 + $0xb60] sm:$0xff]
    %v538 = vld [vmem:[#allocation8 + $0xb68] sm:$0xff]
    %v539 = vld [vmem:[#allocation8 + $0xb70] sm:$0xff]
    %v540 = vld [vmem:[#allocation8 + $0xb78] sm:$0xff]
    %v541 = vld [vmem:[#allocation8 + $0xb80] sm:$0xff]
    %v542 = vld [vmem:[#allocation8 + $0xb88] sm:$0xff]
    %v543 = vld [vmem:[#allocation8 + $0xb90] sm:$0xff]
    %v544 = vld [vmem:[#allocation8 + $0xb98] sm:$0xff]
    %v545 = vld [vmem:[#allocation8 + $0xba0] sm:$0xff]
    %v546 = vld [vmem:[#allocation8 + $0xba8] sm:$0xff]
    %v547 = vld [vmem:[#allocation8 + $0xbb0] sm:$0xff]
    %v548 = vld [vmem:[#allocation8 + $0xbb8] sm:$0xff]
    %v549 = vld [vmem:[#allocation8 + $0xbc0] sm:$0xff]
    %v550 = vld [vmem:[#allocation8 + $0xbc8] sm:$0xff]
    %v551 = vld [vmem:[#allocation8 + $0xbd0] sm:$0xff]
    %v552 = vld [vmem:[#allocation8 + $0xbd8] sm:$0xff]
    %v553 = vld [vmem:[#allocation8 + $0xbe0] sm:$0xff]
    %v554 = vld [vmem:[#allocation8 + $0xbe8] sm:$0xff]
    %v555 = vld [vmem:[#allocation8 + $0xbf0] sm:$0xff]
    %v556 = vld [vmem:[#allocation8 + $0xbf8] sm:$0xff]
    %v557 = vld [vmem:[#allocation9] sm:$0xf]
    %v559 = vlaneseq
    %v560 = vshrl.u32 %v559, 7
    %v561 = vsub.s32 0, %v560
    %v562 = vrot.slane %v557, %v561
    %v563 = vlaneseq
    %v564 = vshrl.u32 %v563, 7
    %v565 = vsub.s32 1, %v564
    %v566 = vrot.slane %v557, %v565
    %v567 = vlaneseq
    %v568 = vshrl.u32 %v567, 7
    %v569 = vsub.s32 2, %v568
    %v570 = vrot.slane %v557, %v569
    %v571 = vlaneseq
    %v572 = vshrl.u32 %v571, 7
    %v573 = vsub.s32 3, %v572
    %v574 = vrot.slane %v557, %v573
    %v585 = vunpack.c.l.b16 %v167
    %v586 = vunpack.c.h.b16 %v167
    %v587 = vunpack.c.l.b16 %v168
    %v588 = vunpack.c.h.b16 %v168
    %v589 = vunpack.c.l.b16 %v169
    %v590 = vunpack.c.h.b16 %v169
    %v591 = vunpack.c.l.b16 %v170
    %v592 = vunpack.c.h.b16 %v170
    %v593 = vunpack.c.l.b16 %v171
    %v594 = vunpack.c.h.b16 %v171
    %v595 = vunpack.c.l.b16 %v172
    %v596 = vunpack.c.h.b16 %v172
    %v597 = vpack.c.b16 %v585, %v585
    %v598 = vpack.c.b16 %v586, %v586
    %v599 = vpack.c.b16 %v587, %v587
    %v600 = vpack.c.b16 %v588, %v588
    %v601 = vpack.c.b16 %v589, %v589
    %v602 = vpack.c.b16 %v590, %v590
    %v603 = vpack.c.b16 %v591, %v591
    %v604 = vpack.c.b16 %v592, %v592
    %v605 = vpack.c.b16 %v593, %v593
    %v606 = vpack.c.b16 %v594, %v594
    %v607 = vpack.c.b16 %v595, %v595
    %v608 = vpack.c.b16 %v596, %v596
    %v1005 = vunpack.c.l.b16 %v173
    %v1006 = vunpack.c.h.b16 %v173
    %v1007 = vunpack.c.l.b16 %v174
    %v1008 = vunpack.c.h.b16 %v174
    %v1009 = vunpack.c.l.b16 %v175
    %v1010 = vunpack.c.h.b16 %v175
    %v1011 = vunpack.c.l.b16 %v176
    %v1012 = vunpack.c.h.b16 %v176
    %v1013 = vunpack.c.l.b16 %v177
    %v1014 = vunpack.c.h.b16 %v177
    %v1015 = vunpack.c.l.b16 %v178
    %v1016 = vunpack.c.h.b16 %v178
    %v1017 = vunpack.c.l.b16 %v179
    %v1018 = vunpack.c.h.b16 %v179
    %v1019 = vunpack.c.l.b16 %v180
    %v1020 = vunpack.c.h.b16 %v180
    %v1021 = vunpack.c.l.b16 %v181
    %v1022 = vunpack.c.h.b16 %v181
    %v1023 = vunpack.c.l.b16 %v182
    %v1024 = vunpack.c.h.b16 %v182
    %v1025 = vunpack.c.l.b16 %v183
    %v1026 = vunpack.c.h.b16 %v183
    %v1027 = vunpack.c.l.b16 %v184
    %v1028 = vunpack.c.h.b16 %v184
    %v1029 = vunpack.c.l.b16 %v185
    %v1030 = vunpack.c.h.b16 %v185
    %v1031 = vunpack.c.l.b16 %v186
    %v1032 = vunpack.c.h.b16 %v186
    %v1033 = vunpack.c.l.b16 %v187
    %v1034 = vunpack.c.h.b16 %v187
    %v1035 = vunpack.c.l.b16 %v188
    %v1036 = vunpack.c.h.b16 %v188
    %v1037 = vunpack.c.l.b16 %v189
    %v1038 = vunpack.c.h.b16 %v189
    %v1039 = vunpack.c.l.b16 %v190
    %v1040 = vunpack.c.h.b16 %v190
    %v1041 = vunpack.c.l.b16 %v191
    %v1042 = vunpack.c.h.b16 %v191
    %v1043 = vunpack.c.l.b16 %v192
    %v1044 = vunpack.c.h.b16 %v192
    %v1045 = vunpack.c.l.b16 %v193
    %v1046 = vunpack.c.h.b16 %v193
    %v1047 = vunpack.c.l.b16 %v194
    %v1048 = vunpack.c.h.b16 %v194
    %v1049 = vunpack.c.l.b16 %v195
    %v1050 = vunpack.c.h.b16 %v195
    %v1051 = vunpack.c.l.b16 %v196
    %v1052 = vunpack.c.h.b16 %v196
    %v1053 = vunpack.c.l.b16 %v197
    %v1054 = vunpack.c.h.b16 %v197
    %v1055 = vunpack.c.l.b16 %v198
    %v1056 = vunpack.c.h.b16 %v198
    %v1057 = vunpack.c.l.b16 %v199
    %v1058 = vunpack.c.h.b16 %v199
    %v1059 = vunpack.c.l.b16 %v200
    %v1060 = vunpack.c.h.b16 %v200
    %v1061 = vunpack.c.l.b16 %v201
    %v1062 = vunpack.c.h.b16 %v201
    %v1063 = vunpack.c.l.b16 %v202
    %v1064 = vunpack.c.h.b16 %v202
    %v1065 = vunpack.c.l.b16 %v203
    %v1066 = vunpack.c.h.b16 %v203
    %v1067 = vunpack.c.l.b16 %v204
    %v1068 = vunpack.c.h.b16 %v204
    %v1069 = vunpack.c.l.b16 %v205
    %v1070 = vunpack.c.h.b16 %v205
    %v1071 = vunpack.c.l.b16 %v206
    %v1072 = vunpack.c.h.b16 %v206
    %v1073 = vunpack.c.l.b16 %v207
    %v1074 = vunpack.c.h.b16 %v207
    %v1075 = vunpack.c.l.b16 %v208
    %v1076 = vunpack.c.h.b16 %v208
    %v1077 = vunpack.c.l.b16 %v209
    %v1078 = vunpack.c.h.b16 %v209
    %v1079 = vunpack.c.l.b16 %v210
    %v1080 = vunpack.c.h.b16 %v210
    %v1081 = vunpack.c.l.b16 %v211
    %v1082 = vunpack.c.h.b16 %v211
    %v1083 = vunpack.c.l.b16 %v212
    %v1084 = vunpack.c.h.b16 %v212
    %v1085 = vunpack.c.l.b16 %v213
    %v1086 = vunpack.c.h.b16 %v213
    %v1087 = vunpack.c.l.b16 %v214
    %v1088 = vunpack.c.h.b16 %v214
    %v1089 = vunpack.c.l.b16 %v215
    %v1090 = vunpack.c.h.b16 %v215
    %v1091 = vunpack.c.l.b16 %v216
    %v1092 = vunpack.c.h.b16 %v216
    %v1093 = vunpack.c.l.b16 %v217
    %v1094 = vunpack.c.h.b16 %v217
    %v1095 = vunpack.c.l.b16 %v218
    %v1096 = vunpack.c.h.b16 %v218
    %v1097 = vunpack.c.l.b16 %v219
    %v1098 = vunpack.c.h.b16 %v219
    %v1099 = vunpack.c.l.b16 %v220
    %v1100 = vunpack.c.h.b16 %v220
    %v1101 = vunpack.c.l.b16 %v221
    %v1102 = vunpack.c.h.b16 %v221
    %v1103 = vunpack.c.l.b16 %v222
    %v1104 = vunpack.c.h.b16 %v222
    %v1105 = vunpack.c.l.b16 %v223
    %v1106 = vunpack.c.h.b16 %v223
    %v1107 = vunpack.c.l.b16 %v224
    %v1108 = vunpack.c.h.b16 %v224
    %v1109 = vunpack.c.l.b16 %v225
    %v1110 = vunpack.c.h.b16 %v225
    %v1111 = vunpack.c.l.b16 %v226
    %v1112 = vunpack.c.h.b16 %v226
    %v1113 = vunpack.c.l.b16 %v227
    %v1114 = vunpack.c.h.b16 %v227
    %v1115 = vunpack.c.l.b16 %v228
    %v1116 = vunpack.c.h.b16 %v228
    %v1117 = vunpack.c.l.b16 %v229
    %v1118 = vunpack.c.h.b16 %v229
    %v1119 = vunpack.c.l.b16 %v230
    %v1120 = vunpack.c.h.b16 %v230
    %v1121 = vunpack.c.l.b16 %v231
    %v1122 = vunpack.c.h.b16 %v231
    %v1123 = vunpack.c.l.b16 %v232
    %v1124 = vunpack.c.h.b16 %v232
    %v1125 = vunpack.c.l.b16 %v233
    %v1126 = vunpack.c.h.b16 %v233
    %v1127 = vunpack.c.l.b16 %v234
    %v1128 = vunpack.c.h.b16 %v234
    %v1129 = vunpack.c.l.b16 %v235
    %v1130 = vunpack.c.h.b16 %v235
    %v1131 = vunpack.c.l.b16 %v236
    %v1132 = vunpack.c.h.b16 %v236
    %v1133 = vunpack.c.l.b16 %v237
    %v1134 = vunpack.c.h.b16 %v237
    %v1135 = vunpack.c.l.b16 %v238
    %v1136 = vunpack.c.h.b16 %v238
    %v1137 = vunpack.c.l.b16 %v239
    %v1138 = vunpack.c.h.b16 %v239
    %v1139 = vunpack.c.l.b16 %v240
    %v1140 = vunpack.c.h.b16 %v240
    %v1141 = vunpack.c.l.b16 %v241
    %v1142 = vunpack.c.h.b16 %v241
    %v1143 = vunpack.c.l.b16 %v242
    %v1144 = vunpack.c.h.b16 %v242
    %v1145 = vunpack.c.l.b16 %v243
    %v1146 = vunpack.c.h.b16 %v243
    %v1147 = vunpack.c.l.b16 %v244
    %v1148 = vunpack.c.h.b16 %v244
    %v1149 = vunpack.c.l.b16 %v245
    %v1150 = vunpack.c.h.b16 %v245
    %v1151 = vunpack.c.l.b16 %v246
    %v1152 = vunpack.c.h.b16 %v246
    %v1153 = vunpack.c.l.b16 %v247
    %v1154 = vunpack.c.h.b16 %v247
    %v1155 = vunpack.c.l.b16 %v248
    %v1156 = vunpack.c.h.b16 %v248
    %v1157 = vunpack.c.l.b16 %v249
    %v1158 = vunpack.c.h.b16 %v249
    %v1159 = vunpack.c.l.b16 %v250
    %v1160 = vunpack.c.h.b16 %v250
    %v1161 = vunpack.c.l.b16 %v251
    %v1162 = vunpack.c.h.b16 %v251
    %v1163 = vunpack.c.l.b16 %v252
    %v1164 = vunpack.c.h.b16 %v252
    %v1165 = vunpack.c.l.b16 %v253
    %v1166 = vunpack.c.h.b16 %v253
    %v1167 = vunpack.c.l.b16 %v254
    %v1168 = vunpack.c.h.b16 %v254
    %v1169 = vunpack.c.l.b16 %v255
    %v1170 = vunpack.c.h.b16 %v255
    %v1171 = vunpack.c.l.b16 %v256
    %v1172 = vunpack.c.h.b16 %v256
    %v1173 = vunpack.c.l.b16 %v257
    %v1174 = vunpack.c.h.b16 %v257
    %v1175 = vunpack.c.l.b16 %v258
    %v1176 = vunpack.c.h.b16 %v258
    %v1177 = vunpack.c.l.b16 %v259
    %v1178 = vunpack.c.h.b16 %v259
    %v1179 = vunpack.c.l.b16 %v260
    %v1180 = vunpack.c.h.b16 %v260
    %v1181 = vunpack.c.l.b16 %v261
    %v1182 = vunpack.c.h.b16 %v261
    %v1183 = vunpack.c.l.b16 %v262
    %v1184 = vunpack.c.h.b16 %v262
    %v1185 = vunpack.c.l.b16 %v263
    %v1186 = vunpack.c.h.b16 %v263
    %v1187 = vunpack.c.l.b16 %v264
    %v1188 = vunpack.c.h.b16 %v264
    %v1189 = vunpack.c.l.b16 %v265
    %v1190 = vunpack.c.h.b16 %v265
    %v1191 = vunpack.c.l.b16 %v266
    %v1192 = vunpack.c.h.b16 %v266
    %v1193 = vunpack.c.l.b16 %v267
    %v1194 = vunpack.c.h.b16 %v267
    %v1195 = vunpack.c.l.b16 %v268
    %v1196 = vunpack.c.h.b16 %v268
    %v1197 = vunpack.c.l.b16 %v269
    %v1198 = vunpack.c.h.b16 %v269
    %v1199 = vunpack.c.l.b16 %v270
    %v1200 = vunpack.c.h.b16 %v270
    %v1201 = vunpack.c.l.b16 %v271
    %v1202 = vunpack.c.h.b16 %v271
    %v1203 = vunpack.c.l.b16 %v272
    %v1204 = vunpack.c.h.b16 %v272
    %v1205 = vunpack.c.l.b16 %v273
    %v1206 = vunpack.c.h.b16 %v273
    %v1207 = vunpack.c.l.b16 %v274
    %v1208 = vunpack.c.h.b16 %v274
    %v1209 = vunpack.c.l.b16 %v275
    %v1210 = vunpack.c.h.b16 %v275
    %v1211 = vunpack.c.l.b16 %v276
    %v1212 = vunpack.c.h.b16 %v276
    %v1213 = vunpack.c.l.b16 %v277
    %v1214 = vunpack.c.h.b16 %v277
    %v1215 = vunpack.c.l.b16 %v278
    %v1216 = vunpack.c.h.b16 %v278
    %v1217 = vunpack.c.l.b16 %v279
    %v1218 = vunpack.c.h.b16 %v279
    %v1219 = vunpack.c.l.b16 %v280
    %v1220 = vunpack.c.h.b16 %v280
    %v1221 = vunpack.c.l.b16 %v281
    %v1222 = vunpack.c.h.b16 %v281
    %v1223 = vunpack.c.l.b16 %v282
    %v1224 = vunpack.c.h.b16 %v282
    %v1225 = vunpack.c.l.b16 %v283
    %v1226 = vunpack.c.h.b16 %v283
    %v1227 = vunpack.c.l.b16 %v284
    %v1228 = vunpack.c.h.b16 %v284
    %v1229 = vunpack.c.l.b16 %v285
    %v1230 = vunpack.c.h.b16 %v285
    %v1231 = vunpack.c.l.b16 %v286
    %v1232 = vunpack.c.h.b16 %v286
    %v1233 = vunpack.c.l.b16 %v287
    %v1234 = vunpack.c.h.b16 %v287
    %v1235 = vunpack.c.l.b16 %v288
    %v1236 = vunpack.c.h.b16 %v288
    %v1237 = vunpack.c.l.b16 %v289
    %v1238 = vunpack.c.h.b16 %v289
    %v1239 = vunpack.c.l.b16 %v290
    %v1240 = vunpack.c.h.b16 %v290
    %v1241 = vunpack.c.l.b16 %v291
    %v1242 = vunpack.c.h.b16 %v291
    %v1243 = vunpack.c.l.b16 %v292
    %v1244 = vunpack.c.h.b16 %v292
    %v1245 = vunpack.c.l.b16 %v293
    %v1246 = vunpack.c.h.b16 %v293
    %v1247 = vunpack.c.l.b16 %v294
    %v1248 = vunpack.c.h.b16 %v294
    %v1249 = vunpack.c.l.b16 %v295
    %v1250 = vunpack.c.h.b16 %v295
    %v1251 = vunpack.c.l.b16 %v296
    %v1252 = vunpack.c.h.b16 %v296
    %v1253 = vunpack.c.l.b16 %v297
    %v1254 = vunpack.c.h.b16 %v297
    %v1255 = vunpack.c.l.b16 %v298
    %v1256 = vunpack.c.h.b16 %v298
    %v1257 = vunpack.c.l.b16 %v299
    %v1258 = vunpack.c.h.b16 %v299
    %v1259 = vunpack.c.l.b16 %v300
    %v1260 = vunpack.c.h.b16 %v300
    %v1261 = vunpack.c.l.b16 %v301
    %v1262 = vunpack.c.h.b16 %v301
    %v1263 = vunpack.c.l.b16 %v302
    %v1264 = vunpack.c.h.b16 %v302
    %v1265 = vunpack.c.l.b16 %v303
    %v1266 = vunpack.c.h.b16 %v303
    %v1267 = vunpack.c.l.b16 %v304
    %v1268 = vunpack.c.h.b16 %v304
    %v1269 = vunpack.c.l.b16 %v305
    %v1270 = vunpack.c.h.b16 %v305
    %v1271 = vunpack.c.l.b16 %v306
    %v1272 = vunpack.c.h.b16 %v306
    %v1273 = vunpack.c.l.b16 %v307
    %v1274 = vunpack.c.h.b16 %v307
    %v1275 = vunpack.c.l.b16 %v308
    %v1276 = vunpack.c.h.b16 %v308
    %v1277 = vunpack.c.l.b16 %v309
    %v1278 = vunpack.c.h.b16 %v309
    %v1279 = vunpack.c.l.b16 %v310
    %v1280 = vunpack.c.h.b16 %v310
    %v1281 = vunpack.c.l.b16 %v311
    %v1282 = vunpack.c.h.b16 %v311
    %v1283 = vunpack.c.l.b16 %v312
    %v1284 = vunpack.c.h.b16 %v312
    %v1285 = vunpack.c.l.b16 %v313
    %v1286 = vunpack.c.h.b16 %v313
    %v1287 = vunpack.c.l.b16 %v314
    %v1288 = vunpack.c.h.b16 %v314
    %v1289 = vunpack.c.l.b16 %v315
    %v1290 = vunpack.c.h.b16 %v315
    %v1291 = vunpack.c.l.b16 %v316
    %v1292 = vunpack.c.h.b16 %v316
    %v1293 = vunpack.c.l.b16 %v317
    %v1294 = vunpack.c.h.b16 %v317
    %v1295 = vunpack.c.l.b16 %v318
    %v1296 = vunpack.c.h.b16 %v318
    %v1297 = vunpack.c.l.b16 %v319
    %v1298 = vunpack.c.h.b16 %v319
    %v1299 = vunpack.c.l.b16 %v320
    %v1300 = vunpack.c.h.b16 %v320
    %v1301 = vunpack.c.l.b16 %v321
    %v1302 = vunpack.c.h.b16 %v321
    %v1303 = vunpack.c.l.b16 %v322
    %v1304 = vunpack.c.h.b16 %v322
    %v1305 = vunpack.c.l.b16 %v323
    %v1306 = vunpack.c.h.b16 %v323
    %v1307 = vunpack.c.l.b16 %v324
    %v1308 = vunpack.c.h.b16 %v324
    %v1309 = vunpack.c.l.b16 %v325
    %v1310 = vunpack.c.h.b16 %v325
    %v1311 = vunpack.c.l.b16 %v326
    %v1312 = vunpack.c.h.b16 %v326
    %v1313 = vunpack.c.l.b16 %v327
    %v1314 = vunpack.c.h.b16 %v327
    %v1315 = vunpack.c.l.b16 %v328
    %v1316 = vunpack.c.h.b16 %v328
    %v1317 = vunpack.c.l.b16 %v329
    %v1318 = vunpack.c.h.b16 %v329
    %v1319 = vunpack.c.l.b16 %v330
    %v1320 = vunpack.c.h.b16 %v330
    %v1321 = vunpack.c.l.b16 %v331
    %v1322 = vunpack.c.h.b16 %v331
    %v1323 = vunpack.c.l.b16 %v332
    %v1324 = vunpack.c.h.b16 %v332
    %v1325 = vunpack.c.l.b16 %v333
    %v1326 = vunpack.c.h.b16 %v333
    %v1327 = vunpack.c.l.b16 %v334
    %v1328 = vunpack.c.h.b16 %v334
    %v1329 = vunpack.c.l.b16 %v335
    %v1330 = vunpack.c.h.b16 %v335
    %v1331 = vunpack.c.l.b16 %v336
    %v1332 = vunpack.c.h.b16 %v336
    %v1333 = vunpack.c.l.b16 %v337
    %v1334 = vunpack.c.h.b16 %v337
    %v1335 = vunpack.c.l.b16 %v338
    %v1336 = vunpack.c.h.b16 %v338
    %v1337 = vunpack.c.l.b16 %v339
    %v1338 = vunpack.c.h.b16 %v339
    %v1339 = vunpack.c.l.b16 %v340
    %v1340 = vunpack.c.h.b16 %v340
    %v1341 = vunpack.c.l.b16 %v341
    %v1342 = vunpack.c.h.b16 %v341
    %v1343 = vunpack.c.l.b16 %v342
    %v1344 = vunpack.c.h.b16 %v342
    %v1345 = vunpack.c.l.b16 %v343
    %v1346 = vunpack.c.h.b16 %v343
    %v1347 = vunpack.c.l.b16 %v344
    %v1348 = vunpack.c.h.b16 %v344
    %v1349 = vunpack.c.l.b16 %v345
    %v1350 = vunpack.c.h.b16 %v345
    %v1351 = vunpack.c.l.b16 %v346
    %v1352 = vunpack.c.h.b16 %v346
    %v1353 = vunpack.c.l.b16 %v347
    %v1354 = vunpack.c.h.b16 %v347
    %v1355 = vunpack.c.l.b16 %v348
    %v1356 = vunpack.c.h.b16 %v348
    %v1357 = vunpack.c.l.b16 %v349
    %v1358 = vunpack.c.h.b16 %v349
    %v1359 = vunpack.c.l.b16 %v350
    %v1360 = vunpack.c.h.b16 %v350
    %v1361 = vunpack.c.l.b16 %v351
    %v1362 = vunpack.c.h.b16 %v351
    %v1363 = vunpack.c.l.b16 %v352
    %v1364 = vunpack.c.h.b16 %v352
    %v1365 = vunpack.c.l.b16 %v353
    %v1366 = vunpack.c.h.b16 %v353
    %v1367 = vunpack.c.l.b16 %v354
    %v1368 = vunpack.c.h.b16 %v354
    %v1369 = vunpack.c.l.b16 %v355
    %v1370 = vunpack.c.h.b16 %v355
    %v1371 = vunpack.c.l.b16 %v356
    %v1372 = vunpack.c.h.b16 %v356
    %v1373 = vunpack.c.l.b16 %v357
    %v1374 = vunpack.c.h.b16 %v357
    %v1375 = vunpack.c.l.b16 %v358
    %v1376 = vunpack.c.h.b16 %v358
    %v1377 = vunpack.c.l.b16 %v359
    %v1378 = vunpack.c.h.b16 %v359
    %v1379 = vunpack.c.l.b16 %v360
    %v1380 = vunpack.c.h.b16 %v360
    %v1381 = vunpack.c.l.b16 %v361
    %v1382 = vunpack.c.h.b16 %v361
    %v1383 = vunpack.c.l.b16 %v362
    %v1384 = vunpack.c.h.b16 %v362
    %v1385 = vunpack.c.l.b16 %v363
    %v1386 = vunpack.c.h.b16 %v363
    %v1387 = vunpack.c.l.b16 %v364
    %v1388 = vunpack.c.h.b16 %v364
    %v1389 = vunpack.c.l.b16 %v365
    %v1390 = vunpack.c.h.b16 %v365
    %v1391 = vunpack.c.l.b16 %v366
    %v1392 = vunpack.c.h.b16 %v366
    %v1393 = vunpack.c.l.b16 %v367
    %v1394 = vunpack.c.h.b16 %v367
    %v1395 = vunpack.c.l.b16 %v368
    %v1396 = vunpack.c.h.b16 %v368
    %v1397 = vunpack.c.l.b16 %v369
    %v1398 = vunpack.c.h.b16 %v369
    %v1399 = vunpack.c.l.b16 %v370
    %v1400 = vunpack.c.h.b16 %v370
    %v1401 = vunpack.c.l.b16 %v371
    %v1402 = vunpack.c.h.b16 %v371
    %v1403 = vunpack.c.l.b16 %v372
    %v1404 = vunpack.c.h.b16 %v372
    %v1405 = vunpack.c.l.b16 %v373
    %v1406 = vunpack.c.h.b16 %v373
    %v1407 = vunpack.c.l.b16 %v374
    %v1408 = vunpack.c.h.b16 %v374
    %v1409 = vunpack.c.l.b16 %v375
    %v1410 = vunpack.c.h.b16 %v375
    %v1411 = vunpack.c.l.b16 %v376
    %v1412 = vunpack.c.h.b16 %v376
    %v1413 = vunpack.c.l.b16 %v377
    %v1414 = vunpack.c.h.b16 %v377
    %v1415 = vunpack.c.l.b16 %v378
    %v1416 = vunpack.c.h.b16 %v378
    %v1417 = vunpack.c.l.b16 %v379
    %v1418 = vunpack.c.h.b16 %v379
    %v1419 = vunpack.c.l.b16 %v380
    %v1420 = vunpack.c.h.b16 %v380
    %v1421 = vunpack.c.l.b16 %v381
    %v1422 = vunpack.c.h.b16 %v381
    %v1423 = vunpack.c.l.b16 %v382
    %v1424 = vunpack.c.h.b16 %v382
    %v1425 = vunpack.c.l.b16 %v383
    %v1426 = vunpack.c.h.b16 %v383
    %v1427 = vunpack.c.l.b16 %v384
    %v1428 = vunpack.c.h.b16 %v384
    %v1429 = vunpack.c.l.b16 %v385
    %v1430 = vunpack.c.h.b16 %v385
    %v1431 = vunpack.c.l.b16 %v386
    %v1432 = vunpack.c.h.b16 %v386
    %v1433 = vunpack.c.l.b16 %v387
    %v1434 = vunpack.c.h.b16 %v387
    %v1435 = vunpack.c.l.b16 %v388
    %v1436 = vunpack.c.h.b16 %v388
    %v1437 = vunpack.c.l.b16 %v389
    %v1438 = vunpack.c.h.b16 %v389
    %v1439 = vunpack.c.l.b16 %v390
    %v1440 = vunpack.c.h.b16 %v390
    %v1441 = vunpack.c.l.b16 %v391
    %v1442 = vunpack.c.h.b16 %v391
    %v1443 = vunpack.c.l.b16 %v392
    %v1444 = vunpack.c.h.b16 %v392
    %v1445 = vunpack.c.l.b16 %v393
    %v1446 = vunpack.c.h.b16 %v393
    %v1447 = vunpack.c.l.b16 %v394
    %v1448 = vunpack.c.h.b16 %v394
    %v1449 = vunpack.c.l.b16 %v395
    %v1450 = vunpack.c.h.b16 %v395
    %v1451 = vunpack.c.l.b16 %v396
    %v1452 = vunpack.c.h.b16 %v396
    %v1453 = vunpack.c.l.b16 %v397
    %v1454 = vunpack.c.h.b16 %v397
    %v1455 = vunpack.c.l.b16 %v398
    %v1456 = vunpack.c.h.b16 %v398
    %v1457 = vunpack.c.l.b16 %v399
    %v1458 = vunpack.c.h.b16 %v399
    %v1459 = vunpack.c.l.b16 %v400
    %v1460 = vunpack.c.h.b16 %v400
    %v1461 = vunpack.c.l.b16 %v401
    %v1462 = vunpack.c.h.b16 %v401
    %v1463 = vunpack.c.l.b16 %v402
    %v1464 = vunpack.c.h.b16 %v402
    %v1465 = vunpack.c.l.b16 %v403
    %v1466 = vunpack.c.h.b16 %v403
    %v1467 = vunpack.c.l.b16 %v404
    %v1468 = vunpack.c.h.b16 %v404
    %v1469 = vunpack.c.l.b16 %v405
    %v1470 = vunpack.c.h.b16 %v405
    %v1471 = vunpack.c.l.b16 %v406
    %v1472 = vunpack.c.h.b16 %v406
    %v1473 = vunpack.c.l.b16 %v407
    %v1474 = vunpack.c.h.b16 %v407
    %v1475 = vunpack.c.l.b16 %v408
    %v1476 = vunpack.c.h.b16 %v408
    %v1477 = vunpack.c.l.b16 %v409
    %v1478 = vunpack.c.h.b16 %v409
    %v1479 = vunpack.c.l.b16 %v410
    %v1480 = vunpack.c.h.b16 %v410
    %v1481 = vunpack.c.l.b16 %v411
    %v1482 = vunpack.c.h.b16 %v411
    %v1483 = vunpack.c.l.b16 %v412
    %v1484 = vunpack.c.h.b16 %v412
    %v1485 = vunpack.c.l.b16 %v413
    %v1486 = vunpack.c.h.b16 %v413
    %v1487 = vunpack.c.l.b16 %v414
    %v1488 = vunpack.c.h.b16 %v414
    %v1489 = vunpack.c.l.b16 %v415
    %v1490 = vunpack.c.h.b16 %v415
    %v1491 = vunpack.c.l.b16 %v416
    %v1492 = vunpack.c.h.b16 %v416
    %v1493 = vunpack.c.l.b16 %v417
    %v1494 = vunpack.c.h.b16 %v417
    %v1495 = vunpack.c.l.b16 %v418
    %v1496 = vunpack.c.h.b16 %v418
    %v1497 = vunpack.c.l.b16 %v419
    %v1498 = vunpack.c.h.b16 %v419
    %v1499 = vunpack.c.l.b16 %v420
    %v1500 = vunpack.c.h.b16 %v420
    %v1501 = vunpack.c.l.b16 %v421
    %v1502 = vunpack.c.h.b16 %v421
    %v1503 = vunpack.c.l.b16 %v422
    %v1504 = vunpack.c.h.b16 %v422
    %v1505 = vunpack.c.l.b16 %v423
    %v1506 = vunpack.c.h.b16 %v423
    %v1507 = vunpack.c.l.b16 %v424
    %v1508 = vunpack.c.h.b16 %v424
    %v1509 = vunpack.c.l.b16 %v425
    %v1510 = vunpack.c.h.b16 %v425
    %v1511 = vunpack.c.l.b16 %v426
    %v1512 = vunpack.c.h.b16 %v426
    %v1513 = vunpack.c.l.b16 %v427
    %v1514 = vunpack.c.h.b16 %v427
    %v1515 = vunpack.c.l.b16 %v428
    %v1516 = vunpack.c.h.b16 %v428
    %v1517 = vunpack.c.l.b16 %v429
    %v1518 = vunpack.c.h.b16 %v429
    %v1519 = vunpack.c.l.b16 %v430
    %v1520 = vunpack.c.h.b16 %v430
    %v1521 = vunpack.c.l.b16 %v431
    %v1522 = vunpack.c.h.b16 %v431
    %v1523 = vunpack.c.l.b16 %v432
    %v1524 = vunpack.c.h.b16 %v432
    %v1525 = vunpack.c.l.b16 %v433
    %v1526 = vunpack.c.h.b16 %v433
    %v1527 = vunpack.c.l.b16 %v434
    %v1528 = vunpack.c.h.b16 %v434
    %v1529 = vunpack.c.l.b16 %v435
    %v1530 = vunpack.c.h.b16 %v435
    %v1531 = vunpack.c.l.b16 %v436
    %v1532 = vunpack.c.h.b16 %v436
    %v1533 = vunpack.c.l.b16 %v437
    %v1534 = vunpack.c.h.b16 %v437
    %v1535 = vunpack.c.l.b16 %v438
    %v1536 = vunpack.c.h.b16 %v438
    %v1537 = vunpack.c.l.b16 %v439
    %v1538 = vunpack.c.h.b16 %v439
    %v1539 = vunpack.c.l.b16 %v440
    %v1540 = vunpack.c.h.b16 %v440
    %v1541 = vunpack.c.l.b16 %v441
    %v1542 = vunpack.c.h.b16 %v441
    %v1543 = vunpack.c.l.b16 %v442
    %v1544 = vunpack.c.h.b16 %v442
    %v1545 = vunpack.c.l.b16 %v443
    %v1546 = vunpack.c.h.b16 %v443
    %v1547 = vunpack.c.l.b16 %v444
    %v1548 = vunpack.c.h.b16 %v444
    %v1549 = vunpack.c.l.b16 %v445
    %v1550 = vunpack.c.h.b16 %v445
    %v1551 = vunpack.c.l.b16 %v446
    %v1552 = vunpack.c.h.b16 %v446
    %v1553 = vunpack.c.l.b16 %v447
    %v1554 = vunpack.c.h.b16 %v447
    %v1555 = vunpack.c.l.b16 %v448
    %v1556 = vunpack.c.h.b16 %v448
    %v1557 = vunpack.c.l.b16 %v449
    %v1558 = vunpack.c.h.b16 %v449
    %v1559 = vunpack.c.l.b16 %v450
    %v1560 = vunpack.c.h.b16 %v450
    %v1561 = vunpack.c.l.b16 %v451
    %v1562 = vunpack.c.h.b16 %v451
    %v1563 = vunpack.c.l.b16 %v452
    %v1564 = vunpack.c.h.b16 %v452
    %v1565 = vunpack.c.l.b16 %v453
    %v1566 = vunpack.c.h.b16 %v453
    %v1567 = vunpack.c.l.b16 %v454
    %v1568 = vunpack.c.h.b16 %v454
    %v1569 = vunpack.c.l.b16 %v455
    %v1570 = vunpack.c.h.b16 %v455
    %v1571 = vunpack.c.l.b16 %v456
    %v1572 = vunpack.c.h.b16 %v456
    %v1573 = vunpack.c.l.b16 %v457
    %v1574 = vunpack.c.h.b16 %v457
    %v1575 = vunpack.c.l.b16 %v458
    %v1576 = vunpack.c.h.b16 %v458
    %v1577 = vunpack.c.l.b16 %v459
    %v1578 = vunpack.c.h.b16 %v459
    %v1579 = vunpack.c.l.b16 %v460
    %v1580 = vunpack.c.h.b16 %v460
    %v1581 = vunpack.c.l.b16 %v461
    %v1582 = vunpack.c.h.b16 %v461
    %v1583 = vunpack.c.l.b16 %v462
    %v1584 = vunpack.c.h.b16 %v462
    %v1585 = vunpack.c.l.b16 %v463
    %v1586 = vunpack.c.h.b16 %v463
    %v1587 = vunpack.c.l.b16 %v464
    %v1588 = vunpack.c.h.b16 %v464
    %v1589 = vunpack.c.l.b16 %v465
    %v1590 = vunpack.c.h.b16 %v465
    %v1591 = vunpack.c.l.b16 %v466
    %v1592 = vunpack.c.h.b16 %v466
    %v1593 = vunpack.c.l.b16 %v467
    %v1594 = vunpack.c.h.b16 %v467
    %v1595 = vunpack.c.l.b16 %v468
    %v1596 = vunpack.c.h.b16 %v468
    %v1597 = vunpack.c.l.b16 %v469
    %v1598 = vunpack.c.h.b16 %v469
    %v1599 = vunpack.c.l.b16 %v470
    %v1600 = vunpack.c.h.b16 %v470
    %v1601 = vunpack.c.l.b16 %v471
    %v1602 = vunpack.c.h.b16 %v471
    %v1603 = vunpack.c.l.b16 %v472
    %v1604 = vunpack.c.h.b16 %v472
    %v1605 = vunpack.c.l.b16 %v473
    %v1606 = vunpack.c.h.b16 %v473
    %v1607 = vunpack.c.l.b16 %v474
    %v1608 = vunpack.c.h.b16 %v474
    %v1609 = vunpack.c.l.b16 %v475
    %v1610 = vunpack.c.h.b16 %v475
    %v1611 = vunpack.c.l.b16 %v476
    %v1612 = vunpack.c.h.b16 %v476
    %v1613 = vunpack.c.l.b16 %v477
    %v1614 = vunpack.c.h.b16 %v477
    %v1615 = vunpack.c.l.b16 %v478
    %v1616 = vunpack.c.h.b16 %v478
    %v1617 = vunpack.c.l.b16 %v479
    %v1618 = vunpack.c.h.b16 %v479
    %v1619 = vunpack.c.l.b16 %v480
    %v1620 = vunpack.c.h.b16 %v480
    %v1621 = vunpack.c.l.b16 %v481
    %v1622 = vunpack.c.h.b16 %v481
    %v1623 = vunpack.c.l.b16 %v482
    %v1624 = vunpack.c.h.b16 %v482
    %v1625 = vunpack.c.l.b16 %v483
    %v1626 = vunpack.c.h.b16 %v483
    %v1627 = vunpack.c.l.b16 %v484
    %v1628 = vunpack.c.h.b16 %v484
    %v1629 = vunpack.c.l.b16 %v485
    %v1630 = vunpack.c.h.b16 %v485
    %v1631 = vunpack.c.l.b16 %v486
    %v1632 = vunpack.c.h.b16 %v486
    %v1633 = vunpack.c.l.b16 %v487
    %v1634 = vunpack.c.h.b16 %v487
    %v1635 = vunpack.c.l.b16 %v488
    %v1636 = vunpack.c.h.b16 %v488
    %v1637 = vunpack.c.l.b16 %v489
    %v1638 = vunpack.c.h.b16 %v489
    %v1639 = vunpack.c.l.b16 %v490
    %v1640 = vunpack.c.h.b16 %v490
    %v1641 = vunpack.c.l.b16 %v491
    %v1642 = vunpack.c.h.b16 %v491
    %v1643 = vunpack.c.l.b16 %v492
    %v1644 = vunpack.c.h.b16 %v492
    %v1645 = vunpack.c.l.b16 %v493
    %v1646 = vunpack.c.h.b16 %v493
    %v1647 = vunpack.c.l.b16 %v494
    %v1648 = vunpack.c.h.b16 %v494
    %v1649 = vunpack.c.l.b16 %v495
    %v1650 = vunpack.c.h.b16 %v495
    %v1651 = vunpack.c.l.b16 %v496
    %v1652 = vunpack.c.h.b16 %v496
    %v1653 = vunpack.c.l.b16 %v497
    %v1654 = vunpack.c.h.b16 %v497
    %v1655 = vunpack.c.l.b16 %v498
    %v1656 = vunpack.c.h.b16 %v498
    %v1657 = vunpack.c.l.b16 %v499
    %v1658 = vunpack.c.h.b16 %v499
    %v1659 = vunpack.c.l.b16 %v500
    %v1660 = vunpack.c.h.b16 %v500
    %v1661 = vunpack.c.l.b16 %v501
    %v1662 = vunpack.c.h.b16 %v501
    %v1663 = vunpack.c.l.b16 %v502
    %v1664 = vunpack.c.h.b16 %v502
    %v1665 = vunpack.c.l.b16 %v503
    %v1666 = vunpack.c.h.b16 %v503
    %v1667 = vunpack.c.l.b16 %v504
    %v1668 = vunpack.c.h.b16 %v504
    %v1669 = vunpack.c.l.b16 %v505
    %v1670 = vunpack.c.h.b16 %v505
    %v1671 = vunpack.c.l.b16 %v506
    %v1672 = vunpack.c.h.b16 %v506
    %v1673 = vunpack.c.l.b16 %v507
    %v1674 = vunpack.c.h.b16 %v507
    %v1675 = vunpack.c.l.b16 %v508
    %v1676 = vunpack.c.h.b16 %v508
    %v1677 = vunpack.c.l.b16 %v509
    %v1678 = vunpack.c.h.b16 %v509
    %v1679 = vunpack.c.l.b16 %v510
    %v1680 = vunpack.c.h.b16 %v510
    %v1681 = vunpack.c.l.b16 %v511
    %v1682 = vunpack.c.h.b16 %v511
    %v1683 = vunpack.c.l.b16 %v512
    %v1684 = vunpack.c.h.b16 %v512
    %v1685 = vunpack.c.l.b16 %v513
    %v1686 = vunpack.c.h.b16 %v513
    %v1687 = vunpack.c.l.b16 %v514
    %v1688 = vunpack.c.h.b16 %v514
    %v1689 = vunpack.c.l.b16 %v515
    %v1690 = vunpack.c.h.b16 %v515
    %v1691 = vunpack.c.l.b16 %v516
    %v1692 = vunpack.c.h.b16 %v516
    %v1693 = vunpack.c.l.b16 %v517
    %v1694 = vunpack.c.h.b16 %v517
    %v1695 = vunpack.c.l.b16 %v518
    %v1696 = vunpack.c.h.b16 %v518
    %v1697 = vunpack.c.l.b16 %v519
    %v1698 = vunpack.c.h.b16 %v519
    %v1699 = vunpack.c.l.b16 %v520
    %v1700 = vunpack.c.h.b16 %v520
    %v1701 = vunpack.c.l.b16 %v521
    %v1702 = vunpack.c.h.b16 %v521
    %v1703 = vunpack.c.l.b16 %v522
    %v1704 = vunpack.c.h.b16 %v522
    %v1705 = vunpack.c.l.b16 %v523
    %v1706 = vunpack.c.h.b16 %v523
    %v1707 = vunpack.c.l.b16 %v524
    %v1708 = vunpack.c.h.b16 %v524
    %v1709 = vunpack.c.l.b16 %v525
    %v1710 = vunpack.c.h.b16 %v525
    %v1711 = vunpack.c.l.b16 %v526
    %v1712 = vunpack.c.h.b16 %v526
    %v1713 = vunpack.c.l.b16 %v527
    %v1714 = vunpack.c.h.b16 %v527
    %v1715 = vunpack.c.l.b16 %v528
    %v1716 = vunpack.c.h.b16 %v528
    %v1717 = vunpack.c.l.b16 %v529
    %v1718 = vunpack.c.h.b16 %v529
    %v1719 = vunpack.c.l.b16 %v530
    %v1720 = vunpack.c.h.b16 %v530
    %v1721 = vunpack.c.l.b16 %v531
    %v1722 = vunpack.c.h.b16 %v531
    %v1723 = vunpack.c.l.b16 %v532
    %v1724 = vunpack.c.h.b16 %v532
    %v1725 = vunpack.c.l.b16 %v533
    %v1726 = vunpack.c.h.b16 %v533
    %v1727 = vunpack.c.l.b16 %v534
    %v1728 = vunpack.c.h.b16 %v534
    %v1729 = vunpack.c.l.b16 %v535
    %v1730 = vunpack.c.h.b16 %v535
    %v1731 = vunpack.c.l.b16 %v536
    %v1732 = vunpack.c.h.b16 %v536
    %v1733 = vunpack.c.l.b16 %v537
    %v1734 = vunpack.c.h.b16 %v537
    %v1735 = vunpack.c.l.b16 %v538
    %v1736 = vunpack.c.h.b16 %v538
    %v1737 = vunpack.c.l.b16 %v539
    %v1738 = vunpack.c.h.b16 %v539
    %v1739 = vunpack.c.l.b16 %v540
    %v1740 = vunpack.c.h.b16 %v540
    %v1741 = vunpack.c.l.b16 %v541
    %v1742 = vunpack.c.h.b16 %v541
    %v1743 = vunpack.c.l.b16 %v542
    %v1744 = vunpack.c.h.b16 %v542
    %v1745 = vunpack.c.l.b16 %v543
    %v1746 = vunpack.c.h.b16 %v543
    %v1747 = vunpack.c.l.b16 %v544
    %v1748 = vunpack.c.h.b16 %v544
    %v1749 = vunpack.c.l.b16 %v545
    %v1750 = vunpack.c.h.b16 %v545
    %v1751 = vunpack.c.l.b16 %v546
    %v1752 = vunpack.c.h.b16 %v546
    %v1753 = vunpack.c.l.b16 %v547
    %v1754 = vunpack.c.h.b16 %v547
    %v1755 = vunpack.c.l.b16 %v548
    %v1756 = vunpack.c.h.b16 %v548
    %v1757 = vunpack.c.l.b16 %v549
    %v1758 = vunpack.c.h.b16 %v549
    %v1759 = vunpack.c.l.b16 %v550
    %v1760 = vunpack.c.h.b16 %v550
    %v1761 = vunpack.c.l.b16 %v551
    %v1762 = vunpack.c.h.b16 %v551
    %v1763 = vunpack.c.l.b16 %v552
    %v1764 = vunpack.c.h.b16 %v552
    %v1765 = vunpack.c.l.b16 %v553
    %v1766 = vunpack.c.h.b16 %v553
    %v1767 = vunpack.c.l.b16 %v554
    %v1768 = vunpack.c.h.b16 %v554
    %v1769 = vunpack.c.l.b16 %v555
    %v1770 = vunpack.c.h.b16 %v555
    %v1771 = vunpack.c.l.b16 %v556
    %v1772 = vunpack.c.h.b16 %v556
    %v1773 = vpack.c.b16 %v1009, %v1005
    %v1774 = vpack.c.b16 %v1010, %v1006
    %v1775 = vpack.c.b16 %v1011, %v1007
    %v1776 = vpack.c.b16 %v1012, %v1008
    %v1777 = vpack.c.b16 %v1017, %v1013
    %v1778 = vpack.c.b16 %v1018, %v1014
    %v1779 = vpack.c.b16 %v1019, %v1015
    %v1780 = vpack.c.b16 %v1020, %v1016
    %v1781 = vpack.c.b16 %v1025, %v1021
    %v1782 = vpack.c.b16 %v1026, %v1022
    %v1783 = vpack.c.b16 %v1027, %v1023
    %v1784 = vpack.c.b16 %v1028, %v1024
    %v1785 = vpack.c.b16 %v1033, %v1029
    %v1786 = vpack.c.b16 %v1034, %v1030
    %v1787 = vpack.c.b16 %v1035, %v1031
    %v1788 = vpack.c.b16 %v1036, %v1032
    %v1789 = vpack.c.b16 %v1041, %v1037
    %v1790 = vpack.c.b16 %v1042, %v1038
    %v1791 = vpack.c.b16 %v1043, %v1039
    %v1792 = vpack.c.b16 %v1044, %v1040
    %v1793 = vpack.c.b16 %v1049, %v1045
    %v1794 = vpack.c.b16 %v1050, %v1046
    %v1795 = vpack.c.b16 %v1051, %v1047
    %v1796 = vpack.c.b16 %v1052, %v1048
    %v1797 = vpack.c.b16 %v1057, %v1053
    %v1798 = vpack.c.b16 %v1058, %v1054
    %v1799 = vpack.c.b16 %v1059, %v1055
    %v1800 = vpack.c.b16 %v1060, %v1056
    %v1801 = vpack.c.b16 %v1065, %v1061
    %v1802 = vpack.c.b16 %v1066, %v1062
    %v1803 = vpack.c.b16 %v1067, %v1063
    %v1804 = vpack.c.b16 %v1068, %v1064
    %v1805 = vpack.c.b16 %v1073, %v1069
    %v1806 = vpack.c.b16 %v1074, %v1070
    %v1807 = vpack.c.b16 %v1075, %v1071
    %v1808 = vpack.c.b16 %v1076, %v1072
    %v1809 = vpack.c.b16 %v1081, %v1077
    %v1810 = vpack.c.b16 %v1082, %v1078
    %v1811 = vpack.c.b16 %v1083, %v1079
    %v1812 = vpack.c.b16 %v1084, %v1080
    %v1813 = vpack.c.b16 %v1089, %v1085
    %v1814 = vpack.c.b16 %v1090, %v1086
    %v1815 = vpack.c.b16 %v1091, %v1087
    %v1816 = vpack.c.b16 %v1092, %v1088
    %v1817 = vpack.c.b16 %v1097, %v1093
    %v1818 = vpack.c.b16 %v1098, %v1094
    %v1819 = vpack.c.b16 %v1099, %v1095
    %v1820 = vpack.c.b16 %v1100, %v1096
    %v1821 = vpack.c.b16 %v1105, %v1101
    %v1822 = vpack.c.b16 %v1106, %v1102
    %v1823 = vpack.c.b16 %v1107, %v1103
    %v1824 = vpack.c.b16 %v1108, %v1104
    %v1825 = vpack.c.b16 %v1113, %v1109
    %v1826 = vpack.c.b16 %v1114, %v1110
    %v1827 = vpack.c.b16 %v1115, %v1111
    %v1828 = vpack.c.b16 %v1116, %v1112
    %v1829 = vpack.c.b16 %v1121, %v1117
    %v1830 = vpack.c.b16 %v1122, %v1118
    %v1831 = vpack.c.b16 %v1123, %v1119
    %v1832 = vpack.c.b16 %v1124, %v1120
    %v1833 = vpack.c.b16 %v1129, %v1125
    %v1834 = vpack.c.b16 %v1130, %v1126
    %v1835 = vpack.c.b16 %v1131, %v1127
    %v1836 = vpack.c.b16 %v1132, %v1128
    %v1837 = vpack.c.b16 %v1137, %v1133
    %v1838 = vpack.c.b16 %v1138, %v1134
    %v1839 = vpack.c.b16 %v1139, %v1135
    %v1840 = vpack.c.b16 %v1140, %v1136
    %v1841 = vpack.c.b16 %v1145, %v1141
    %v1842 = vpack.c.b16 %v1146, %v1142
    %v1843 = vpack.c.b16 %v1147, %v1143
    %v1844 = vpack.c.b16 %v1148, %v1144
    %v1845 = vpack.c.b16 %v1153, %v1149
    %v1846 = vpack.c.b16 %v1154, %v1150
    %v1847 = vpack.c.b16 %v1155, %v1151
    %v1848 = vpack.c.b16 %v1156, %v1152
    %v1849 = vpack.c.b16 %v1161, %v1157
    %v1850 = vpack.c.b16 %v1162, %v1158
    %v1851 = vpack.c.b16 %v1163, %v1159
    %v1852 = vpack.c.b16 %v1164, %v1160
    %v1853 = vpack.c.b16 %v1169, %v1165
    %v1854 = vpack.c.b16 %v1170, %v1166
    %v1855 = vpack.c.b16 %v1171, %v1167
    %v1856 = vpack.c.b16 %v1172, %v1168
    %v1857 = vpack.c.b16 %v1177, %v1173
    %v1858 = vpack.c.b16 %v1178, %v1174
    %v1859 = vpack.c.b16 %v1179, %v1175
    %v1860 = vpack.c.b16 %v1180, %v1176
    %v1861 = vpack.c.b16 %v1185, %v1181
    %v1862 = vpack.c.b16 %v1186, %v1182
    %v1863 = vpack.c.b16 %v1187, %v1183
    %v1864 = vpack.c.b16 %v1188, %v1184
    %v1865 = vpack.c.b16 %v1193, %v1189
    %v1866 = vpack.c.b16 %v1194, %v1190
    %v1867 = vpack.c.b16 %v1195, %v1191
    %v1868 = vpack.c.b16 %v1196, %v1192
    %v1869 = vpack.c.b16 %v1201, %v1197
    %v1870 = vpack.c.b16 %v1202, %v1198
    %v1871 = vpack.c.b16 %v1203, %v1199
    %v1872 = vpack.c.b16 %v1204, %v1200
    %v1873 = vpack.c.b16 %v1209, %v1205
    %v1874 = vpack.c.b16 %v1210, %v1206
    %v1875 = vpack.c.b16 %v1211, %v1207
    %v1876 = vpack.c.b16 %v1212, %v1208
    %v1877 = vpack.c.b16 %v1217, %v1213
    %v1878 = vpack.c.b16 %v1218, %v1214
    %v1879 = vpack.c.b16 %v1219, %v1215
    %v1880 = vpack.c.b16 %v1220, %v1216
    %v1881 = vpack.c.b16 %v1225, %v1221
    %v1882 = vpack.c.b16 %v1226, %v1222
    %v1883 = vpack.c.b16 %v1227, %v1223
    %v1884 = vpack.c.b16 %v1228, %v1224
    %v1885 = vpack.c.b16 %v1233, %v1229
    %v1886 = vpack.c.b16 %v1234, %v1230
    %v1887 = vpack.c.b16 %v1235, %v1231
    %v1888 = vpack.c.b16 %v1236, %v1232
    %v1889 = vpack.c.b16 %v1241, %v1237
    %v1890 = vpack.c.b16 %v1242, %v1238
    %v1891 = vpack.c.b16 %v1243, %v1239
    %v1892 = vpack.c.b16 %v1244, %v1240
    %v1893 = vpack.c.b16 %v1249, %v1245
    %v1894 = vpack.c.b16 %v1250, %v1246
    %v1895 = vpack.c.b16 %v1251, %v1247
    %v1896 = vpack.c.b16 %v1252, %v1248
    %v1897 = vpack.c.b16 %v1257, %v1253
    %v1898 = vpack.c.b16 %v1258, %v1254
    %v1899 = vpack.c.b16 %v1259, %v1255
    %v1900 = vpack.c.b16 %v1260, %v1256
    %v1901 = vpack.c.b16 %v1265, %v1261
    %v1902 = vpack.c.b16 %v1266, %v1262
    %v1903 = vpack.c.b16 %v1267, %v1263
    %v1904 = vpack.c.b16 %v1268, %v1264
    %v1905 = vpack.c.b16 %v1273, %v1269
    %v1906 = vpack.c.b16 %v1274, %v1270
    %v1907 = vpack.c.b16 %v1275, %v1271
    %v1908 = vpack.c.b16 %v1276, %v1272
    %v1909 = vpack.c.b16 %v1281, %v1277
    %v1910 = vpack.c.b16 %v1282, %v1278
    %v1911 = vpack.c.b16 %v1283, %v1279
    %v1912 = vpack.c.b16 %v1284, %v1280
    %v1913 = vpack.c.b16 %v1289, %v1285
    %v1914 = vpack.c.b16 %v1290, %v1286
    %v1915 = vpack.c.b16 %v1291, %v1287
    %v1916 = vpack.c.b16 %v1292, %v1288
    %v1917 = vpack.c.b16 %v1297, %v1293
    %v1918 = vpack.c.b16 %v1298, %v1294
    %v1919 = vpack.c.b16 %v1299, %v1295
    %v1920 = vpack.c.b16 %v1300, %v1296
    %v1921 = vpack.c.b16 %v1305, %v1301
    %v1922 = vpack.c.b16 %v1306, %v1302
    %v1923 = vpack.c.b16 %v1307, %v1303
    %v1924 = vpack.c.b16 %v1308, %v1304
    %v1925 = vpack.c.b16 %v1313, %v1309
    %v1926 = vpack.c.b16 %v1314, %v1310
    %v1927 = vpack.c.b16 %v1315, %v1311
    %v1928 = vpack.c.b16 %v1316, %v1312
    %v1929 = vpack.c.b16 %v1321, %v1317
    %v1930 = vpack.c.b16 %v1322, %v1318
    %v1931 = vpack.c.b16 %v1323, %v1319
    %v1932 = vpack.c.b16 %v1324, %v1320
    %v1933 = vpack.c.b16 %v1329, %v1325
    %v1934 = vpack.c.b16 %v1330, %v1326
    %v1935 = vpack.c.b16 %v1331, %v1327
    %v1936 = vpack.c.b16 %v1332, %v1328
    %v1937 = vpack.c.b16 %v1337, %v1333
    %v1938 = vpack.c.b16 %v1338, %v1334
    %v1939 = vpack.c.b16 %v1339, %v1335
    %v1940 = vpack.c.b16 %v1340, %v1336
    %v1941 = vpack.c.b16 %v1345, %v1341
    %v1942 = vpack.c.b16 %v1346, %v1342
    %v1943 = vpack.c.b16 %v1347, %v1343
    %v1944 = vpack.c.b16 %v1348, %v1344
    %v1945 = vpack.c.b16 %v1353, %v1349
    %v1946 = vpack.c.b16 %v1354, %v1350
    %v1947 = vpack.c.b16 %v1355, %v1351
    %v1948 = vpack.c.b16 %v1356, %v1352
    %v1949 = vpack.c.b16 %v1361, %v1357
    %v1950 = vpack.c.b16 %v1362, %v1358
    %v1951 = vpack.c.b16 %v1363, %v1359
    %v1952 = vpack.c.b16 %v1364, %v1360
    %v1953 = vpack.c.b16 %v1369, %v1365
    %v1954 = vpack.c.b16 %v1370, %v1366
    %v1955 = vpack.c.b16 %v1371, %v1367
    %v1956 = vpack.c.b16 %v1372, %v1368
    %v1957 = vpack.c.b16 %v1377, %v1373
    %v1958 = vpack.c.b16 %v1378, %v1374
    %v1959 = vpack.c.b16 %v1379, %v1375
    %v1960 = vpack.c.b16 %v1380, %v1376
    %v1961 = vpack.c.b16 %v1385, %v1381
    %v1962 = vpack.c.b16 %v1386, %v1382
    %v1963 = vpack.c.b16 %v1387, %v1383
    %v1964 = vpack.c.b16 %v1388, %v1384
    %v1965 = vpack.c.b16 %v1393, %v1389
    %v1966 = vpack.c.b16 %v1394, %v1390
    %v1967 = vpack.c.b16 %v1395, %v1391
    %v1968 = vpack.c.b16 %v1396, %v1392
    %v1969 = vpack.c.b16 %v1401, %v1397
    %v1970 = vpack.c.b16 %v1402, %v1398
    %v1971 = vpack.c.b16 %v1403, %v1399
    %v1972 = vpack.c.b16 %v1404, %v1400
    %v1973 = vpack.c.b16 %v1409, %v1405
    %v1974 = vpack.c.b16 %v1410, %v1406
    %v1975 = vpack.c.b16 %v1411, %v1407
    %v1976 = vpack.c.b16 %v1412, %v1408
    %v1977 = vpack.c.b16 %v1417, %v1413
    %v1978 = vpack.c.b16 %v1418, %v1414
    %v1979 = vpack.c.b16 %v1419, %v1415
    %v1980 = vpack.c.b16 %v1420, %v1416
    %v1981 = vpack.c.b16 %v1425, %v1421
    %v1982 = vpack.c.b16 %v1426, %v1422
    %v1983 = vpack.c.b16 %v1427, %v1423
    %v1984 = vpack.c.b16 %v1428, %v1424
    %v1985 = vpack.c.b16 %v1433, %v1429
    %v1986 = vpack.c.b16 %v1434, %v1430
    %v1987 = vpack.c.b16 %v1435, %v1431
    %v1988 = vpack.c.b16 %v1436, %v1432
    %v1989 = vpack.c.b16 %v1441, %v1437
    %v1990 = vpack.c.b16 %v1442, %v1438
    %v1991 = vpack.c.b16 %v1443, %v1439
    %v1992 = vpack.c.b16 %v1444, %v1440
    %v1993 = vpack.c.b16 %v1449, %v1445
    %v1994 = vpack.c.b16 %v1450, %v1446
    %v1995 = vpack.c.b16 %v1451, %v1447
    %v1996 = vpack.c.b16 %v1452, %v1448
    %v1997 = vpack.c.b16 %v1457, %v1453
    %v1998 = vpack.c.b16 %v1458, %v1454
    %v1999 = vpack.c.b16 %v1459, %v1455
    %v2000 = vpack.c.b16 %v1460, %v1456
    %v2001 = vpack.c.b16 %v1465, %v1461
    %v2002 = vpack.c.b16 %v1466, %v1462
    %v2003 = vpack.c.b16 %v1467, %v1463
    %v2004 = vpack.c.b16 %v1468, %v1464
    %v2005 = vpack.c.b16 %v1473, %v1469
    %v2006 = vpack.c.b16 %v1474, %v1470
    %v2007 = vpack.c.b16 %v1475, %v1471
    %v2008 = vpack.c.b16 %v1476, %v1472
    %v2009 = vpack.c.b16 %v1481, %v1477
    %v2010 = vpack.c.b16 %v1482, %v1478
    %v2011 = vpack.c.b16 %v1483, %v1479
    %v2012 = vpack.c.b16 %v1484, %v1480
    %v2013 = vpack.c.b16 %v1489, %v1485
    %v2014 = vpack.c.b16 %v1490, %v1486
    %v2015 = vpack.c.b16 %v1491, %v1487
    %v2016 = vpack.c.b16 %v1492, %v1488
    %v2017 = vpack.c.b16 %v1497, %v1493
    %v2018 = vpack.c.b16 %v1498, %v1494
    %v2019 = vpack.c.b16 %v1499, %v1495
    %v2020 = vpack.c.b16 %v1500, %v1496
    %v2021 = vpack.c.b16 %v1505, %v1501
    %v2022 = vpack.c.b16 %v1506, %v1502
    %v2023 = vpack.c.b16 %v1507, %v1503
    %v2024 = vpack.c.b16 %v1508, %v1504
    %v2025 = vpack.c.b16 %v1513, %v1509
    %v2026 = vpack.c.b16 %v1514, %v1510
    %v2027 = vpack.c.b16 %v1515, %v1511
    %v2028 = vpack.c.b16 %v1516, %v1512
    %v2029 = vpack.c.b16 %v1521, %v1517
    %v2030 = vpack.c.b16 %v1522, %v1518
    %v2031 = vpack.c.b16 %v1523, %v1519
    %v2032 = vpack.c.b16 %v1524, %v1520
    %v2033 = vpack.c.b16 %v1529, %v1525
    %v2034 = vpack.c.b16 %v1530, %v1526
    %v2035 = vpack.c.b16 %v1531, %v1527
    %v2036 = vpack.c.b16 %v1532, %v1528
    %v2037 = vpack.c.b16 %v1537, %v1533
    %v2038 = vpack.c.b16 %v1538, %v1534
    %v2039 = vpack.c.b16 %v1539, %v1535
    %v2040 = vpack.c.b16 %v1540, %v1536
    %v2041 = vpack.c.b16 %v1545, %v1541
    %v2042 = vpack.c.b16 %v1546, %v1542
    %v2043 = vpack.c.b16 %v1547, %v1543
    %v2044 = vpack.c.b16 %v1548, %v1544
    %v2045 = vpack.c.b16 %v1553, %v1549
    %v2046 = vpack.c.b16 %v1554, %v1550
    %v2047 = vpack.c.b16 %v1555, %v1551
    %v2048 = vpack.c.b16 %v1556, %v1552
    %v2049 = vpack.c.b16 %v1561, %v1557
    %v2050 = vpack.c.b16 %v1562, %v1558
    %v2051 = vpack.c.b16 %v1563, %v1559
    %v2052 = vpack.c.b16 %v1564, %v1560
    %v2053 = vpack.c.b16 %v1569, %v1565
    %v2054 = vpack.c.b16 %v1570, %v1566
    %v2055 = vpack.c.b16 %v1571, %v1567
    %v2056 = vpack.c.b16 %v1572, %v1568
    %v2057 = vpack.c.b16 %v1577, %v1573
    %v2058 = vpack.c.b16 %v1578, %v1574
    %v2059 = vpack.c.b16 %v1579, %v1575
    %v2060 = vpack.c.b16 %v1580, %v1576
    %v2061 = vpack.c.b16 %v1585, %v1581
    %v2062 = vpack.c.b16 %v1586, %v1582
    %v2063 = vpack.c.b16 %v1587, %v1583
    %v2064 = vpack.c.b16 %v1588, %v1584
    %v2065 = vpack.c.b16 %v1593, %v1589
    %v2066 = vpack.c.b16 %v1594, %v1590
    %v2067 = vpack.c.b16 %v1595, %v1591
    %v2068 = vpack.c.b16 %v1596, %v1592
    %v2069 = vpack.c.b16 %v1601, %v1597
    %v2070 = vpack.c.b16 %v1602, %v1598
    %v2071 = vpack.c.b16 %v1603, %v1599
    %v2072 = vpack.c.b16 %v1604, %v1600
    %v2073 = vpack.c.b16 %v1609, %v1605
    %v2074 = vpack.c.b16 %v1610, %v1606
    %v2075 = vpack.c.b16 %v1611, %v1607
    %v2076 = vpack.c.b16 %v1612, %v1608
    %v2077 = vpack.c.b16 %v1617, %v1613
    %v2078 = vpack.c.b16 %v1618, %v1614
    %v2079 = vpack.c.b16 %v1619, %v1615
    %v2080 = vpack.c.b16 %v1620, %v1616
    %v2081 = vpack.c.b16 %v1625, %v1621
    %v2082 = vpack.c.b16 %v1626, %v1622
    %v2083 = vpack.c.b16 %v1627, %v1623
    %v2084 = vpack.c.b16 %v1628, %v1624
    %v2085 = vpack.c.b16 %v1633, %v1629
    %v2086 = vpack.c.b16 %v1634, %v1630
    %v2087 = vpack.c.b16 %v1635, %v1631
    %v2088 = vpack.c.b16 %v1636, %v1632
    %v2089 = vpack.c.b16 %v1641, %v1637
    %v2090 = vpack.c.b16 %v1642, %v1638
    %v2091 = vpack.c.b16 %v1643, %v1639
    %v2092 = vpack.c.b16 %v1644, %v1640
    %v2093 = vpack.c.b16 %v1649, %v1645
    %v2094 = vpack.c.b16 %v1650, %v1646
    %v2095 = vpack.c.b16 %v1651, %v1647
    %v2096 = vpack.c.b16 %v1652, %v1648
    %v2097 = vpack.c.b16 %v1657, %v1653
    %v2098 = vpack.c.b16 %v1658, %v1654
    %v2099 = vpack.c.b16 %v1659, %v1655
    %v2100 = vpack.c.b16 %v1660, %v1656
    %v2101 = vpack.c.b16 %v1665, %v1661
    %v2102 = vpack.c.b16 %v1666, %v1662
    %v2103 = vpack.c.b16 %v1667, %v1663
    %v2104 = vpack.c.b16 %v1668, %v1664
    %v2105 = vpack.c.b16 %v1673, %v1669
    %v2106 = vpack.c.b16 %v1674, %v1670
    %v2107 = vpack.c.b16 %v1675, %v1671
    %v2108 = vpack.c.b16 %v1676, %v1672
    %v2109 = vpack.c.b16 %v1681, %v1677
    %v2110 = vpack.c.b16 %v1682, %v1678
    %v2111 = vpack.c.b16 %v1683, %v1679
    %v2112 = vpack.c.b16 %v1684, %v1680
    %v2113 = vpack.c.b16 %v1689, %v1685
    %v2114 = vpack.c.b16 %v1690, %v1686
    %v2115 = vpack.c.b16 %v1691, %v1687
    %v2116 = vpack.c.b16 %v1692, %v1688
    %v2117 = vpack.c.b16 %v1697, %v1693
    %v2118 = vpack.c.b16 %v1698, %v1694
    %v2119 = vpack.c.b16 %v1699, %v1695
    %v2120 = vpack.c.b16 %v1700, %v1696
    %v2121 = vpack.c.b16 %v1705, %v1701
    %v2122 = vpack.c.b16 %v1706, %v1702
    %v2123 = vpack.c.b16 %v1707, %v1703
    %v2124 = vpack.c.b16 %v1708, %v1704
    %v2125 = vpack.c.b16 %v1713, %v1709
    %v2126 = vpack.c.b16 %v1714, %v1710
    %v2127 = vpack.c.b16 %v1715, %v1711
    %v2128 = vpack.c.b16 %v1716, %v1712
    %v2129 = vpack.c.b16 %v1721, %v1717
    %v2130 = vpack.c.b16 %v1722, %v1718
    %v2131 = vpack.c.b16 %v1723, %v1719
    %v2132 = vpack.c.b16 %v1724, %v1720
    %v2133 = vpack.c.b16 %v1729, %v1725
    %v2134 = vpack.c.b16 %v1730, %v1726
    %v2135 = vpack.c.b16 %v1731, %v1727
    %v2136 = vpack.c.b16 %v1732, %v1728
    %v2137 = vpack.c.b16 %v1737, %v1733
    %v2138 = vpack.c.b16 %v1738, %v1734
    %v2139 = vpack.c.b16 %v1739, %v1735
    %v2140 = vpack.c.b16 %v1740, %v1736
    %v2141 = vpack.c.b16 %v1745, %v1741
    %v2142 = vpack.c.b16 %v1746, %v1742
    %v2143 = vpack.c.b16 %v1747, %v1743
    %v2144 = vpack.c.b16 %v1748, %v1744
    %v2145 = vpack.c.b16 %v1753, %v1749
    %v2146 = vpack.c.b16 %v1754, %v1750
    %v2147 = vpack.c.b16 %v1755, %v1751
    %v2148 = vpack.c.b16 %v1756, %v1752
    %v2149 = vpack.c.b16 %v1761, %v1757
    %v2150 = vpack.c.b16 %v1762, %v1758
    %v2151 = vpack.c.b16 %v1763, %v1759
    %v2152 = vpack.c.b16 %v1764, %v1760
    %v2153 = vpack.c.b16 %v1769, %v1765
    %v2154 = vpack.c.b16 %v1770, %v1766
    %v2155 = vpack.c.b16 %v1771, %v1767
    %v2156 = vpack.c.b16 %v1772, %v1768
    %2541 = vmatprep.subr.bf16.mxu0 %v1774
    %2542 = vmatpush1.bf16.msra.mxu0 %v1773
    %2543 = vmatprep.subr.bf16.mxu0 %v1778
    %2544 = vmatpush1.bf16.msra.mxu0 %v1777
    %2545 = vmatprep.subr.bf16.mxu0 %v1782
    %2546 = vmatpush1.bf16.msra.mxu0 %v1781
    %2547 = vmatprep.subr.bf16.mxu0 %v1786
    %2548 = vmatpush1.bf16.msra.mxu0 %v1785
    %2549 = vmatprep.subr.bf16.mxu0 %v1790
    %2550 = vmatpush1.bf16.msra.mxu0 %v1789
    %2551 = vmatprep.subr.bf16.mxu0 %v1794
    %2552 = vmatpush1.bf16.msra.mxu0 %v1793
    %2553 = vmatprep.subr.bf16.mxu0 %v1798
    %2554 = vmatpush1.bf16.msra.mxu0 %v1797
    %2555 = vmatprep.subr.bf16.mxu0 %v1802
    %2556 = vmatpush1.bf16.msra.mxu0 %v1801
    %2557 = vmatprep.subr.bf16.mxu0 %v1806
    %2558 = vmatpush1.bf16.msra.mxu0 %v1805
    %2559 = vmatprep.subr.bf16.mxu0 %v1810
    %2560 = vmatpush1.bf16.msra.mxu0 %v1809
    %2561 = vmatprep.subr.bf16.mxu0 %v1814
    %2562 = vmatpush1.bf16.msra.mxu0 %v1813
    %2563 = vmatprep.subr.bf16.mxu0 %v1818
    %2564 = vmatpush1.bf16.msra.mxu0 %v1817
    %2565 = vmatprep.subr.bf16.mxu0 %v1822
    %2566 = vmatpush1.bf16.msra.mxu0 %v1821
    %2567 = vmatprep.subr.bf16.mxu0 %v1826
    %2568 = vmatpush1.bf16.msra.mxu0 %v1825
    %2569 = vmatprep.subr.bf16.mxu0 %v1830
    %2570 = vmatpush1.bf16.msra.mxu0 %v1829
    %2571 = vmatprep.subr.bf16.mxu0 %v1834
    %2572 = vmatpush1.bf16.msra.mxu0 %v1833
    %2573 = vmatprep.mubr.bf16.mxu0 %v598
    %2574 = vmatmul.mubr.bf16.gmra.mrb[0].mxu0 %v597
    %v2575 = vpop.f32.mrb[0].mxu0
    %v2576 = vadd.f32 %v562, %v2575
    %v2577 = vpop.f32.mrb[0].mxu0
    %v2578 = vadd.f32 %v566, %v2577
    %v2579 = vpop.f32.mrb[0].mxu0
    %v2580 = vpop.f32.mrb[0].mxu0
    %2581 = vdwg.mxu0
    %2582 = vmatprep.subr.bf16.mxu0 %v1838
    %2583 = vmatpush1.bf16.msra.mxu0 %v1837
    %2584 = vmatprep.subr.bf16.mxu0 %v1842
    %2585 = vmatpush1.bf16.msra.mxu0 %v1841
    %2586 = vmatprep.subr.bf16.mxu0 %v1846
    %2587 = vmatpush1.bf16.msra.mxu0 %v1845
    %2588 = vmatprep.subr.bf16.mxu0 %v1850
    %2589 = vmatpush1.bf16.msra.mxu0 %v1849
    %2590 = vmatprep.subr.bf16.mxu0 %v1854
    %2591 = vmatpush1.bf16.msra.mxu0 %v1853
    %2592 = vmatprep.subr.bf16.mxu0 %v1858
    %2593 = vmatpush1.bf16.msra.mxu0 %v1857
    %2594 = vmatprep.subr.bf16.mxu0 %v1862
    %2595 = vmatpush1.bf16.msra.mxu0 %v1861
    %2596 = vmatprep.subr.bf16.mxu0 %v1866
    %2597 = vmatpush1.bf16.msra.mxu0 %v1865
    %2598 = vmatprep.subr.bf16.mxu0 %v1870
    %2599 = vmatpush1.bf16.msra.mxu0 %v1869
    %2600 = vmatprep.subr.bf16.mxu0 %v1874
    %2601 = vmatpush1.bf16.msra.mxu0 %v1873
    %2602 = vmatprep.subr.bf16.mxu0 %v1878
    %2603 = vmatpush1.bf16.msra.mxu0 %v1877
    %2604 = vmatprep.subr.bf16.mxu0 %v1882
    %2605 = vmatpush1.bf16.msra.mxu0 %v1881
    %2606 = vmatprep.subr.bf16.mxu0 %v1886
    %2607 = vmatpush1.bf16.msra.mxu0 %v1885
    %2608 = vmatprep.subr.bf16.mxu0 %v1890
    %2609 = vmatpush1.bf16.msra.mxu0 %v1889
    %2610 = vmatprep.subr.bf16.mxu0 %v1894
    %2611 = vmatpush1.bf16.msra.mxu0 %v1893
    %2612 = vmatprep.subr.bf16.mxu0 %v1898
    %2613 = vmatpush1.bf16.msra.mxu0 %v1897
    %2614 = vmatprep.mubr.bf16.mxu0 %v600
    %2615 = vmatmul.mubr.bf16.gmra.mrb[0].mxu0 %v599
    %v2616 = vpop.f32.mrb[0].mxu0
    %v2617 = vadd.f32 %v2576, %v2616
    %v2618 = vpop.f32.mrb[0].mxu0
    %v2619 = vadd.f32 %v2578, %v2618
    %v2620 = vpop.f32.mrb[0].mxu0
    %v2621 = vpop.f32.mrb[0].mxu0
    %2622 = vdwg.mxu0
    %2623 = vmatprep.subr.bf16.mxu0 %v1902
    %2624 = vmatpush1.bf16.msra.mxu0 %v1901
    %2625 = vmatprep.subr.bf16.mxu0 %v1906
    %2626 = vmatpush1.bf16.msra.mxu0 %v1905
    %2627 = vmatprep.subr.bf16.mxu0 %v1910
    %2628 = vmatpush1.bf16.msra.mxu0 %v1909
    %2629 = vmatprep.subr.bf16.mxu0 %v1914
    %2630 = vmatpush1.bf16.msra.mxu0 %v1913
    %2631 = vmatprep.subr.bf16.mxu0 %v1918
    %2632 = vmatpush1.bf16.msra.mxu0 %v1917
    %2633 = vmatprep.subr.bf16.mxu0 %v1922
    %2634 = vmatpush1.bf16.msra.mxu0 %v1921
    %2635 = vmatprep.subr.bf16.mxu0 %v1926
    %2636 = vmatpush1.bf16.msra.mxu0 %v1925
    %2637 = vmatprep.subr.bf16.mxu0 %v1930
    %2638 = vmatpush1.bf16.msra.mxu0 %v1929
    %2639 = vmatprep.subr.bf16.mxu0 %v1934
    %2640 = vmatpush1.bf16.msra.mxu0 %v1933
    %2641 = vmatprep.subr.bf16.mxu0 %v1938
    %2642 = vmatpush1.bf16.msra.mxu0 %v1937
    %2643 = vmatprep.subr.bf16.mxu0 %v1942
    %2644 = vmatpush1.bf16.msra.mxu0 %v1941
    %2645 = vmatprep.subr.bf16.mxu0 %v1946
    %2646 = vmatpush1.bf16.msra.mxu0 %v1945
    %2647 = vmatprep.subr.bf16.mxu0 %v1950
    %2648 = vmatpush1.bf16.msra.mxu0 %v1949
    %2649 = vmatprep.subr.bf16.mxu0 %v1954
    %2650 = vmatpush1.bf16.msra.mxu0 %v1953
    %2651 = vmatprep.subr.bf16.mxu0 %v1958
    %2652 = vmatpush1.bf16.msra.mxu0 %v1957
    %2653 = vmatprep.subr.bf16.mxu0 %v1962
    %2654 = vmatpush1.bf16.msra.mxu0 %v1961
    %2655 = vmatprep.mubr.bf16.mxu0 %v602
    %2656 = vmatmul.mubr.bf16.gmra.mrb[0].mxu0 %v601
    %v2657 = vpop.f32.mrb[0].mxu0
    %v2658 = vadd.f32 %v2617, %v2657
    %v2659 = vpop.f32.mrb[0].mxu0
    %v2660 = vadd.f32 %v2619, %v2659
    %v2661 = vpop.f32.mrb[0].mxu0
    %v2662 = vpop.f32.mrb[0].mxu0
    %2663 = vdwg.mxu0
    %2664 = vmatprep.subr.bf16.mxu0 %v1966
    %2665 = vmatpush1.bf16.msra.mxu0 %v1965
    %2666 = vmatprep.subr.bf16.mxu0 %v1970
    %2667 = vmatpush1.bf16.msra.mxu0 %v1969
    %2668 = vmatprep.subr.bf16.mxu0 %v1974
    %2669 = vmatpush1.bf16.msra.mxu0 %v1973
    %2670 = vmatprep.subr.bf16.mxu0 %v1978
    %2671 = vmatpush1.bf16.msra.mxu0 %v1977
    %2672 = vmatprep.subr.bf16.mxu0 %v1982
    %2673 = vmatpush1.bf16.msra.mxu0 %v1981
    %2674 = vmatprep.subr.bf16.mxu0 %v1986
    %2675 = vmatpush1.bf16.msra.mxu0 %v1985
    %2676 = vmatprep.subr.bf16.mxu0 %v1990
    %2677 = vmatpush1.bf16.msra.mxu0 %v1989
    %2678 = vmatprep.subr.bf16.mxu0 %v1994
    %2679 = vmatpush1.bf16.msra.mxu0 %v1993
    %2680 = vmatprep.subr.bf16.mxu0 %v1998
    %2681 = vmatpush1.bf16.msra.mxu0 %v1997
    %2682 = vmatprep.subr.bf16.mxu0 %v2002
    %2683 = vmatpush1.bf16.msra.mxu0 %v2001
    %2684 = vmatprep.subr.bf16.mxu0 %v2006
    %2685 = vmatpush1.bf16.msra.mxu0 %v2005
    %2686 = vmatprep.subr.bf16.mxu0 %v2010
    %2687 = vmatpush1.bf16.msra.mxu0 %v2009
    %2688 = vmatprep.subr.bf16.mxu0 %v2014
    %2689 = vmatpush1.bf16.msra.mxu0 %v2013
    %2690 = vmatprep.subr.bf16.mxu0 %v2018
    %2691 = vmatpush1.bf16.msra.mxu0 %v2017
    %2692 = vmatprep.subr.bf16.mxu0 %v2022
    %2693 = vmatpush1.bf16.msra.mxu0 %v2021
    %2694 = vmatprep.subr.bf16.mxu0 %v2026
    %2695 = vmatpush1.bf16.msra.mxu0 %v2025
    %2696 = vmatprep.mubr.bf16.mxu0 %v604
    %2697 = vmatmul.mubr.bf16.gmra.mrb[0].mxu0 %v603
    %v2698 = vpop.f32.mrb[0].mxu0
    %v2699 = vadd.f32 %v2658, %v2698
    %v2700 = vpop.f32.mrb[0].mxu0
    %v2701 = vadd.f32 %v2660, %v2700
    %v2702 = vpop.f32.mrb[0].mxu0
    %v2703 = vpop.f32.mrb[0].mxu0
    %2704 = vdwg.mxu0
    %2705 = vmatprep.subr.bf16.mxu0 %v2030
    %2706 = vmatpush1.bf16.msra.mxu0 %v2029
    %2707 = vmatprep.subr.bf16.mxu0 %v2034
    %2708 = vmatpush1.bf16.msra.mxu0 %v2033
    %2709 = vmatprep.subr.bf16.mxu0 %v2038
    %2710 = vmatpush1.bf16.msra.mxu0 %v2037
    %2711 = vmatprep.subr.bf16.mxu0 %v2042
    %2712 = vmatpush1.bf16.msra.mxu0 %v2041
    %2713 = vmatprep.subr.bf16.mxu0 %v2046
    %2714 = vmatpush1.bf16.msra.mxu0 %v2045
    %2715 = vmatprep.subr.bf16.mxu0 %v2050
    %2716 = vmatpush1.bf16.msra.mxu0 %v2049
    %2717 = vmatprep.subr.bf16.mxu0 %v2054
    %2718 = vmatpush1.bf16.msra.mxu0 %v2053
    %2719 = vmatprep.subr.bf16.mxu0 %v2058
    %2720 = vmatpush1.bf16.msra.mxu0 %v2057
    %2721 = vmatprep.subr.bf16.mxu0 %v2062
    %2722 = vmatpush1.bf16.msra.mxu0 %v2061
    %2723 = vmatprep.subr.bf16.mxu0 %v2066
    %2724 = vmatpush1.bf16.msra.mxu0 %v2065
    %2725 = vmatprep.subr.bf16.mxu0 %v2070
    %2726 = vmatpush1.bf16.msra.mxu0 %v2069
    %2727 = vmatprep.subr.bf16.mxu0 %v2074
    %2728 = vmatpush1.bf16.msra.mxu0 %v2073
    %2729 = vmatprep.subr.bf16.mxu0 %v2078
    %2730 = vmatpush1.bf16.msra.mxu0 %v2077
    %2731 = vmatprep.subr.bf16.mxu0 %v2082
    %2732 = vmatpush1.bf16.msra.mxu0 %v2081
    %2733 = vmatprep.subr.bf16.mxu0 %v2086
    %2734 = vmatpush1.bf16.msra.mxu0 %v2085
    %2735 = vmatprep.subr.bf16.mxu0 %v2090
    %2736 = vmatpush1.bf16.msra.mxu0 %v2089
    %2737 = vmatprep.mubr.bf16.mxu0 %v606
    %2738 = vmatmul.mubr.bf16.gmra.mrb[0].mxu0 %v605
    %v2739 = vpop.f32.mrb[0].mxu0
    %v2740 = vadd.f32 %v2699, %v2739
    %v2741 = vpop.f32.mrb[0].mxu0
    %v2742 = vadd.f32 %v2701, %v2741
    %v2743 = vpop.f32.mrb[0].mxu0
    %v2744 = vpop.f32.mrb[0].mxu0
    %2745 = vdwg.mxu0
    %2746 = vmatprep.subr.bf16.mxu0 %v2094
    %2747 = vmatpush1.bf16.msra.mxu0 %v2093
    %2748 = vmatprep.subr.bf16.mxu0 %v2098
    %2749 = vmatpush1.bf16.msra.mxu0 %v2097
    %2750 = vmatprep.subr.bf16.mxu0 %v2102
    %2751 = vmatpush1.bf16.msra.mxu0 %v2101
    %2752 = vmatprep.subr.bf16.mxu0 %v2106
    %2753 = vmatpush1.bf16.msra.mxu0 %v2105
    %2754 = vmatprep.subr.bf16.mxu0 %v2110
    %2755 = vmatpush1.bf16.msra.mxu0 %v2109
    %2756 = vmatprep.subr.bf16.mxu0 %v2114
    %2757 = vmatpush1.bf16.msra.mxu0 %v2113
    %2758 = vmatprep.subr.bf16.mxu0 %v2118
    %2759 = vmatpush1.bf16.msra.mxu0 %v2117
    %2760 = vmatprep.subr.bf16.mxu0 %v2122
    %2761 = vmatpush1.bf16.msra.mxu0 %v2121
    %2762 = vmatprep.subr.bf16.mxu0 %v2126
    %2763 = vmatpush1.bf16.msra.mxu0 %v2125
    %2764 = vmatprep.subr.bf16.mxu0 %v2130
    %2765 = vmatpush1.bf16.msra.mxu0 %v2129
    %2766 = vmatprep.subr.bf16.mxu0 %v2134
    %2767 = vmatpush1.bf16.msra.mxu0 %v2133
    %2768 = vmatprep.subr.bf16.mxu0 %v2138
    %2769 = vmatpush1.bf16.msra.mxu0 %v2137
    %2770 = vmatprep.subr.bf16.mxu0 %v2142
    %2771 = vmatpush1.bf16.msra.mxu0 %v2141
    %2772 = vmatprep.subr.bf16.mxu0 %v2146
    %2773 = vmatpush1.bf16.msra.mxu0 %v2145
    %2774 = vmatprep.subr.bf16.mxu0 %v2150
    %2775 = vmatpush1.bf16.msra.mxu0 %v2149
    %2776 = vmatprep.subr.bf16.mxu0 %v2154
    %2777 = vmatpush1.bf16.msra.mxu0 %v2153
    %2778 = vmatprep.mubr.bf16.mxu0 %v608
    %2779 = vmatmul.mubr.bf16.gmra.mrb[0].mxu0 %v607
    %v2780 = vpop.f32.mrb[0].mxu0
    %v2781 = vadd.f32 %v2740, %v2780
    %v2782 = vpop.f32.mrb[0].mxu0
    %v2783 = vadd.f32 %v2742, %v2782
    %v2784 = vpop.f32.mrb[0].mxu0
    %v2785 = vpop.f32.mrb[0].mxu0
    %2786 = vdwg.mxu0
    %2787 = vmatprep.subr.bf16.mxu0 %v1776
    %2788 = vmatpush1.bf16.msra.mxu0 %v1775
    %2789 = vmatprep.subr.bf16.mxu0 %v1780
    %2790 = vmatpush1.bf16.msra.mxu0 %v1779
    %2791 = vmatprep.subr.bf16.mxu0 %v1784
    %2792 = vmatpush1.bf16.msra.mxu0 %v1783
    %2793 = vmatprep.subr.bf16.mxu0 %v1788
    %2794 = vmatpush1.bf16.msra.mxu0 %v1787
    %2795 = vmatprep.subr.bf16.mxu0 %v1792
    %2796 = vmatpush1.bf16.msra.mxu0 %v1791
    %2797 = vmatprep.subr.bf16.mxu0 %v1796
    %2798 = vmatpush1.bf16.msra.mxu0 %v1795
    %2799 = vmatprep.subr.bf16.mxu0 %v1800
    %2800 = vmatpush1.bf16.msra.mxu0 %v1799
    %2801 = vmatprep.subr.bf16.mxu0 %v1804
    %2802 = vmatpush1.bf16.msra.mxu0 %v1803
    %2803 = vmatprep.subr.bf16.mxu0 %v1808
    %2804 = vmatpush1.bf16.msra.mxu0 %v1807
    %2805 = vmatprep.subr.bf16.mxu0 %v1812
    %2806 = vmatpush1.bf16.msra.mxu0 %v1811
    %2807 = vmatprep.subr.bf16.mxu0 %v1816
    %2808 = vmatpush1.bf16.msra.mxu0 %v1815
    %2809 = vmatprep.subr.bf16.mxu0 %v1820
    %2810 = vmatpush1.bf16.msra.mxu0 %v1819
    %2811 = vmatprep.subr.bf16.mxu0 %v1824
    %2812 = vmatpush1.bf16.msra.mxu0 %v1823
    %2813 = vmatprep.subr.bf16.mxu0 %v1828
    %2814 = vmatpush1.bf16.msra.mxu0 %v1827
    %2815 = vmatprep.subr.bf16.mxu0 %v1832
    %2816 = vmatpush1.bf16.msra.mxu0 %v1831
    %2817 = vmatprep.subr.bf16.mxu0 %v1836
    %2818 = vmatpush1.bf16.msra.mxu0 %v1835
    %2819 = vmatprep.mubr.bf16.mxu0 %v598
    %2820 = vmatmul.mubr.bf16.gmra.mrb[0].mxu0 %v597
    %v2821 = vpop.f32.mrb[0].mxu0
    %v2822 = vadd.f32 %v570, %v2821
    %v2823 = vpop.f32.mrb[0].mxu0
    %v2824 = vadd.f32 %v574, %v2823
    %v2825 = vpop.f32.mrb[0].mxu0
    %v2826 = vpop.f32.mrb[0].mxu0
    %2827 = vdwg.mxu0
    %2828 = vmatprep.subr.bf16.mxu0 %v1840
    %2829 = vmatpush1.bf16.msra.mxu0 %v1839
    %2830 = vmatprep.subr.bf16.mxu0 %v1844
    %2831 = vmatpush1.bf16.msra.mxu0 %v1843
    %2832 = vmatprep.subr.bf16.mxu0 %v1848
    %2833 = vmatpush1.bf16.msra.mxu0 %v1847
    %2834 = vmatprep.subr.bf16.mxu0 %v1852
    %2835 = vmatpush1.bf16.msra.mxu0 %v1851
    %2836 = vmatprep.subr.bf16.mxu0 %v1856
    %2837 = vmatpush1.bf16.msra.mxu0 %v1855
    %2838 = vmatprep.subr.bf16.mxu0 %v1860
    %2839 = vmatpush1.bf16.msra.mxu0 %v1859
    %2840 = vmatprep.subr.bf16.mxu0 %v1864
    %2841 = vmatpush1.bf16.msra.mxu0 %v1863
    %2842 = vmatprep.subr.bf16.mxu0 %v1868
    %2843 = vmatpush1.bf16.msra.mxu0 %v1867
    %2844 = vmatprep.subr.bf16.mxu0 %v1872
    %2845 = vmatpush1.bf16.msra.mxu0 %v1871
    %2846 = vmatprep.subr.bf16.mxu0 %v1876
    %2847 = vmatpush1.bf16.msra.mxu0 %v1875
    %2848 = vmatprep.subr.bf16.mxu0 %v1880
    %2849 = vmatpush1.bf16.msra.mxu0 %v1879
    %2850 = vmatprep.subr.bf16.mxu0 %v1884
    %2851 = vmatpush1.bf16.msra.mxu0 %v1883
    %2852 = vmatprep.subr.bf16.mxu0 %v1888
    %2853 = vmatpush1.bf16.msra.mxu0 %v1887
    %2854 = vmatprep.subr.bf16.mxu0 %v1892
    %2855 = vmatpush1.bf16.msra.mxu0 %v1891
    %2856 = vmatprep.subr.bf16.mxu0 %v1896
    %2857 = vmatpush1.bf16.msra.mxu0 %v1895
    %2858 = vmatprep.subr.bf16.mxu0 %v1900
    %2859 = vmatpush1.bf16.msra.mxu0 %v1899
    %2860 = vmatprep.mubr.bf16.mxu0 %v600
    %2861 = vmatmul.mubr.bf16.gmra.mrb[0].mxu0 %v599
    %v2862 = vpop.f32.mrb[0].mxu0
    %v2863 = vadd.f32 %v2822, %v2862
    %v2864 = vpop.f32.mrb[0].mxu0
    %v2865 = vadd.f32 %v2824, %v2864
    %v2866 = vpop.f32.mrb[0].mxu0
    %v2867 = vpop.f32.mrb[0].mxu0
    %2868 = vdwg.mxu0
    %2869 = vmatprep.subr.bf16.mxu0 %v1904
    %2870 = vmatpush1.bf16.msra.mxu0 %v1903
    %2871 = vmatprep.subr.bf16.mxu0 %v1908
    %2872 = vmatpush1.bf16.msra.mxu0 %v1907
    %2873 = vmatprep.subr.bf16.mxu0 %v1912
    %2874 = vmatpush1.bf16.msra.mxu0 %v1911
    %2875 = vmatprep.subr.bf16.mxu0 %v1916
    %2876 = vmatpush1.bf16.msra.mxu0 %v1915
    %2877 = vmatprep.subr.bf16.mxu0 %v1920
    %2878 = vmatpush1.bf16.msra.mxu0 %v1919
    %2879 = vmatprep.subr.bf16.mxu0 %v1924
    %2880 = vmatpush1.bf16.msra.mxu0 %v1923
    %2881 = vmatprep.subr.bf16.mxu0 %v1928
    %2882 = vmatpush1.bf16.msra.mxu0 %v1927
    %2883 = vmatprep.subr.bf16.mxu0 %v1932
    %2884 = vmatpush1.bf16.msra.mxu0 %v1931
    %2885 = vmatprep.subr.bf16.mxu0 %v1936
    %2886 = vmatpush1.bf16.msra.mxu0 %v1935
    %2887 = vmatprep.subr.bf16.mxu0 %v1940
    %2888 = vmatpush1.bf16.msra.mxu0 %v1939
    %2889 = vmatprep.subr.bf16.mxu0 %v1944
    %2890 = vmatpush1.bf16.msra.mxu0 %v1943
    %2891 = vmatprep.subr.bf16.mxu0 %v1948
    %2892 = vmatpush1.bf16.msra.mxu0 %v1947
    %2893 = vmatprep.subr.bf16.mxu0 %v1952
    %2894 = vmatpush1.bf16.msra.mxu0 %v1951
    %2895 = vmatprep.subr.bf16.mxu0 %v1956
    %2896 = vmatpush1.bf16.msra.mxu0 %v1955
    %2897 = vmatprep.subr.bf16.mxu0 %v1960
    %2898 = vmatpush1.bf16.msra.mxu0 %v1959
    %2899 = vmatprep.subr.bf16.mxu0 %v1964
    %2900 = vmatpush1.bf16.msra.mxu0 %v1963
    %2901 = vmatprep.mubr.bf16.mxu0 %v602
    %2902 = vmatmul.mubr.bf16.gmra.mrb[0].mxu0 %v601
    %v2903 = vpop.f32.mrb[0].mxu0
    %v2904 = vadd.f32 %v2863, %v2903
    %v2905 = vpop.f32.mrb[0].mxu0
    %v2906 = vadd.f32 %v2865, %v2905
    %v2907 = vpop.f32.mrb[0].mxu0
    %v2908 = vpop.f32.mrb[0].mxu0
    %2909 = vdwg.mxu0
    %2910 = vmatprep.subr.bf16.mxu0 %v1968
    %2911 = vmatpush1.bf16.msra.mxu0 %v1967
    %2912 = vmatprep.subr.bf16.mxu0 %v1972
    %2913 = vmatpush1.bf16.msra.mxu0 %v1971
    %2914 = vmatprep.subr.bf16.mxu0 %v1976
    %2915 = vmatpush1.bf16.msra.mxu0 %v1975
    %2916 = vmatprep.subr.bf16.mxu0 %v1980
    %2917 = vmatpush1.bf16.msra.mxu0 %v1979
    %2918 = vmatprep.subr.bf16.mxu0 %v1984
    %2919 = vmatpush1.bf16.msra.mxu0 %v1983
    %2920 = vmatprep.subr.bf16.mxu0 %v1988
    %2921 = vmatpush1.bf16.msra.mxu0 %v1987
    %2922 = vmatprep.subr.bf16.mxu0 %v1992
    %2923 = vmatpush1.bf16.msra.mxu0 %v1991
    %2924 = vmatprep.subr.bf16.mxu0 %v1996
    %2925 = vmatpush1.bf16.msra.mxu0 %v1995
    %2926 = vmatprep.subr.bf16.mxu0 %v2000
    %2927 = vmatpush1.bf16.msra.mxu0 %v1999
    %2928 = vmatprep.subr.bf16.mxu0 %v2004
    %2929 = vmatpush1.bf16.msra.mxu0 %v2003
    %2930 = vmatprep.subr.bf16.mxu0 %v2008
    %2931 = vmatpush1.bf16.msra.mxu0 %v2007
    %2932 = vmatprep.subr.bf16.mxu0 %v2012
    %2933 = vmatpush1.bf16.msra.mxu0 %v2011
    %2934 = vmatprep.subr.bf16.mxu0 %v2016
    %2935 = vmatpush1.bf16.msra.mxu0 %v2015
    %2936 = vmatprep.subr.bf16.mxu0 %v2020
    %2937 = vmatpush1.bf16.msra.mxu0 %v2019
    %2938 = vmatprep.subr.bf16.mxu0 %v2024
    %2939 = vmatpush1.bf16.msra.mxu0 %v2023
    %2940 = vmatprep.subr.bf16.mxu0 %v2028
    %2941 = vmatpush1.bf16.msra.mxu0 %v2027
    %2942 = vmatprep.mubr.bf16.mxu0 %v604
    %2943 = vmatmul.mubr.bf16.gmra.mrb[0].mxu0 %v603
    %v2944 = vpop.f32.mrb[0].mxu0
    %v2945 = vadd.f32 %v2904, %v2944
    %v2946 = vpop.f32.mrb[0].mxu0
    %v2947 = vadd.f32 %v2906, %v2946
    %v2948 = vpop.f32.mrb[0].mxu0
    %v2949 = vpop.f32.mrb[0].mxu0
    %2950 = vdwg.mxu0
    %2951 = vmatprep.subr.bf16.mxu0 %v2032
    %2952 = vmatpush1.bf16.msra.mxu0 %v2031
    %2953 = vmatprep.subr.bf16.mxu0 %v2036
    %2954 = vmatpush1.bf16.msra.mxu0 %v2035
    %2955 = vmatprep.subr.bf16.mxu0 %v2040
    %2956 = vmatpush1.bf16.msra.mxu0 %v2039
    %2957 = vmatprep.subr.bf16.mxu0 %v2044
    %2958 = vmatpush1.bf16.msra.mxu0 %v2043
    %2959 = vmatprep.subr.bf16.mxu0 %v2048
    %2960 = vmatpush1.bf16.msra.mxu0 %v2047
    %2961 = vmatprep.subr.bf16.mxu0 %v2052
    %2962 = vmatpush1.bf16.msra.mxu0 %v2051
    %2963 = vmatprep.subr.bf16.mxu0 %v2056
    %2964 = vmatpush1.bf16.msra.mxu0 %v2055
    %2965 = vmatprep.subr.bf16.mxu0 %v2060
    %2966 = vmatpush1.bf16.msra.mxu0 %v2059
    %2967 = vmatprep.subr.bf16.mxu0 %v2064
    %2968 = vmatpush1.bf16.msra.mxu0 %v2063
    %2969 = vmatprep.subr.bf16.mxu0 %v2068
    %2970 = vmatpush1.bf16.msra.mxu0 %v2067
    %2971 = vmatprep.subr.bf16.mxu0 %v2072
    %2972 = vmatpush1.bf16.msra.mxu0 %v2071
    %2973 = vmatprep.subr.bf16.mxu0 %v2076
    %2974 = vmatpush1.bf16.msra.mxu0 %v2075
    %2975 = vmatprep.subr.bf16.mxu0 %v2080
    %2976 = vmatpush1.bf16.msra.mxu0 %v2079
    %2977 = vmatprep.subr.bf16.mxu0 %v2084
    %2978 = vmatpush1.bf16.msra.mxu0 %v2083
    %2979 = vmatprep.subr.bf16.mxu0 %v2088
    %2980 = vmatpush1.bf16.msra.mxu0 %v2087
    %2981 = vmatprep.subr.bf16.mxu0 %v2092
    %2982 = vmatpush1.bf16.msra.mxu0 %v2091
    %2983 = vmatprep.mubr.bf16.mxu0 %v606
    %2984 = vmatmul.mubr.bf16.gmra.mrb[0].mxu0 %v605
    %v2985 = vpop.f32.mrb[0].mxu0
    %v2986 = vadd.f32 %v2945, %v2985
    %v2987 = vpop.f32.mrb[0].mxu0
    %v2988 = vadd.f32 %v2947, %v2987
    %v2989 = vpop.f32.mrb[0].mxu0
    %v2990 = vpop.f32.mrb[0].mxu0
    %2991 = vdwg.mxu0
    %2992 = vmatprep.subr.bf16.mxu0 %v2096
    %2993 = vmatpush1.bf16.msra.mxu0 %v2095
    %2994 = vmatprep.subr.bf16.mxu0 %v2100
    %2995 = vmatpush1.bf16.msra.mxu0 %v2099
    %2996 = vmatprep.subr.bf16.mxu0 %v2104
    %2997 = vmatpush1.bf16.msra.mxu0 %v2103
    %2998 = vmatprep.subr.bf16.mxu0 %v2108
    %2999 = vmatpush1.bf16.msra.mxu0 %v2107
    %3000 = vmatprep.subr.bf16.mxu0 %v2112
    %3001 = vmatpush1.bf16.msra.mxu0 %v2111
    %3002 = vmatprep.subr.bf16.mxu0 %v2116
    %3003 = vmatpush1.bf16.msra.mxu0 %v2115
    %3004 = vmatprep.subr.bf16.mxu0 %v2120
    %3005 = vmatpush1.bf16.msra.mxu0 %v2119
    %3006 = vmatprep.subr.bf16.mxu0 %v2124
    %3007 = vmatpush1.bf16.msra.mxu0 %v2123
    %3008 = vmatprep.subr.bf16.mxu0 %v2128
    %3009 = vmatpush1.bf16.msra.mxu0 %v2127
    %3010 = vmatprep.subr.bf16.mxu0 %v2132
    %3011 = vmatpush1.bf16.msra.mxu0 %v2131
    %3012 = vmatprep.subr.bf16.mxu0 %v2136
    %3013 = vmatpush1.bf16.msra.mxu0 %v2135
    %3014 = vmatprep.subr.bf16.mxu0 %v2140
    %3015 = vmatpush1.bf16.msra.mxu0 %v2139
    %3016 = vmatprep.subr.bf16.mxu0 %v2144
    %3017 = vmatpush1.bf16.msra.mxu0 %v2143
    %3018 = vmatprep.subr.bf16.mxu0 %v2148
    %3019 = vmatpush1.bf16.msra.mxu0 %v2147
    %3020 = vmatprep.subr.bf16.mxu0 %v2152
    %3021 = vmatpush1.bf16.msra.mxu0 %v2151
    %3022 = vmatprep.subr.bf16.mxu0 %v2156
    %3023 = vmatpush1.bf16.msra.mxu0 %v2155
    %3024 = vmatprep.mubr.bf16.mxu0 %v608
    %3025 = vmatmul.mubr.bf16.gmra.mrb[0].mxu0 %v607
    %v3026 = vpop.f32.mrb[0].mxu0
    %v3027 = vadd.f32 %v2986, %v3026
    %v3028 = vpop.f32.mrb[0].mxu0
    %v3029 = vadd.f32 %v2988, %v3028
    %v3030 = vpop.f32.mrb[0].mxu0
    %v3031 = vpop.f32.mrb[0].mxu0
    %3032 = vdwg.mxu0
    %v3033 = vmax.f32 %v2781, 0.0
    %v3034 = vmax.f32 %v2783, 0.0
    %v3035 = vmax.f32 %v3027, 0.0
    %v3036 = vmax.f32 %v3029, 0.0
    %v3037 = vpack.c.bf16 %v3033, %v3033
    %v3038 = vpack.c.bf16 %v3034, %v3034
    %v3039 = vpack.c.bf16 %v3035, %v3035
    %v3040 = vpack.c.bf16 %v3036, %v3036
    %v3041 = vld [vmem:[#allocation11] sm:$0xff]
    %v3042 = vld [vmem:[#allocation11 + $0x8] sm:$0xff]
    %v3043 = vld [vmem:[#allocation11 + $0x10] sm:$0xff]
    %v3044 = vld [vmem:[#allocation11 + $0x18] sm:$0xff]
    %v3045 = vld [vmem:[#allocation11 + $0x20] sm:$0xff]
    %v3046 = vld [vmem:[#allocation11 + $0x28] sm:$0xff]
    %v3047 = vld [vmem:[#allocation11 + $0x30] sm:$0xff]
    %v3048 = vld [vmem:[#allocation11 + $0x38] sm:$0xff]
    %v3049 = vld [vmem:[#allocation11 + $0x40] sm:$0xff]
    %v3050 = vld [vmem:[#allocation11 + $0x48] sm:$0xff]
    %v3051 = vld [vmem:[#allocation11 + $0x50] sm:$0xff]
    %v3052 = vld [vmem:[#allocation11 + $0x58] sm:$0xff]
    %v3053 = vld [vmem:[#allocation11 + $0x60] sm:$0xff]
    %v3054 = vld [vmem:[#allocation11 + $0x68] sm:$0xff]
    %v3055 = vld [vmem:[#allocation11 + $0x70] sm:$0xff]
    %v3056 = vld [vmem:[#allocation11 + $0x78] sm:$0xff]
    %v3057 = vld [vmem:[#allocation11 + $0x80] sm:$0xff]
    %v3058 = vld [vmem:[#allocation11 + $0x88] sm:$0xff]
    %v3059 = vld [vmem:[#allocation11 + $0x90] sm:$0xff]
    %v3060 = vld [vmem:[#allocation11 + $0x98] sm:$0xff]
    %v3061 = vld [vmem:[#allocation11 + $0xa0] sm:$0xff]
    %v3062 = vld [vmem:[#allocation11 + $0xa8] sm:$0xff]
    %v3063 = vld [vmem:[#allocation11 + $0xb0] sm:$0xff]
    %v3064 = vld [vmem:[#allocation11 + $0xb8] sm:$0xff]
    %v3065 = vld [vmem:[#allocation11 + $0xc0] sm:$0xff]
    %v3066 = vld [vmem:[#allocation11 + $0xc8] sm:$0xff]
    %v3067 = vld [vmem:[#allocation11 + $0xd0] sm:$0xff]
    %v3068 = vld [vmem:[#allocation11 + $0xd8] sm:$0xff]
    %v3069 = vld [vmem:[#allocation11 + $0xe0] sm:$0xff]
    %v3070 = vld [vmem:[#allocation11 + $0xe8] sm:$0xff]
    %v3071 = vld [vmem:[#allocation11 + $0xf0] sm:$0xff]
    %v3072 = vld [vmem:[#allocation11 + $0xf8] sm:$0xff]
    %v3073 = vld [vmem:[#allocation11 + $0x100] sm:$0xff]
    %v3074 = vld [vmem:[#allocation11 + $0x108] sm:$0xff]
    %v3075 = vld [vmem:[#allocation11 + $0x110] sm:$0xff]
    %v3076 = vld [vmem:[#allocation11 + $0x118] sm:$0xff]
    %v3077 = vld [vmem:[#allocation11 + $0x120] sm:$0xff]
    %v3078 = vld [vmem:[#allocation11 + $0x128] sm:$0xff]
    %v3079 = vld [vmem:[#allocation11 + $0x130] sm:$0xff]
    %v3080 = vld [vmem:[#allocation11 + $0x138] sm:$0xff]
    %v3081 = vld [vmem:[#allocation11 + $0x140] sm:$0xff]
    %v3082 = vld [vmem:[#allocation11 + $0x148] sm:$0xff]
    %v3083 = vld [vmem:[#allocation11 + $0x150] sm:$0xff]
    %v3084 = vld [vmem:[#allocation11 + $0x158] sm:$0xff]
    %v3085 = vld [vmem:[#allocation11 + $0x160] sm:$0xff]
    %v3086 = vld [vmem:[#allocation11 + $0x168] sm:$0xff]
    %v3087 = vld [vmem:[#allocation11 + $0x170] sm:$0xff]
    %v3088 = vld [vmem:[#allocation11 + $0x178] sm:$0xff]
    %v3089 = vld [vmem:[#allocation11 + $0x180] sm:$0xff]
    %v3090 = vld [vmem:[#allocation11 + $0x188] sm:$0xff]
    %v3091 = vld [vmem:[#allocation11 + $0x190] sm:$0xff]
    %v3092 = vld [vmem:[#allocation11 + $0x198] sm:$0xff]
    %v3093 = vld [vmem:[#allocation11 + $0x1a0] sm:$0xff]
    %v3094 = vld [vmem:[#allocation11 + $0x1a8] sm:$0xff]
    %v3095 = vld [vmem:[#allocation11 + $0x1b0] sm:$0xff]
    %v3096 = vld [vmem:[#allocation11 + $0x1b8] sm:$0xff]
    %v3097 = vld [vmem:[#allocation11 + $0x1c0] sm:$0xff]
    %v3098 = vld [vmem:[#allocation11 + $0x1c8] sm:$0xff]
    %v3099 = vld [vmem:[#allocation11 + $0x1d0] sm:$0xff]
    %v3100 = vld [vmem:[#allocation11 + $0x1d8] sm:$0xff]
    %v3101 = vld [vmem:[#allocation11 + $0x1e0] sm:$0xff]
    %v3102 = vld [vmem:[#allocation11 + $0x1e8] sm:$0xff]
    %v3103 = vld [vmem:[#allocation11 + $0x1f0] sm:$0xff]
    %v3104 = vld [vmem:[#allocation11 + $0x1f8] sm:$0xff]
    %v3105 = vld [vmem:[#allocation12] sm:$0x3]
    %v3107 = vlaneseq
    %v3108 = vshrl.u32 %v3107, 7
    %v3109 = vsub.s32 0, %v3108
    %v3110 = vrot.slane %v3105, %v3109
    %v3111 = vlaneseq
    %v3112 = vshrl.u32 %v3111, 7
    %v3113 = vsub.s32 1, %v3112
    %v3114 = vrot.slane %v3105, %v3113
    %v3181 = vunpack.c.l.b16 %v3041
    %v3182 = vunpack.c.h.b16 %v3041
    %v3183 = vunpack.c.l.b16 %v3042
    %v3184 = vunpack.c.h.b16 %v3042
    %v3185 = vunpack.c.l.b16 %v3043
    %v3186 = vunpack.c.h.b16 %v3043
    %v3187 = vunpack.c.l.b16 %v3044
    %v3188 = vunpack.c.h.b16 %v3044
    %v3189 = vunpack.c.l.b16 %v3045
    %v3190 = vunpack.c.h.b16 %v3045
    %v3191 = vunpack.c.l.b16 %v3046
    %v3192 = vunpack.c.h.b16 %v3046
    %v3193 = vunpack.c.l.b16 %v3047
    %v3194 = vunpack.c.h.b16 %v3047
    %v3195 = vunpack.c.l.b16 %v3048
    %v3196 = vunpack.c.h.b16 %v3048
    %v3197 = vunpack.c.l.b16 %v3049
    %v3198 = vunpack.c.h.b16 %v3049
    %v3199 = vunpack.c.l.b16 %v3050
    %v3200 = vunpack.c.h.b16 %v3050
    %v3201 = vunpack.c.l.b16 %v3051
    %v3202 = vunpack.c.h.b16 %v3051
    %v3203 = vunpack.c.l.b16 %v3052
    %v3204 = vunpack.c.h.b16 %v3052
    %v3205 = vunpack.c.l.b16 %v3053
    %v3206 = vunpack.c.h.b16 %v3053
    %v3207 = vunpack.c.l.b16 %v3054
    %v3208 = vunpack.c.h.b16 %v3054
    %v3209 = vunpack.c.l.b16 %v3055
    %v3210 = vunpack.c.h.b16 %v3055
    %v3211 = vunpack.c.l.b16 %v3056
    %v3212 = vunpack.c.h.b16 %v3056
    %v3213 = vunpack.c.l.b16 %v3057
    %v3214 = vunpack.c.h.b16 %v3057
    %v3215 = vunpack.c.l.b16 %v3058
    %v3216 = vunpack.c.h.b16 %v3058
    %v3217 = vunpack.c.l.b16 %v3059
    %v3218 = vunpack.c.h.b16 %v3059
    %v3219 = vunpack.c.l.b16 %v3060
    %v3220 = vunpack.c.h.b16 %v3060
    %v3221 = vunpack.c.l.b16 %v3061
    %v3222 = vunpack.c.h.b16 %v3061
    %v3223 = vunpack.c.l.b16 %v3062
    %v3224 = vunpack.c.h.b16 %v3062
    %v3225 = vunpack.c.l.b16 %v3063
    %v3226 = vunpack.c.h.b16 %v3063
    %v3227 = vunpack.c.l.b16 %v3064
    %v3228 = vunpack.c.h.b16 %v3064
    %v3229 = vunpack.c.l.b16 %v3065
    %v3230 = vunpack.c.h.b16 %v3065
    %v3231 = vunpack.c.l.b16 %v3066
    %v3232 = vunpack.c.h.b16 %v3066
    %v3233 = vunpack.c.l.b16 %v3067
    %v3234 = vunpack.c.h.b16 %v3067
    %v3235 = vunpack.c.l.b16 %v3068
    %v3236 = vunpack.c.h.b16 %v3068
    %v3237 = vunpack.c.l.b16 %v3069
    %v3238 = vunpack.c.h.b16 %v3069
    %v3239 = vunpack.c.l.b16 %v3070
    %v3240 = vunpack.c.h.b16 %v3070
    %v3241 = vunpack.c.l.b16 %v3071
    %v3242 = vunpack.c.h.b16 %v3071
    %v3243 = vunpack.c.l.b16 %v3072
    %v3244 = vunpack.c.h.b16 %v3072
    %v3245 = vunpack.c.l.b16 %v3073
    %v3246 = vunpack.c.h.b16 %v3073
    %v3247 = vunpack.c.l.b16 %v3074
    %v3248 = vunpack.c.h.b16 %v3074
    %v3249 = vunpack.c.l.b16 %v3075
    %v3250 = vunpack.c.h.b16 %v3075
    %v3251 = vunpack.c.l.b16 %v3076
    %v3252 = vunpack.c.h.b16 %v3076
    %v3253 = vunpack.c.l.b16 %v3077
    %v3254 = vunpack.c.h.b16 %v3077
    %v3255 = vunpack.c.l.b16 %v3078
    %v3256 = vunpack.c.h.b16 %v3078
    %v3257 = vunpack.c.l.b16 %v3079
    %v3258 = vunpack.c.h.b16 %v3079
    %v3259 = vunpack.c.l.b16 %v3080
    %v3260 = vunpack.c.h.b16 %v3080
    %v3261 = vunpack.c.l.b16 %v3081
    %v3262 = vunpack.c.h.b16 %v3081
    %v3263 = vunpack.c.l.b16 %v3082
    %v3264 = vunpack.c.h.b16 %v3082
    %v3265 = vunpack.c.l.b16 %v3083
    %v3266 = vunpack.c.h.b16 %v3083
    %v3267 = vunpack.c.l.b16 %v3084
    %v3268 = vunpack.c.h.b16 %v3084
    %v3269 = vunpack.c.l.b16 %v3085
    %v3270 = vunpack.c.h.b16 %v3085
    %v3271 = vunpack.c.l.b16 %v3086
    %v3272 = vunpack.c.h.b16 %v3086
    %v3273 = vunpack.c.l.b16 %v3087
    %v3274 = vunpack.c.h.b16 %v3087
    %v3275 = vunpack.c.l.b16 %v3088
    %v3276 = vunpack.c.h.b16 %v3088
    %v3277 = vunpack.c.l.b16 %v3089
    %v3278 = vunpack.c.h.b16 %v3089
    %v3279 = vunpack.c.l.b16 %v3090
    %v3280 = vunpack.c.h.b16 %v3090
    %v3281 = vunpack.c.l.b16 %v3091
    %v3282 = vunpack.c.h.b16 %v3091
    %v3283 = vunpack.c.l.b16 %v3092
    %v3284 = vunpack.c.h.b16 %v3092
    %v3285 = vunpack.c.l.b16 %v3093
    %v3286 = vunpack.c.h.b16 %v3093
    %v3287 = vunpack.c.l.b16 %v3094
    %v3288 = vunpack.c.h.b16 %v3094
    %v3289 = vunpack.c.l.b16 %v3095
    %v3290 = vunpack.c.h.b16 %v3095
    %v3291 = vunpack.c.l.b16 %v3096
    %v3292 = vunpack.c.h.b16 %v3096
    %v3293 = vunpack.c.l.b16 %v3097
    %v3294 = vunpack.c.h.b16 %v3097
    %v3295 = vunpack.c.l.b16 %v3098
    %v3296 = vunpack.c.h.b16 %v3098
    %v3297 = vunpack.c.l.b16 %v3099
    %v3298 = vunpack.c.h.b16 %v3099
    %v3299 = vunpack.c.l.b16 %v3100
    %v3300 = vunpack.c.h.b16 %v3100
    %v3301 = vunpack.c.l.b16 %v3101
    %v3302 = vunpack.c.h.b16 %v3101
    %v3303 = vunpack.c.l.b16 %v3102
    %v3304 = vunpack.c.h.b16 %v3102
    %v3305 = vunpack.c.l.b16 %v3103
    %v3306 = vunpack.c.h.b16 %v3103
    %v3307 = vunpack.c.l.b16 %v3104
    %v3308 = vunpack.c.h.b16 %v3104
    %v3309 = vpack.c.b16 %v3183, %v3181
    %v3310 = vpack.c.b16 %v3184, %v3182
    %v3311 = vpack.c.b16 %v3187, %v3185
    %v3312 = vpack.c.b16 %v3188, %v3186
    %v3313 = vpack.c.b16 %v3191, %v3189
    %v3314 = vpack.c.b16 %v3192, %v3190
    %v3315 = vpack.c.b16 %v3195, %v3193
    %v3316 = vpack.c.b16 %v3196, %v3194
    %v3317 = vpack.c.b16 %v3199, %v3197
    %v3318 = vpack.c.b16 %v3200, %v3198
    %v3319 = vpack.c.b16 %v3203, %v3201
    %v3320 = vpack.c.b16 %v3204, %v3202
    %v3321 = vpack.c.b16 %v3207, %v3205
    %v3322 = vpack.c.b16 %v3208, %v3206
    %v3323 = vpack.c.b16 %v3211, %v3209
    %v3324 = vpack.c.b16 %v3212, %v3210
    %v3325 = vpack.c.b16 %v3215, %v3213
    %v3326 = vpack.c.b16 %v3216, %v3214
    %v3327 = vpack.c.b16 %v3219, %v3217
    %v3328 = vpack.c.b16 %v3220, %v3218
    %v3329 = vpack.c.b16 %v3223, %v3221
    %v3330 = vpack.c.b16 %v3224, %v3222
    %v3331 = vpack.c.b16 %v3227, %v3225
    %v3332 = vpack.c.b16 %v3228, %v3226
    %v3333 = vpack.c.b16 %v3231, %v3229
    %v3334 = vpack.c.b16 %v3232, %v3230
    %v3335 = vpack.c.b16 %v3235, %v3233
    %v3336 = vpack.c.b16 %v3236, %v3234
    %v3337 = vpack.c.b16 %v3239, %v3237
    %v3338 = vpack.c.b16 %v3240, %v3238
    %v3339 = vpack.c.b16 %v3243, %v3241
    %v3340 = vpack.c.b16 %v3244, %v3242
    %v3341 = vpack.c.b16 %v3247, %v3245
    %v3342 = vpack.c.b16 %v3248, %v3246
    %v3343 = vpack.c.b16 %v3251, %v3249
    %v3344 = vpack.c.b16 %v3252, %v3250
    %v3345 = vpack.c.b16 %v3255, %v3253
    %v3346 = vpack.c.b16 %v3256, %v3254
    %v3347 = vpack.c.b16 %v3259, %v3257
    %v3348 = vpack.c.b16 %v3260, %v3258
    %v3349 = vpack.c.b16 %v3263, %v3261
    %v3350 = vpack.c.b16 %v3264, %v3262
    %v3351 = vpack.c.b16 %v3267, %v3265
    %v3352 = vpack.c.b16 %v3268, %v3266
    %v3353 = vpack.c.b16 %v3271, %v3269
    %v3354 = vpack.c.b16 %v3272, %v3270
    %v3355 = vpack.c.b16 %v3275, %v3273
    %v3356 = vpack.c.b16 %v3276, %v3274
    %v3357 = vpack.c.b16 %v3279, %v3277
    %v3358 = vpack.c.b16 %v3280, %v3278
    %v3359 = vpack.c.b16 %v3283, %v3281
    %v3360 = vpack.c.b16 %v3284, %v3282
    %v3361 = vpack.c.b16 %v3287, %v3285
    %v3362 = vpack.c.b16 %v3288, %v3286
    %v3363 = vpack.c.b16 %v3291, %v3289
    %v3364 = vpack.c.b16 %v3292, %v3290
    %v3365 = vpack.c.b16 %v3295, %v3293
    %v3366 = vpack.c.b16 %v3296, %v3294
    %v3367 = vpack.c.b16 %v3299, %v3297
    %v3368 = vpack.c.b16 %v3300, %v3298
    %v3369 = vpack.c.b16 %v3303, %v3301
    %v3370 = vpack.c.b16 %v3304, %v3302
    %v3371 = vpack.c.b16 %v3307, %v3305
    %v3372 = vpack.c.b16 %v3308, %v3306
    %3437 = vmatprep.subr.bf16.mxu0 %v3310
    %3438 = vmatpush1.bf16.msra.mxu0 %v3309
    %3439 = vmatprep.subr.bf16.mxu0 %v3312
    %3440 = vmatpush1.bf16.msra.mxu0 %v3311
    %3441 = vmatprep.subr.bf16.mxu0 %v3314
    %3442 = vmatpush1.bf16.msra.mxu0 %v3313
    %3443 = vmatprep.subr.bf16.mxu0 %v3316
    %3444 = vmatpush1.bf16.msra.mxu0 %v3315
    %3445 = vmatprep.subr.bf16.mxu0 %v3318
    %3446 = vmatpush1.bf16.msra.mxu0 %v3317
    %3447 = vmatprep.subr.bf16.mxu0 %v3320
    %3448 = vmatpush1.bf16.msra.mxu0 %v3319
    %3449 = vmatprep.subr.bf16.mxu0 %v3322
    %3450 = vmatpush1.bf16.msra.mxu0 %v3321
    %3451 = vmatprep.subr.bf16.mxu0 %v3324
    %3452 = vmatpush1.bf16.msra.mxu0 %v3323
    %3453 = vmatprep.subr.bf16.mxu0 %v3326
    %3454 = vmatpush1.bf16.msra.mxu0 %v3325
    %3455 = vmatprep.subr.bf16.mxu0 %v3328
    %3456 = vmatpush1.bf16.msra.mxu0 %v3327
    %3457 = vmatprep.subr.bf16.mxu0 %v3330
    %3458 = vmatpush1.bf16.msra.mxu0 %v3329
    %3459 = vmatprep.subr.bf16.mxu0 %v3332
    %3460 = vmatpush1.bf16.msra.mxu0 %v3331
    %3461 = vmatprep.subr.bf16.mxu0 %v3334
    %3462 = vmatpush1.bf16.msra.mxu0 %v3333
    %3463 = vmatprep.subr.bf16.mxu0 %v3336
    %3464 = vmatpush1.bf16.msra.mxu0 %v3335
    %3465 = vmatprep.subr.bf16.mxu0 %v3338
    %3466 = vmatpush1.bf16.msra.mxu0 %v3337
    %3467 = vmatprep.subr.bf16.mxu0 %v3340
    %3468 = vmatpush1.bf16.msra.mxu0 %v3339
    %3469 = vmatprep.mubr.bf16.mxu0 %v3038
    %3470 = vmatmul.mubr.bf16.gmra.mrb[0].mxu0 %v3037
    %v3471 = vpop.f32.mrb[0].mxu0
    %v3472 = vadd.f32 %v3110, %v3471
    %v3473 = vpop.f32.mrb[0].mxu0
    %v3474 = vadd.f32 %v3114, %v3473
    %v3475 = vpop.f32.mrb[0].mxu0
    %v3476 = vpop.f32.mrb[0].mxu0
    %3477 = vdwg.mxu0
    %3478 = vmatprep.subr.bf16.mxu0 %v3342
    %3479 = vmatpush1.bf16.msra.mxu0 %v3341
    %3480 = vmatprep.subr.bf16.mxu0 %v3344
    %3481 = vmatpush1.bf16.msra.mxu0 %v3343
    %3482 = vmatprep.subr.bf16.mxu0 %v3346
    %3483 = vmatpush1.bf16.msra.mxu0 %v3345
    %3484 = vmatprep.subr.bf16.mxu0 %v3348
    %3485 = vmatpush1.bf16.msra.mxu0 %v3347
    %3486 = vmatprep.subr.bf16.mxu0 %v3350
    %3487 = vmatpush1.bf16.msra.mxu0 %v3349
    %3488 = vmatprep.subr.bf16.mxu0 %v3352
    %3489 = vmatpush1.bf16.msra.mxu0 %v3351
    %3490 = vmatprep.subr.bf16.mxu0 %v3354
    %3491 = vmatpush1.bf16.msra.mxu0 %v3353
    %3492 = vmatprep.subr.bf16.mxu0 %v3356
    %3493 = vmatpush1.bf16.msra.mxu0 %v3355
    %3494 = vmatprep.subr.bf16.mxu0 %v3358
    %3495 = vmatpush1.bf16.msra.mxu0 %v3357
    %3496 = vmatprep.subr.bf16.mxu0 %v3360
    %3497 = vmatpush1.bf16.msra.mxu0 %v3359
    %3498 = vmatprep.subr.bf16.mxu0 %v3362
    %3499 = vmatpush1.bf16.msra.mxu0 %v3361
    %3500 = vmatprep.subr.bf16.mxu0 %v3364
    %3501 = vmatpush1.bf16.msra.mxu0 %v3363
    %3502 = vmatprep.subr.bf16.mxu0 %v3366
    %3503 = vmatpush1.bf16.msra.mxu0 %v3365
    %3504 = vmatprep.subr.bf16.mxu0 %v3368
    %3505 = vmatpush1.bf16.msra.mxu0 %v3367
    %3506 = vmatprep.subr.bf16.mxu0 %v3370
    %3507 = vmatpush1.bf16.msra.mxu0 %v3369
    %3508 = vmatprep.subr.bf16.mxu0 %v3372
    %3509 = vmatpush1.bf16.msra.mxu0 %v3371
    %3510 = vmatprep.mubr.bf16.mxu0 %v3040
    %3511 = vmatmul.mubr.bf16.gmra.mrb[0].mxu0 %v3039
    %v3512 = vpop.f32.mrb[0].mxu0
    %v3513 = vadd.f32 %v3472, %v3512
    %v3514 = vpop.f32.mrb[0].mxu0
    %v3515 = vadd.f32 %v3474, %v3514
    %v3516 = vpop.f32.mrb[0].mxu0
    %v3517 = vpop.f32.mrb[0].mxu0
    %3518 = vdwg.mxu0
    %v3519 = vmax.f32 %v3513, 0.0
    %v3520 = vmax.f32 %v3515, 0.0
    %v3521 = vpack.c.bf16 %v3519, %v3519
    %v3522 = vpack.c.bf16 %v3520, %v3520
    %v3523 = vld [vmem:[#allocation14] sm:$0xf]
    %v3524 = vld [vmem:[#allocation14 + $0x4] sm:$0xf]
    %v3525 = vld [vmem:[#allocation14 + $0x8] sm:$0xf]
    %v3526 = vld [vmem:[#allocation14 + $0xc] sm:$0xf]
    %v3527 = vld [vmem:[#allocation14 + $0x10] sm:$0xf]
    %v3528 = vld [vmem:[#allocation14 + $0x14] sm:$0xf]
    %v3529 = vld [vmem:[#allocation14 + $0x18] sm:$0xf]
    %v3530 = vld [vmem:[#allocation14 + $0x1c] sm:$0xf]
    %v3531 = vld [vmem:[#allocation14 + $0x20] sm:$0xf]
    %v3532 = vld [vmem:[#allocation14 + $0x24] sm:$0xf]
    %v3533 = vld [vmem:[#allocation14 + $0x28] sm:$0xf]
    %v3534 = vld [vmem:[#allocation14 + $0x2c] sm:$0xf]
    %v3535 = vld [vmem:[#allocation14 + $0x30] sm:$0xf]
    %v3536 = vld [vmem:[#allocation14 + $0x34] sm:$0xf]
    %v3537 = vld [vmem:[#allocation14 + $0x38] sm:$0xf]
    %v3538 = vld [vmem:[#allocation14 + $0x3c] sm:$0xf]
    %v3539 = vld [vmem:[#allocation14 + $0x40] sm:$0xf]
    %v3540 = vld [vmem:[#allocation14 + $0x44] sm:$0xf]
    %v3541 = vld [vmem:[#allocation14 + $0x48] sm:$0xf]
    %v3542 = vld [vmem:[#allocation14 + $0x4c] sm:$0xf]
    %v3543 = vld [vmem:[#allocation14 + $0x50] sm:$0xf]
    %v3544 = vld [vmem:[#allocation14 + $0x54] sm:$0xf]
    %v3545 = vld [vmem:[#allocation14 + $0x58] sm:$0xf]
    %v3546 = vld [vmem:[#allocation14 + $0x5c] sm:$0xf]
    %v3547 = vld [vmem:[#allocation14 + $0x60] sm:$0xf]
    %v3548 = vld [vmem:[#allocation14 + $0x64] sm:$0xf]
    %v3549 = vld [vmem:[#allocation14 + $0x68] sm:$0xf]
    %v3550 = vld [vmem:[#allocation14 + $0x6c] sm:$0xf]
    %v3551 = vld [vmem:[#allocation14 + $0x70] sm:$0xf]
    %v3552 = vld [vmem:[#allocation14 + $0x74] sm:$0xf]
    %v3553 = vld [vmem:[#allocation14 + $0x78] sm:$0xf]
    %v3554 = vld [vmem:[#allocation14 + $0x7c] sm:$0xf]
    %v3555 = vld [vmem:[#allocation15] sm:$0x1]
    %v3557 = vlaneseq
    %v3558 = vshrl.u32 %v3557, 7
    %v3559 = vsub.s32 0, %v3558
    %v3560 = vrot.slane %v3555, %v3559
    %v3594 = vunpack.c.l.b16 %v3523
    %v3595 = vunpack.c.l.b16 %v3524
    %v3596 = vunpack.c.l.b16 %v3525
    %v3597 = vunpack.c.l.b16 %v3526
    %v3598 = vunpack.c.l.b16 %v3527
    %v3599 = vunpack.c.l.b16 %v3528
    %v3600 = vunpack.c.l.b16 %v3529
    %v3601 = vunpack.c.l.b16 %v3530
    %v3602 = vunpack.c.l.b16 %v3531
    %v3603 = vunpack.c.l.b16 %v3532
    %v3604 = vunpack.c.l.b16 %v3533
    %v3605 = vunpack.c.l.b16 %v3534
    %v3606 = vunpack.c.l.b16 %v3535
    %v3607 = vunpack.c.l.b16 %v3536
    %v3608 = vunpack.c.l.b16 %v3537
    %v3609 = vunpack.c.l.b16 %v3538
    %v3610 = vunpack.c.l.b16 %v3539
    %v3611 = vunpack.c.l.b16 %v3540
    %v3612 = vunpack.c.l.b16 %v3541
    %v3613 = vunpack.c.l.b16 %v3542
    %v3614 = vunpack.c.l.b16 %v3543
    %v3615 = vunpack.c.l.b16 %v3544
    %v3616 = vunpack.c.l.b16 %v3545
    %v3617 = vunpack.c.l.b16 %v3546
    %v3618 = vunpack.c.l.b16 %v3547
    %v3619 = vunpack.c.l.b16 %v3548
    %v3620 = vunpack.c.l.b16 %v3549
    %v3621 = vunpack.c.l.b16 %v3550
    %v3622 = vunpack.c.l.b16 %v3551
    %v3623 = vunpack.c.l.b16 %v3552
    %v3624 = vunpack.c.l.b16 %v3553
    %v3625 = vunpack.c.l.b16 %v3554
    %v3626 = vpack.c.b16 %v3595, %v3594
    %v3627 = vpack.c.b16 %v3597, %v3596
    %v3628 = vpack.c.b16 %v3599, %v3598
    %v3629 = vpack.c.b16 %v3601, %v3600
    %v3630 = vpack.c.b16 %v3603, %v3602
    %v3631 = vpack.c.b16 %v3605, %v3604
    %v3632 = vpack.c.b16 %v3607, %v3606
    %v3633 = vpack.c.b16 %v3609, %v3608
    %v3634 = vpack.c.b16 %v3611, %v3610
    %v3635 = vpack.c.b16 %v3613, %v3612
    %v3636 = vpack.c.b16 %v3615, %v3614
    %v3637 = vpack.c.b16 %v3617, %v3616
    %v3638 = vpack.c.b16 %v3619, %v3618
    %v3639 = vpack.c.b16 %v3621, %v3620
    %v3640 = vpack.c.b16 %v3623, %v3622
    %v3641 = vpack.c.b16 %v3625, %v3624
    %3658 = vmatprep.subr.bf16.mxu0 0
    %3659 = vmatpush1.bf16.msra.mxu0 %v3626
    %3660 = vmatprep.subr.bf16.mxu0 0
    %3661 = vmatpush1.bf16.msra.mxu0 %v3627
    %3662 = vmatprep.subr.bf16.mxu0 0
    %3663 = vmatpush1.bf16.msra.mxu0 %v3628
    %3664 = vmatprep.subr.bf16.mxu0 0
    %3665 = vmatpush1.bf16.msra.mxu0 %v3629
    %3666 = vmatprep.subr.bf16.mxu0 0
    %3667 = vmatpush1.bf16.msra.mxu0 %v3630
    %3668 = vmatprep.subr.bf16.mxu0 0
    %3669 = vmatpush1.bf16.msra.mxu0 %v3631
    %3670 = vmatprep.subr.bf16.mxu0 0
    %3671 = vmatpush1.bf16.msra.mxu0 %v3632
    %3672 = vmatprep.subr.bf16.mxu0 0
    %3673 = vmatpush1.bf16.msra.mxu0 %v3633
    %3674 = vmatprep.subr.bf16.mxu0 0
    %3675 = vmatpush1.bf16.msra.mxu0 %v3634
    %3676 = vmatprep.subr.bf16.mxu0 0
    %3677 = vmatpush1.bf16.msra.mxu0 %v3635
    %3678 = vmatprep.subr.bf16.mxu0 0
    %3679 = vmatpush1.bf16.msra.mxu0 %v3636
    %3680 = vmatprep.subr.bf16.mxu0 0
    %3681 = vmatpush1.bf16.msra.mxu0 %v3637
    %3682 = vmatprep.subr.bf16.mxu0 0
    %3683 = vmatpush1.bf16.msra.mxu0 %v3638
    %3684 = vmatprep.subr.bf16.mxu0 0
    %3685 = vmatpush1.bf16.msra.mxu0 %v3639
    %3686 = vmatprep.subr.bf16.mxu0 0
    %3687 = vmatpush1.bf16.msra.mxu0 %v3640
    %3688 = vmatprep.subr.bf16.mxu0 0
    %3689 = vmatpush1.bf16.msra.mxu0 %v3641
    %3690 = vmatprep.mubr.bf16.mxu0 %v3522
    %3691 = vmatmul.mubr.bf16.gmra.mrb[0].mxu0 %v3521
    %v3692 = vpop.f32.mrb[0].mxu0
    %v3693 = vadd.f32 %v3560, %v3692
    %v3694 = vpop.f32.mrb[0].mxu0
    %v3695 = vpop.f32.mrb[0].mxu0
    %v3696 = vpop.f32.mrb[0].mxu0
    %3697 = vdwg.mxu0
    %3698 = vmax.xlane.f32.xlu0 %v3693
    %v3699 = vpop.xlane.xlu0 %3698
    %v3700 = vsub.f32 %v3693, %v3699
    %v3701 = vmul.f32 %v3700, 1.442695
    %v3702 = vpow.pop %v3701
    %3703 = vadd.xlane.f32.xlu0 %v3702
    %v3704 = vpop.xlane.xlu0 %3703
    %v3705 = vrcp.pop %v3704
    %v3706 = vmul.f32 %v3702, %v3705
    %3707 = vst [vmem:[#allocation17] sm:$0xff] %v3706
    // Predicated region
    $region70: #{tpu_custom_call.1} parent=1 // pred_check
      _
    $region71: #{tpu_custom_call.1} parent=1 // pred_check_branch
      %3709 = sbr.rel (0) target = $region73
    $region72: #{tpu_custom_call.1} parent=1 // pred_region
      %s3711 = ssub.s32 128, 128
      %3712 = vsyncadd [#allocation5], %s3711
      %s3714 = sshll.u32 [#allocation17], 4
      %s3715 = int_to_ptr.vmem [resolvable:$true] %s3714
      %3717 = dma.vmem_to_hbm [thread:$0]  %s3715, 128, %s9, [#allocation5]
    $region73: #{tpu_custom_call.1} parent=1 // pred_fallthru
      _
    // Predicated region
    $region74: #{tpu_custom_call.1} parent=1 // pred_check
      _
    $region75: #{tpu_custom_call.1} parent=1 // pred_check_branch
      %3719 = sbr.rel (0) target = $region77
    $region76: #{tpu_custom_call.1} parent=1 // pred_region
      %3720 = dma.done [#allocation5], 128
    $region77: #{tpu_custom_call.1} parent=1 // pred_fallthru
      _
    %3721 = vsyncpa [#allocation4], 1
    %3722 = vsyncpa [#allocation7], 1
    %3723 = vsyncpa [#allocation10], 1
    %3724 = vsyncpa [#allocation13], 1
    %3725 = vsyncpa [#allocation16], 1
    %3726 = vsyncpa [#allocation5], 1

</llo_original>
